<compile_context>
chip_gen: v7x
topology: tpu7x:2x2x1
jax: 0.10.0
libtpu: 0.0.40
codegen_flags: <defaults>
</compile_context>

<pallas_src>
import math

import jax
import jax.numpy as jnp
from jax.experimental import pallas as pl
from jax.experimental.pallas import tpu as pltpu

# ---- synthetic "bert-base-uncased"-style config at small shapes -------------
VOCAB = 64
B = 2            # batch
S = 8            # sequence length
H = 128          # hidden size
NUM_HEADS = 4
HEAD_DIM = H // NUM_HEADS
FFN = 256        # intermediate size
NUM_LAYERS = 2
LN_EPS = 1e-12   # BERT layer-norm eps
BS = B * S       # flattened activation rows


# ----------------------------- kernel helpers --------------------------------
def _layernorm(x, gamma, beta):
    mu = jnp.mean(x, axis=-1, keepdims=True)
    var = jnp.mean(jnp.square(x - mu), axis=-1, keepdims=True)
    inv = jax.lax.rsqrt(var + LN_EPS)
    return (x - mu) * inv * gamma + beta


def _gelu(x):
    # tanh approximation of GELU (EUP-friendly); BERT's exact erf differs <1e-3.
    c = math.sqrt(2.0 / math.pi)
    return 0.5 * x * (1.0 + jnp.tanh(c * (x + 0.044715 * x * x * x)))


# ----------------------------- fused encoder kernel --------------------------
def encoder_kernel(ids_ref, wemb_ref, pos_ref, type_ref, embln_ref,
                   wqkv_ref, bqkv_ref, wo_ref, wi_ref, bi_ref, wf_ref,
                   vecs_ref, out_ref, ctx_ref):
    # ids_ref:  (B*S, 1) int32  token ids
    # wemb_ref: (VOCAB, H)      word embedding table
    # pos_ref:  (S, H)          position embeddings
    # type_ref: (2, H)          token-type embeddings (row 0 used)
    # embln_ref:(2, H)          rows = [gamma, beta]
    # wqkv_ref: (L, H, 3H)      fused Q/K/V projection weights
    # bqkv_ref: (L, 1, 3H)
    # wo_ref:   (L, H, H)       attention output projection
    # wi_ref:   (L, H, FFN)     FFN in
    # bi_ref:   (L, 1, FFN)
    # wf_ref:   (L, FFN, H)     FFN out
    # vecs_ref: (L, 6, H)       rows = [bo, bf, ln1_g, ln1_b, ln2_g, ln2_b]
    # ctx_ref:  (B*S, H)        VMEM scratch for assembled per-head contexts

    # ---- fused embedding lookup: one-hot(ids) @ word_emb on the MXU ----
    onehot = jnp.where(
        ids_ref[...] == jax.lax.broadcasted_iota(jnp.int32, (BS, VOCAB), 1),
        1.0, 0.0)                                            # (B*S, VOCAB) f32
    emb = jnp.dot(onehot, wemb_ref[...],
                  preferred_element_type=jnp.float32)        # (B*S, H)
    emb = emb + jnp.tile(pos_ref[...], (B, 1)) + type_ref[0:1, :]

    embln = embln_ref[...]
    x = _layernorm(emb, embln[0:1, :], embln[1:2, :])        # (B*S, H)

    scale = 1.0 / math.sqrt(HEAD_DIM)
    for l in range(NUM_LAYERS):                      # static unroll over layers
        vecs = vecs_ref[l]                           # (6, H)
        bo, bf = vecs[0:1, :], vecs[1:2, :]
        ln1_g, ln1_b = vecs[2:3, :], vecs[3:4, :]
        ln2_g, ln2_b = vecs[4:5, :], vecs[5:6, :]

        # Fused QKV projection: one (B*S, H) @ (H, 3H) MXU pass.
        qkv = (jnp.dot(x, wqkv_ref[l], preferred_element_type=jnp.float32)
               + bqkv_ref[l])                        # (B*S, 3H)
        qkv3 = qkv.reshape(B, S, 3 * H)

        # Attention: heads statically unrolled; batch handled by batched einsum
        # (same pattern as the reference flash-attention kernel).
        for h in range(NUM_HEADS):
            lo = h * HEAD_DIM
            qh = qkv3[:, :, lo:lo + HEAD_DIM]                       # (B,S,HD)
            kh = qkv3[:, :, H + lo:H + lo + HEAD_DIM]
            vh = qkv3[:, :, 2 * H + lo:2 * H + lo + HEAD_DIM]

            s = jnp.einsum('bqd,bkd->bqk', qh, kh,
                           preferred_element_type=jnp.float32) * scale  # (B,S,S)
            s = s - jnp.max(s, axis=-1, keepdims=True)
            p = jnp.exp(s)
            p = p * pl.reciprocal(jnp.sum(p, axis=-1, keepdims=True),
                                  approx=True)
            ctx_h = jnp.einsum('bqk,bkd->bqd', p, vh,
                               preferred_element_type=jnp.float32)      # (B,S,HD)
            # Write head slice straight into the context slab (no concat).
            ctx_ref[:, lo:lo + HEAD_DIM] = ctx_h.reshape(BS, HEAD_DIM)

        attn_out = jnp.dot(ctx_ref[...], wo_ref[l],
                           preferred_element_type=jnp.float32) + bo
        h1 = _layernorm(x + attn_out, ln1_g, ln1_b)

        ff = _gelu(jnp.dot(h1, wi_ref[l], preferred_element_type=jnp.float32)
                   + bi_ref[l])
        ff_out = jnp.dot(ff, wf_ref[l], preferred_element_type=jnp.float32) + bf
        x = _layernorm(h1 + ff_out, ln2_g, ln2_b)

    out_ref[...] = x


def bert_encoder(ids_flat, p):
    n_inputs = 12
    return pl.pallas_call(
        encoder_kernel,
        out_shape=jax.ShapeDtypeStruct((BS, H), jnp.float32),
        in_specs=[pl.BlockSpec(memory_space=pltpu.MemorySpace.VMEM)
                  for _ in range(n_inputs)],
        out_specs=pl.BlockSpec(memory_space=pltpu.MemorySpace.VMEM),
        scratch_shapes=[pltpu.VMEM((BS, H), jnp.float32)],   # per-head ctx slab
    )(ids_flat, p["word_emb"], p["pos_emb"], p["type_emb"], p["emb_ln"],
      p["wqkv"], p["bqkv"], p["wo"], p["wi"], p["bi"], p["wf"], p["vecs"])


# ----------------------------- params ----------------------------------------
def init_params(key):
    std = 0.02
    ks = jax.random.split(key, 7)

    def norm(k, shape):
        return (std * jax.random.normal(k, shape)).astype(jnp.float32)

    # packed per-layer vectors: rows = [bo, bf, ln1_g, ln1_b, ln2_g, ln2_b]
    vec_rows = jnp.stack([jnp.zeros(H), jnp.zeros(H), jnp.ones(H),
                          jnp.zeros(H), jnp.ones(H), jnp.zeros(H)],
                         axis=0).astype(jnp.float32)

    return {
        "word_emb": norm(ks[0], (VOCAB, H)),
        "pos_emb": norm(ks[1], (S, H)),
        "type_emb": norm(ks[2], (2, H)),
        "emb_ln": jnp.concatenate([jnp.ones((1, H), jnp.float32),
                                   jnp.zeros((1, H), jnp.float32)], axis=0),
        "wqkv": norm(ks[3], (NUM_LAYERS, H, 3 * H)),
        "bqkv": jnp.zeros((NUM_LAYERS, 1, 3 * H), jnp.float32),
        "wo": norm(ks[4], (NUM_LAYERS, H, H)),
        "wi": norm(ks[5], (NUM_LAYERS, H, FFN)),
        "bi": jnp.zeros((NUM_LAYERS, 1, FFN), jnp.float32),
        "wf": norm(ks[6], (NUM_LAYERS, FFN, H)),
        "vecs": jnp.tile(vec_rows[None], (NUM_LAYERS, 1, 1)),
    }


# ----------------------------- model (forward) -------------------------------
def index_hidden(ids, hidden):
    # hidden: (B, S, H); equivalent of torch.cat([hidden[:, i] for i in ids], -1)
    gathered = jnp.take(hidden, ids, axis=1)          # (B, len(ids), H)
    return gathered.reshape(hidden.shape[0], -1)      # (B, len(ids)*H)


@jax.jit
def causal_prompt_encoder_forward(params, causal_des, x_ids, m1_ids, m2_ids):
    # ---- fully fused transformer encoder (embeddings + stack, one kernel) ----
    ids_flat = causal_des.reshape(BS, 1).astype(jnp.int32)
    hidden = bert_encoder(ids_flat, params).reshape(B, S, H)

    causal_text = hidden  # last_hidden_state, (B, S, H)
    x_hid = index_hidden(x_ids, causal_text)
    m1_hid = index_hidden(m1_ids, causal_text)
    m2_hid = index_hidden(m2_ids, causal_text)
    return causal_text, x_hid, m1_hid, m2_hid


# ----------------------------- demo ------------------------------------------
if __name__ == "__main__":
    key = jax.random.PRNGKey(0)
    kp, kd = jax.random.split(key)
    params = init_params(kp)

    causal_des = jax.random.randint(kd, (B, S), 0, VOCAB, dtype=jnp.int32)
    x_ids = jnp.array([1, 2], dtype=jnp.int32)
    m1_ids = jnp.array([3, 4], dtype=jnp.int32)
    m2_ids = jnp.array([5, 6], dtype=jnp.int32)

    causal_text, x_hid, m1_hid, m2_hid = causal_prompt_encoder_forward(
        params, causal_des, x_ids, m1_ids, m2_ids)
    jax.block_until_ready((causal_text, x_hid, m1_hid, m2_hid))

    assert causal_text.shape == (B, S, H)
    assert x_hid.shape == (B, 2 * H)
    assert m1_hid.shape == (B, 2 * H)
    assert m2_hid.shape == (B, 2 * H)
    assert bool(jnp.all(jnp.isfinite(causal_text)))
    print("KERNEL_OK")
</pallas_src>

<mosaic_0001>
module attributes {stable_mosaic.version = 11 : i64} {
  func.func @encoder_kernel(%arg0: memref<16x1xi32, #tpu.memory_space<vmem>>, %arg1: memref<64x128xf32, #tpu.memory_space<vmem>>, %arg2: memref<8x128xf32, #tpu.memory_space<vmem>>, %arg3: memref<2x128xf32, #tpu.memory_space<vmem>>, %arg4: memref<2x128xf32, #tpu.memory_space<vmem>>, %arg5: memref<2x128x384xf32, #tpu.memory_space<vmem>>, %arg6: memref<2x1x384xf32, #tpu.memory_space<vmem>>, %arg7: memref<2x128x128xf32, #tpu.memory_space<vmem>>, %arg8: memref<2x128x256xf32, #tpu.memory_space<vmem>>, %arg9: memref<2x1x256xf32, #tpu.memory_space<vmem>>, %arg10: memref<2x256x128xf32, #tpu.memory_space<vmem>>, %arg11: memref<2x6x128xf32, #tpu.memory_space<vmem>>, %arg12: memref<16x128xf32, #tpu.memory_space<vmem>>, %arg13: memref<16x128xf32, #tpu.memory_space<vmem>>) attributes {dimension_semantics = [], scalar_prefetch = 0 : i64, scratch_operands = 1 : i64, tpu.core_type = #tpu.core_type<tc>} {
    %c0 = arith.constant 0 : index
    %c0_0 = arith.constant 0 : index
    %0 = vector.load %arg0[%c0, %c0_0] : memref<16x1xi32, #tpu.memory_space<vmem>>, vector<16x1xi32>
    %1 = tpu.iota {dimensions = array<i32: 1>} : vector<16x64xi32>
    %2 = vector.broadcast %0 : vector<16x1xi32> to vector<16x64xi32>
    %3 = arith.cmpi eq, %2, %1 : vector<16x64xi32>
    %cst = arith.constant 1.000000e+00 : f32
    %cst_1 = arith.constant 0.000000e+00 : f32
    %4 = vector.broadcast %cst : f32 to vector<16x64xf32>
    %5 = vector.broadcast %cst_1 : f32 to vector<16x64xf32>
    %6 = arith.select %3, %4, %5 : vector<16x64xi1>, vector<16x64xf32>
    %c0_2 = arith.constant 0 : index
    %c0_3 = arith.constant 0 : index
    %7 = vector.load %arg1[%c0_2, %c0_3] : memref<64x128xf32, #tpu.memory_space<vmem>>, vector<64x128xf32>
    %cst_4 = arith.constant dense<0.000000e+00> : vector<16x128xf32>
    %8 = tpu.matmul %6, %7, %cst_4 {dimension_numbers = #tpu.dot_dimension_numbers<[1], [0], [0], [1], [0, 0, 1, 1], [], []>} : vector<16x64xf32>, vector<64x128xf32>, vector<16x128xf32> -> vector<16x128xf32>
    %c0_5 = arith.constant 0 : index
    %c0_6 = arith.constant 0 : index
    %9 = vector.load %arg2[%c0_5, %c0_6] : memref<8x128xf32, #tpu.memory_space<vmem>>, vector<8x128xf32>
    %10 = tpu.concatenate %9, %9 in 0 : vector<8x128xf32>, vector<8x128xf32> -> vector<16x128xf32>
    %11 = arith.addf %8, %10 : vector<16x128xf32>
    %c0_7 = arith.constant 0 : index
    %c0_8 = arith.constant 0 : index
    %12 = vector.load %arg3[%c0_7, %c0_8] : memref<2x128xf32, #tpu.memory_space<vmem>>, vector<1x128xf32>
    %13 = vector.broadcast %12 : vector<1x128xf32> to vector<16x128xf32>
    %14 = arith.addf %11, %13 : vector<16x128xf32>
    %c0_9 = arith.constant 0 : index
    %c0_10 = arith.constant 0 : index
    %15 = vector.load %arg4[%c0_9, %c0_10] : memref<2x128xf32, #tpu.memory_space<vmem>>, vector<2x128xf32>
    %16 = vector.extract_strided_slice %15 {offsets = [0, 0], sizes = [1, 128], strides = [1, 1]} : vector<2x128xf32> to vector<1x128xf32>
    %17 = vector.extract_strided_slice %15 {offsets = [1, 0], sizes = [1, 128], strides = [1, 1]} : vector<2x128xf32> to vector<1x128xf32>
    %cst_11 = arith.constant dense<0.000000e+00> : vector<16xf32>
    %18 = vector.multi_reduction <add>, %14, %cst_11 [1] : vector<16x128xf32> to vector<16xf32>
    %19 = vector.shape_cast %18 : vector<16xf32> to vector<16x1xf32>
    %cst_12 = arith.constant 1.280000e+02 : f32
    %20 = vector.broadcast %cst_12 : f32 to vector<16x1xf32>
    %21 = arith.divf %19, %20 : vector<16x1xf32>
    %22 = vector.broadcast %21 : vector<16x1xf32> to vector<16x128xf32>
    %23 = arith.subf %14, %22 : vector<16x128xf32>
    %24 = arith.mulf %23, %23 : vector<16x128xf32>
    %cst_13 = arith.constant dense<0.000000e+00> : vector<16xf32>
    %25 = vector.multi_reduction <add>, %24, %cst_13 [1] : vector<16x128xf32> to vector<16xf32>
    %26 = vector.shape_cast %25 : vector<16xf32> to vector<16x1xf32>
    %cst_14 = arith.constant 1.280000e+02 : f32
    %27 = vector.broadcast %cst_14 : f32 to vector<16x1xf32>
    %28 = arith.divf %26, %27 : vector<16x1xf32>
    %cst_15 = arith.constant 9.99999996E-13 : f32
    %29 = vector.broadcast %cst_15 : f32 to vector<16x1xf32>
    %30 = arith.addf %28, %29 : vector<16x1xf32>
    %31 = math.rsqrt %30 : vector<16x1xf32>
    %32 = vector.broadcast %21 : vector<16x1xf32> to vector<16x128xf32>
    %33 = arith.subf %14, %32 : vector<16x128xf32>
    %34 = vector.broadcast %31 : vector<16x1xf32> to vector<16x128xf32>
    %35 = arith.mulf %33, %34 : vector<16x128xf32>
    %36 = vector.broadcast %16 : vector<1x128xf32> to vector<16x128xf32>
    %37 = arith.mulf %35, %36 : vector<16x128xf32>
    %38 = vector.broadcast %17 : vector<1x128xf32> to vector<16x128xf32>
    %39 = arith.addf %37, %38 : vector<16x128xf32>
    %c0_16 = arith.constant 0 : index
    %c0_17 = arith.constant 0 : index
    %c0_18 = arith.constant 0 : index
    %40 = vector.load %arg11[%c0_16, %c0_17, %c0_18] : memref<2x6x128xf32, #tpu.memory_space<vmem>>, vector<1x6x128xf32>
    %41 = vector.shape_cast %40 : vector<1x6x128xf32> to vector<6x128xf32>
    %42 = vector.extract_strided_slice %41 {offsets = [0, 0], sizes = [1, 128], strides = [1, 1]} : vector<6x128xf32> to vector<1x128xf32>
    %43 = vector.extract_strided_slice %41 {offsets = [1, 0], sizes = [1, 128], strides = [1, 1]} : vector<6x128xf32> to vector<1x128xf32>
    %44 = vector.extract_strided_slice %41 {offsets = [2, 0], sizes = [1, 128], strides = [1, 1]} : vector<6x128xf32> to vector<1x128xf32>
    %45 = vector.extract_strided_slice %41 {offsets = [3, 0], sizes = [1, 128], strides = [1, 1]} : vector<6x128xf32> to vector<1x128xf32>
    %46 = vector.extract_strided_slice %41 {offsets = [4, 0], sizes = [1, 128], strides = [1, 1]} : vector<6x128xf32> to vector<1x128xf32>
    %47 = vector.extract_strided_slice %41 {offsets = [5, 0], sizes = [1, 128], strides = [1, 1]} : vector<6x128xf32> to vector<1x128xf32>
    %c0_19 = arith.constant 0 : index
    %c0_20 = arith.constant 0 : index
    %c0_21 = arith.constant 0 : index
    %48 = vector.load %arg5[%c0_19, %c0_20, %c0_21] : memref<2x128x384xf32, #tpu.memory_space<vmem>>, vector<1x128x384xf32>
    %49 = vector.shape_cast %48 : vector<1x128x384xf32> to vector<128x384xf32>
    %cst_22 = arith.constant dense<0.000000e+00> : vector<16x384xf32>
    %50 = tpu.matmul %39, %49, %cst_22 {dimension_numbers = #tpu.dot_dimension_numbers<[1], [0], [0], [1], [0, 0, 1, 1], [], []>} : vector<16x128xf32>, vector<128x384xf32>, vector<16x384xf32> -> vector<16x384xf32>
    %c0_23 = arith.constant 0 : index
    %c0_24 = arith.constant 0 : index
    %c0_25 = arith.constant 0 : index
    %51 = vector.load %arg6[%c0_23, %c0_24, %c0_25] : memref<2x1x384xf32, #tpu.memory_space<vmem>>, vector<1x1x384xf32>
    %52 = vector.shape_cast %51 : vector<1x1x384xf32> to vector<1x384xf32>
    %53 = vector.broadcast %52 : vector<1x384xf32> to vector<16x384xf32>
    %54 = arith.addf %50, %53 : vector<16x384xf32>
    %55 = vector.shape_cast %54 : vector<16x384xf32> to vector<2x8x384xf32>
    %56 = vector.extract_strided_slice %55 {offsets = [0, 0, 0], sizes = [2, 8, 32], strides = [1, 1, 1]} : vector<2x8x384xf32> to vector<2x8x32xf32>
    %57 = vector.extract_strided_slice %55 {offsets = [0, 0, 128], sizes = [2, 8, 32], strides = [1, 1, 1]} : vector<2x8x384xf32> to vector<2x8x32xf32>
    %58 = vector.extract_strided_slice %55 {offsets = [0, 0, 256], sizes = [2, 8, 32], strides = [1, 1, 1]} : vector<2x8x384xf32> to vector<2x8x32xf32>
    "tpu.trace_start"() <{level = 10 : i32, message = "bqd,bkd->bqk"}> : () -> ()
    %cst_26 = arith.constant dense<0.000000e+00> : vector<2x8x8xf32>
    %59 = tpu.matmul %56, %57, %cst_26 {dimension_numbers = #tpu.dot_dimension_numbers<[2], [2], [1], [1], [0, 0, 0, 1, 1, 1], [0], [0]>} : vector<2x8x32xf32>, vector<2x8x32xf32>, vector<2x8x8xf32> -> vector<2x8x8xf32>
    "tpu.trace_stop"() : () -> ()
    %cst_27 = arith.constant 0.176776692 : f32
    %60 = vector.broadcast %cst_27 : f32 to vector<2x8x8xf32>
    %61 = arith.mulf %59, %60 : vector<2x8x8xf32>
    %cst_28 = arith.constant dense<0xFF800000> : vector<2x8xf32>
    %62 = vector.multi_reduction <maximumf>, %61, %cst_28 [2] : vector<2x8x8xf32> to vector<2x8xf32>
    %63 = vector.shape_cast %62 : vector<2x8xf32> to vector<2x8x1xf32>
    %64 = vector.broadcast %63 : vector<2x8x1xf32> to vector<2x8x8xf32>
    %65 = arith.subf %61, %64 : vector<2x8x8xf32>
    %66 = math.exp %65 : vector<2x8x8xf32>
    %cst_29 = arith.constant dense<0.000000e+00> : vector<2x8xf32>
    %67 = vector.multi_reduction <add>, %66, %cst_29 [2] : vector<2x8x8xf32> to vector<2x8xf32>
    %68 = vector.shape_cast %67 : vector<2x8xf32> to vector<2x8x1xf32>
    %69 = tpu.reciprocal %68 {approx = true} : vector<2x8x1xf32> -> vector<2x8x1xf32>
    %70 = vector.broadcast %69 : vector<2x8x1xf32> to vector<2x8x8xf32>
    %71 = arith.mulf %66, %70 : vector<2x8x8xf32>
    "tpu.trace_start"() <{level = 10 : i32, message = "bqk,bkd->bqd"}> : () -> ()
    %cst_30 = arith.constant dense<0.000000e+00> : vector<2x8x32xf32>
    %72 = tpu.matmul %71, %58, %cst_30 {dimension_numbers = #tpu.dot_dimension_numbers<[2], [1], [1], [2], [0, 0, 0, 1, 1, 2], [0], [0]>} : vector<2x8x8xf32>, vector<2x8x32xf32>, vector<2x8x32xf32> -> vector<2x8x32xf32>
    "tpu.trace_stop"() : () -> ()
    %73 = vector.shape_cast %72 : vector<2x8x32xf32> to vector<16x32xf32>
    %c0_31 = arith.constant 0 : index
    %c0_32 = arith.constant 0 : index
    %74 = vector.load %arg13[%c0_31, %c0_32] : memref<16x128xf32, #tpu.memory_space<vmem>>, vector<16x32xf32>
    tpu.vector_store %arg13[%c0_31, %c0_32], %73 {strides = array<i32>} : memref<16x128xf32, #tpu.memory_space<vmem>>, vector<16x32xf32>,
    %75 = vector.extract_strided_slice %55 {offsets = [0, 0, 32], sizes = [2, 8, 32], strides = [1, 1, 1]} : vector<2x8x384xf32> to vector<2x8x32xf32>
    %76 = vector.extract_strided_slice %55 {offsets = [0, 0, 160], sizes = [2, 8, 32], strides = [1, 1, 1]} : vector<2x8x384xf32> to vector<2x8x32xf32>
    %77 = vector.extract_strided_slice %55 {offsets = [0, 0, 288], sizes = [2, 8, 32], strides = [1, 1, 1]} : vector<2x8x384xf32> to vector<2x8x32xf32>
    "tpu.trace_start"() <{level = 10 : i32, message = "bqd,bkd->bqk"}> : () -> ()
    %cst_33 = arith.constant dense<0.000000e+00> : vector<2x8x8xf32>
    %78 = tpu.matmul %75, %76, %cst_33 {dimension_numbers = #tpu.dot_dimension_numbers<[2], [2], [1], [1], [0, 0, 0, 1, 1, 1], [0], [0]>} : vector<2x8x32xf32>, vector<2x8x32xf32>, vector<2x8x8xf32> -> vector<2x8x8xf32>
    "tpu.trace_stop"() : () -> ()
    %cst_34 = arith.constant 0.176776692 : f32
    %79 = vector.broadcast %cst_34 : f32 to vector<2x8x8xf32>
    %80 = arith.mulf %78, %79 : vector<2x8x8xf32>
    %cst_35 = arith.constant dense<0xFF800000> : vector<2x8xf32>
    %81 = vector.multi_reduction <maximumf>, %80, %cst_35 [2] : vector<2x8x8xf32> to vector<2x8xf32>
    %82 = vector.shape_cast %81 : vector<2x8xf32> to vector<2x8x1xf32>
    %83 = vector.broadcast %82 : vector<2x8x1xf32> to vector<2x8x8xf32>
    %84 = arith.subf %80, %83 : vector<2x8x8xf32>
    %85 = math.exp %84 : vector<2x8x8xf32>
    %cst_36 = arith.constant dense<0.000000e+00> : vector<2x8xf32>
    %86 = vector.multi_reduction <add>, %85, %cst_36 [2] : vector<2x8x8xf32> to vector<2x8xf32>
    %87 = vector.shape_cast %86 : vector<2x8xf32> to vector<2x8x1xf32>
    %88 = tpu.reciprocal %87 {approx = true} : vector<2x8x1xf32> -> vector<2x8x1xf32>
    %89 = vector.broadcast %88 : vector<2x8x1xf32> to vector<2x8x8xf32>
    %90 = arith.mulf %85, %89 : vector<2x8x8xf32>
    "tpu.trace_start"() <{level = 10 : i32, message = "bqk,bkd->bqd"}> : () -> ()
    %cst_37 = arith.constant dense<0.000000e+00> : vector<2x8x32xf32>
    %91 = tpu.matmul %90, %77, %cst_37 {dimension_numbers = #tpu.dot_dimension_numbers<[2], [1], [1], [2], [0, 0, 0, 1, 1, 2], [0], [0]>} : vector<2x8x8xf32>, vector<2x8x32xf32>, vector<2x8x32xf32> -> vector<2x8x32xf32>
    "tpu.trace_stop"() : () -> ()
    %92 = vector.shape_cast %91 : vector<2x8x32xf32> to vector<16x32xf32>
    %c0_38 = arith.constant 0 : index
    %c32 = arith.constant 32 : index
    %93 = vector.load %arg13[%c0_38, %c32] : memref<16x128xf32, #tpu.memory_space<vmem>>, vector<16x32xf32>
    tpu.vector_store %arg13[%c0_38, %c32], %92 {strides = array<i32>} : memref<16x128xf32, #tpu.memory_space<vmem>>, vector<16x32xf32>,
    %94 = vector.extract_strided_slice %55 {offsets = [0, 0, 64], sizes = [2, 8, 32], strides = [1, 1, 1]} : vector<2x8x384xf32> to vector<2x8x32xf32>
    %95 = vector.extract_strided_slice %55 {offsets = [0, 0, 192], sizes = [2, 8, 32], strides = [1, 1, 1]} : vector<2x8x384xf32> to vector<2x8x32xf32>
    %96 = vector.extract_strided_slice %55 {offsets = [0, 0, 320], sizes = [2, 8, 32], strides = [1, 1, 1]} : vector<2x8x384xf32> to vector<2x8x32xf32>
    "tpu.trace_start"() <{level = 10 : i32, message = "bqd,bkd->bqk"}> : () -> ()
    %cst_39 = arith.constant dense<0.000000e+00> : vector<2x8x8xf32>
    %97 = tpu.matmul %94, %95, %cst_39 {dimension_numbers = #tpu.dot_dimension_numbers<[2], [2], [1], [1], [0, 0, 0, 1, 1, 1], [0], [0]>} : vector<2x8x32xf32>, vector<2x8x32xf32>, vector<2x8x8xf32> -> vector<2x8x8xf32>
    "tpu.trace_stop"() : () -> ()
    %cst_40 = arith.constant 0.176776692 : f32
    %98 = vector.broadcast %cst_40 : f32 to vector<2x8x8xf32>
    %99 = arith.mulf %97, %98 : vector<2x8x8xf32>
    %cst_41 = arith.constant dense<0xFF800000> : vector<2x8xf32>
    %100 = vector.multi_reduction <maximumf>, %99, %cst_41 [2] : vector<2x8x8xf32> to vector<2x8xf32>
    %101 = vector.shape_cast %100 : vector<2x8xf32> to vector<2x8x1xf32>
    %102 = vector.broadcast %101 : vector<2x8x1xf32> to vector<2x8x8xf32>
    %103 = arith.subf %99, %102 : vector<2x8x8xf32>
    %104 = math.exp %103 : vector<2x8x8xf32>
    %cst_42 = arith.constant dense<0.000000e+00> : vector<2x8xf32>
    %105 = vector.multi_reduction <add>, %104, %cst_42 [2] : vector<2x8x8xf32> to vector<2x8xf32>
    %106 = vector.shape_cast %105 : vector<2x8xf32> to vector<2x8x1xf32>
    %107 = tpu.reciprocal %106 {approx = true} : vector<2x8x1xf32> -> vector<2x8x1xf32>
    %108 = vector.broadcast %107 : vector<2x8x1xf32> to vector<2x8x8xf32>
    %109 = arith.mulf %104, %108 : vector<2x8x8xf32>
    "tpu.trace_start"() <{level = 10 : i32, message = "bqk,bkd->bqd"}> : () -> ()
    %cst_43 = arith.constant dense<0.000000e+00> : vector<2x8x32xf32>
    %110 = tpu.matmul %109, %96, %cst_43 {dimension_numbers = #tpu.dot_dimension_numbers<[2], [1], [1], [2], [0, 0, 0, 1, 1, 2], [0], [0]>} : vector<2x8x8xf32>, vector<2x8x32xf32>, vector<2x8x32xf32> -> vector<2x8x32xf32>
    "tpu.trace_stop"() : () -> ()
    %111 = vector.shape_cast %110 : vector<2x8x32xf32> to vector<16x32xf32>
    %c0_44 = arith.constant 0 : index
    %c64 = arith.constant 64 : index
    %112 = vector.load %arg13[%c0_44, %c64] : memref<16x128xf32, #tpu.memory_space<vmem>>, vector<16x32xf32>
    tpu.vector_store %arg13[%c0_44, %c64], %111 {strides = array<i32>} : memref<16x128xf32, #tpu.memory_space<vmem>>, vector<16x32xf32>,
    %113 = vector.extract_strided_slice %55 {offsets = [0, 0, 96], sizes = [2, 8, 32], strides = [1, 1, 1]} : vector<2x8x384xf32> to vector<2x8x32xf32>
    %114 = vector.extract_strided_slice %55 {offsets = [0, 0, 224], sizes = [2, 8, 32], strides = [1, 1, 1]} : vector<2x8x384xf32> to vector<2x8x32xf32>
    %115 = vector.extract_strided_slice %55 {offsets = [0, 0, 352], sizes = [2, 8, 32], strides = [1, 1, 1]} : vector<2x8x384xf32> to vector<2x8x32xf32>
    "tpu.trace_start"() <{level = 10 : i32, message = "bqd,bkd->bqk"}> : () -> ()
    %cst_45 = arith.constant dense<0.000000e+00> : vector<2x8x8xf32>
    %116 = tpu.matmul %113, %114, %cst_45 {dimension_numbers = #tpu.dot_dimension_numbers<[2], [2], [1], [1], [0, 0, 0, 1, 1, 1], [0], [0]>} : vector<2x8x32xf32>, vector<2x8x32xf32>, vector<2x8x8xf32> -> vector<2x8x8xf32>
    "tpu.trace_stop"() : () -> ()
    %cst_46 = arith.constant 0.176776692 : f32
    %117 = vector.broadcast %cst_46 : f32 to vector<2x8x8xf32>
    %118 = arith.mulf %116, %117 : vector<2x8x8xf32>
    %cst_47 = arith.constant dense<0xFF800000> : vector<2x8xf32>
    %119 = vector.multi_reduction <maximumf>, %118, %cst_47 [2] : vector<2x8x8xf32> to vector<2x8xf32>
    %120 = vector.shape_cast %119 : vector<2x8xf32> to vector<2x8x1xf32>
    %121 = vector.broadcast %120 : vector<2x8x1xf32> to vector<2x8x8xf32>
    %122 = arith.subf %118, %121 : vector<2x8x8xf32>
    %123 = math.exp %122 : vector<2x8x8xf32>
    %cst_48 = arith.constant dense<0.000000e+00> : vector<2x8xf32>
    %124 = vector.multi_reduction <add>, %123, %cst_48 [2] : vector<2x8x8xf32> to vector<2x8xf32>
    %125 = vector.shape_cast %124 : vector<2x8xf32> to vector<2x8x1xf32>
    %126 = tpu.reciprocal %125 {approx = true} : vector<2x8x1xf32> -> vector<2x8x1xf32>
    %127 = vector.broadcast %126 : vector<2x8x1xf32> to vector<2x8x8xf32>
    %128 = arith.mulf %123, %127 : vector<2x8x8xf32>
    "tpu.trace_start"() <{level = 10 : i32, message = "bqk,bkd->bqd"}> : () -> ()
    %cst_49 = arith.constant dense<0.000000e+00> : vector<2x8x32xf32>
    %129 = tpu.matmul %128, %115, %cst_49 {dimension_numbers = #tpu.dot_dimension_numbers<[2], [1], [1], [2], [0, 0, 0, 1, 1, 2], [0], [0]>} : vector<2x8x8xf32>, vector<2x8x32xf32>, vector<2x8x32xf32> -> vector<2x8x32xf32>
    "tpu.trace_stop"() : () -> ()
    %130 = vector.shape_cast %129 : vector<2x8x32xf32> to vector<16x32xf32>
    %c0_50 = arith.constant 0 : index
    %c96 = arith.constant 96 : index
    %131 = vector.load %arg13[%c0_50, %c96] : memref<16x128xf32, #tpu.memory_space<vmem>>, vector<16x32xf32>
    tpu.vector_store %arg13[%c0_50, %c96], %130 {strides = array<i32>} : memref<16x128xf32, #tpu.memory_space<vmem>>, vector<16x32xf32>,
    %c0_51 = arith.constant 0 : index
    %c0_52 = arith.constant 0 : index
    %132 = vector.load %arg13[%c0_51, %c0_52] : memref<16x128xf32, #tpu.memory_space<vmem>>, vector<16x128xf32>
    %c0_53 = arith.constant 0 : index
    %c0_54 = arith.constant 0 : index
    %c0_55 = arith.constant 0 : index
    %133 = vector.load %arg7[%c0_53, %c0_54, %c0_55] : memref<2x128x128xf32, #tpu.memory_space<vmem>>, vector<1x128x128xf32>
    %134 = vector.shape_cast %133 : vector<1x128x128xf32> to vector<128x128xf32>
    %cst_56 = arith.constant dense<0.000000e+00> : vector<16x128xf32>
    %135 = tpu.matmul %132, %134, %cst_56 {dimension_numbers = #tpu.dot_dimension_numbers<[1], [0], [0], [1], [0, 0, 1, 1], [], []>} : vector<16x128xf32>, vector<128x128xf32>, vector<16x128xf32> -> vector<16x128xf32>
    %136 = vector.broadcast %42 : vector<1x128xf32> to vector<16x128xf32>
    %137 = arith.addf %135, %136 : vector<16x128xf32>
    %138 = arith.addf %39, %137 : vector<16x128xf32>
    %cst_57 = arith.constant dense<0.000000e+00> : vector<16xf32>
    %139 = vector.multi_reduction <add>, %138, %cst_57 [1] : vector<16x128xf32> to vector<16xf32>
    %140 = vector.shape_cast %139 : vector<16xf32> to vector<16x1xf32>
    %cst_58 = arith.constant 1.280000e+02 : f32
    %141 = vector.broadcast %cst_58 : f32 to vector<16x1xf32>
    %142 = arith.divf %140, %141 : vector<16x1xf32>
    %143 = vector.broadcast %142 : vector<16x1xf32> to vector<16x128xf32>
    %144 = arith.subf %138, %143 : vector<16x128xf32>
    %145 = arith.mulf %144, %144 : vector<16x128xf32>
    %cst_59 = arith.constant dense<0.000000e+00> : vector<16xf32>
    %146 = vector.multi_reduction <add>, %145, %cst_59 [1] : vector<16x128xf32> to vector<16xf32>
    %147 = vector.shape_cast %146 : vector<16xf32> to vector<16x1xf32>
    %cst_60 = arith.constant 1.280000e+02 : f32
    %148 = vector.broadcast %cst_60 : f32 to vector<16x1xf32>
    %149 = arith.divf %147, %148 : vector<16x1xf32>
    %cst_61 = arith.constant 9.99999996E-13 : f32
    %150 = vector.broadcast %cst_61 : f32 to vector<16x1xf32>
    %151 = arith.addf %149, %150 : vector<16x1xf32>
    %152 = math.rsqrt %151 : vector<16x1xf32>
    %153 = vector.broadcast %142 : vector<16x1xf32> to vector<16x128xf32>
    %154 = arith.subf %138, %153 : vector<16x128xf32>
    %155 = vector.broadcast %152 : vector<16x1xf32> to vector<16x128xf32>
    %156 = arith.mulf %154, %155 : vector<16x128xf32>
    %157 = vector.broadcast %44 : vector<1x128xf32> to vector<16x128xf32>
    %158 = arith.mulf %156, %157 : vector<16x128xf32>
    %159 = vector.broadcast %45 : vector<1x128xf32> to vector<16x128xf32>
    %160 = arith.addf %158, %159 : vector<16x128xf32>
    %c0_62 = arith.constant 0 : index
    %c0_63 = arith.constant 0 : index
    %c0_64 = arith.constant 0 : index
    %161 = vector.load %arg8[%c0_62, %c0_63, %c0_64] : memref<2x128x256xf32, #tpu.memory_space<vmem>>, vector<1x128x256xf32>
    %162 = vector.shape_cast %161 : vector<1x128x256xf32> to vector<128x256xf32>
    %cst_65 = arith.constant dense<0.000000e+00> : vector<16x256xf32>
    %163 = tpu.matmul %160, %162, %cst_65 {dimension_numbers = #tpu.dot_dimension_numbers<[1], [0], [0], [1], [0, 0, 1, 1], [], []>} : vector<16x128xf32>, vector<128x256xf32>, vector<16x256xf32> -> vector<16x256xf32>
    %c0_66 = arith.constant 0 : index
    %c0_67 = arith.constant 0 : index
    %c0_68 = arith.constant 0 : index
    %164 = vector.load %arg9[%c0_66, %c0_67, %c0_68] : memref<2x1x256xf32, #tpu.memory_space<vmem>>, vector<1x1x256xf32>
    %165 = vector.shape_cast %164 : vector<1x1x256xf32> to vector<1x256xf32>
    %166 = vector.broadcast %165 : vector<1x256xf32> to vector<16x256xf32>
    %167 = arith.addf %163, %166 : vector<16x256xf32>
    %cst_69 = arith.constant 5.000000e-01 : f32
    %168 = vector.broadcast %cst_69 : f32 to vector<16x256xf32>
    %169 = arith.mulf %168, %167 : vector<16x256xf32>
    %cst_70 = arith.constant 4.471500e-02 : f32
    %170 = vector.broadcast %cst_70 : f32 to vector<16x256xf32>
    %171 = arith.mulf %170, %167 : vector<16x256xf32>
    %172 = arith.mulf %171, %167 : vector<16x256xf32>
    %173 = arith.mulf %172, %167 : vector<16x256xf32>
    %174 = arith.addf %167, %173 : vector<16x256xf32>
    %cst_71 = arith.constant 0.797884583 : f32
    %175 = vector.broadcast %cst_71 : f32 to vector<16x256xf32>
    %176 = arith.mulf %175, %174 : vector<16x256xf32>
    %177 = math.tanh %176 : vector<16x256xf32>
    %cst_72 = arith.constant 1.000000e+00 : f32
    %178 = vector.broadcast %cst_72 : f32 to vector<16x256xf32>
    %179 = arith.addf %178, %177 : vector<16x256xf32>
    %180 = arith.mulf %169, %179 : vector<16x256xf32>
    %c0_73 = arith.constant 0 : index
    %c0_74 = arith.constant 0 : index
    %c0_75 = arith.constant 0 : index
    %181 = vector.load %arg10[%c0_73, %c0_74, %c0_75] : memref<2x256x128xf32, #tpu.memory_space<vmem>>, vector<1x256x128xf32>
    %182 = vector.shape_cast %181 : vector<1x256x128xf32> to vector<256x128xf32>
    %cst_76 = arith.constant dense<0.000000e+00> : vector<16x128xf32>
    %183 = tpu.matmul %180, %182, %cst_76 {dimension_numbers = #tpu.dot_dimension_numbers<[1], [0], [0], [1], [0, 0, 1, 1], [], []>} : vector<16x256xf32>, vector<256x128xf32>, vector<16x128xf32> -> vector<16x128xf32>
    %184 = vector.broadcast %43 : vector<1x128xf32> to vector<16x128xf32>
    %185 = arith.addf %183, %184 : vector<16x128xf32>
    %186 = arith.addf %160, %185 : vector<16x128xf32>
    %cst_77 = arith.constant dense<0.000000e+00> : vector<16xf32>
    %187 = vector.multi_reduction <add>, %186, %cst_77 [1] : vector<16x128xf32> to vector<16xf32>
    %188 = vector.shape_cast %187 : vector<16xf32> to vector<16x1xf32>
    %cst_78 = arith.constant 1.280000e+02 : f32
    %189 = vector.broadcast %cst_78 : f32 to vector<16x1xf32>
    %190 = arith.divf %188, %189 : vector<16x1xf32>
    %191 = vector.broadcast %190 : vector<16x1xf32> to vector<16x128xf32>
    %192 = arith.subf %186, %191 : vector<16x128xf32>
    %193 = arith.mulf %192, %192 : vector<16x128xf32>
    %cst_79 = arith.constant dense<0.000000e+00> : vector<16xf32>
    %194 = vector.multi_reduction <add>, %193, %cst_79 [1] : vector<16x128xf32> to vector<16xf32>
    %195 = vector.shape_cast %194 : vector<16xf32> to vector<16x1xf32>
    %cst_80 = arith.constant 1.280000e+02 : f32
    %196 = vector.broadcast %cst_80 : f32 to vector<16x1xf32>
    %197 = arith.divf %195, %196 : vector<16x1xf32>
    %cst_81 = arith.constant 9.99999996E-13 : f32
    %198 = vector.broadcast %cst_81 : f32 to vector<16x1xf32>
    %199 = arith.addf %197, %198 : vector<16x1xf32>
    %200 = math.rsqrt %199 : vector<16x1xf32>
    %201 = vector.broadcast %190 : vector<16x1xf32> to vector<16x128xf32>
    %202 = arith.subf %186, %201 : vector<16x128xf32>
    %203 = vector.broadcast %200 : vector<16x1xf32> to vector<16x128xf32>
    %204 = arith.mulf %202, %203 : vector<16x128xf32>
    %205 = vector.broadcast %46 : vector<1x128xf32> to vector<16x128xf32>
    %206 = arith.mulf %204, %205 : vector<16x128xf32>
    %207 = vector.broadcast %47 : vector<1x128xf32> to vector<16x128xf32>
    %208 = arith.addf %206, %207 : vector<16x128xf32>
    %c1 = arith.constant 1 : index
    %c0_82 = arith.constant 0 : index
    %c0_83 = arith.constant 0 : index
    %209 = vector.load %arg11[%c1, %c0_82, %c0_83] : memref<2x6x128xf32, #tpu.memory_space<vmem>>, vector<1x6x128xf32>
    %210 = vector.shape_cast %209 : vector<1x6x128xf32> to vector<6x128xf32>
    %211 = vector.extract_strided_slice %210 {offsets = [0, 0], sizes = [1, 128], strides = [1, 1]} : vector<6x128xf32> to vector<1x128xf32>
    %212 = vector.extract_strided_slice %210 {offsets = [1, 0], sizes = [1, 128], strides = [1, 1]} : vector<6x128xf32> to vector<1x128xf32>
    %213 = vector.extract_strided_slice %210 {offsets = [2, 0], sizes = [1, 128], strides = [1, 1]} : vector<6x128xf32> to vector<1x128xf32>
    %214 = vector.extract_strided_slice %210 {offsets = [3, 0], sizes = [1, 128], strides = [1, 1]} : vector<6x128xf32> to vector<1x128xf32>
    %215 = vector.extract_strided_slice %210 {offsets = [4, 0], sizes = [1, 128], strides = [1, 1]} : vector<6x128xf32> to vector<1x128xf32>
    %216 = vector.extract_strided_slice %210 {offsets = [5, 0], sizes = [1, 128], strides = [1, 1]} : vector<6x128xf32> to vector<1x128xf32>
    %c1_84 = arith.constant 1 : index
    %c0_85 = arith.constant 0 : index
    %c0_86 = arith.constant 0 : index
    %217 = vector.load %arg5[%c1_84, %c0_85, %c0_86] : memref<2x128x384xf32, #tpu.memory_space<vmem>>, vector<1x128x384xf32>
    %218 = vector.shape_cast %217 : vector<1x128x384xf32> to vector<128x384xf32>
    %cst_87 = arith.constant dense<0.000000e+00> : vector<16x384xf32>
    %219 = tpu.matmul %208, %218, %cst_87 {dimension_numbers = #tpu.dot_dimension_numbers<[1], [0], [0], [1], [0, 0, 1, 1], [], []>} : vector<16x128xf32>, vector<128x384xf32>, vector<16x384xf32> -> vector<16x384xf32>
    %c1_88 = arith.constant 1 : index
    %c0_89 = arith.constant 0 : index
    %c0_90 = arith.constant 0 : index
    %220 = vector.load %arg6[%c1_88, %c0_89, %c0_90] : memref<2x1x384xf32, #tpu.memory_space<vmem>>, vector<1x1x384xf32>
    %221 = vector.shape_cast %220 : vector<1x1x384xf32> to vector<1x384xf32>
    %222 = vector.broadcast %221 : vector<1x384xf32> to vector<16x384xf32>
    %223 = arith.addf %219, %222 : vector<16x384xf32>
    %224 = vector.shape_cast %223 : vector<16x384xf32> to vector<2x8x384xf32>
    %225 = vector.extract_strided_slice %224 {offsets = [0, 0, 0], sizes = [2, 8, 32], strides = [1, 1, 1]} : vector<2x8x384xf32> to vector<2x8x32xf32>
    %226 = vector.extract_strided_slice %224 {offsets = [0, 0, 128], sizes = [2, 8, 32], strides = [1, 1, 1]} : vector<2x8x384xf32> to vector<2x8x32xf32>
    %227 = vector.extract_strided_slice %224 {offsets = [0, 0, 256], sizes = [2, 8, 32], strides = [1, 1, 1]} : vector<2x8x384xf32> to vector<2x8x32xf32>
    "tpu.trace_start"() <{level = 10 : i32, message = "bqd,bkd->bqk"}> : () -> ()
    %cst_91 = arith.constant dense<0.000000e+00> : vector<2x8x8xf32>
    %228 = tpu.matmul %225, %226, %cst_91 {dimension_numbers = #tpu.dot_dimension_numbers<[2], [2], [1], [1], [0, 0, 0, 1, 1, 1], [0], [0]>} : vector<2x8x32xf32>, vector<2x8x32xf32>, vector<2x8x8xf32> -> vector<2x8x8xf32>
    "tpu.trace_stop"() : () -> ()
    %cst_92 = arith.constant 0.176776692 : f32
    %229 = vector.broadcast %cst_92 : f32 to vector<2x8x8xf32>
    %230 = arith.mulf %228, %229 : vector<2x8x8xf32>
    %cst_93 = arith.constant dense<0xFF800000> : vector<2x8xf32>
    %231 = vector.multi_reduction <maximumf>, %230, %cst_93 [2] : vector<2x8x8xf32> to vector<2x8xf32>
    %232 = vector.shape_cast %231 : vector<2x8xf32> to vector<2x8x1xf32>
    %233 = vector.broadcast %232 : vector<2x8x1xf32> to vector<2x8x8xf32>
    %234 = arith.subf %230, %233 : vector<2x8x8xf32>
    %235 = math.exp %234 : vector<2x8x8xf32>
    %cst_94 = arith.constant dense<0.000000e+00> : vector<2x8xf32>
    %236 = vector.multi_reduction <add>, %235, %cst_94 [2] : vector<2x8x8xf32> to vector<2x8xf32>
    %237 = vector.shape_cast %236 : vector<2x8xf32> to vector<2x8x1xf32>
    %238 = tpu.reciprocal %237 {approx = true} : vector<2x8x1xf32> -> vector<2x8x1xf32>
    %239 = vector.broadcast %238 : vector<2x8x1xf32> to vector<2x8x8xf32>
    %240 = arith.mulf %235, %239 : vector<2x8x8xf32>
    "tpu.trace_start"() <{level = 10 : i32, message = "bqk,bkd->bqd"}> : () -> ()
    %cst_95 = arith.constant dense<0.000000e+00> : vector<2x8x32xf32>
    %241 = tpu.matmul %240, %227, %cst_95 {dimension_numbers = #tpu.dot_dimension_numbers<[2], [1], [1], [2], [0, 0, 0, 1, 1, 2], [0], [0]>} : vector<2x8x8xf32>, vector<2x8x32xf32>, vector<2x8x32xf32> -> vector<2x8x32xf32>
    "tpu.trace_stop"() : () -> ()
    %242 = vector.shape_cast %241 : vector<2x8x32xf32> to vector<16x32xf32>
    %c0_96 = arith.constant 0 : index
    %c0_97 = arith.constant 0 : index
    %243 = vector.load %arg13[%c0_96, %c0_97] : memref<16x128xf32, #tpu.memory_space<vmem>>, vector<16x32xf32>
    tpu.vector_store %arg13[%c0_96, %c0_97], %242 {strides = array<i32>} : memref<16x128xf32, #tpu.memory_space<vmem>>, vector<16x32xf32>,
    %244 = vector.extract_strided_slice %224 {offsets = [0, 0, 32], sizes = [2, 8, 32], strides = [1, 1, 1]} : vector<2x8x384xf32> to vector<2x8x32xf32>
    %245 = vector.extract_strided_slice %224 {offsets = [0, 0, 160], sizes = [2, 8, 32], strides = [1, 1, 1]} : vector<2x8x384xf32> to vector<2x8x32xf32>
    %246 = vector.extract_strided_slice %224 {offsets = [0, 0, 288], sizes = [2, 8, 32], strides = [1, 1, 1]} : vector<2x8x384xf32> to vector<2x8x32xf32>
    "tpu.trace_start"() <{level = 10 : i32, message = "bqd,bkd->bqk"}> : () -> ()
    %cst_98 = arith.constant dense<0.000000e+00> : vector<2x8x8xf32>
    %247 = tpu.matmul %244, %245, %cst_98 {dimension_numbers = #tpu.dot_dimension_numbers<[2], [2], [1], [1], [0, 0, 0, 1, 1, 1], [0], [0]>} : vector<2x8x32xf32>, vector<2x8x32xf32>, vector<2x8x8xf32> -> vector<2x8x8xf32>
    "tpu.trace_stop"() : () -> ()
    %cst_99 = arith.constant 0.176776692 : f32
    %248 = vector.broadcast %cst_99 : f32 to vector<2x8x8xf32>
    %249 = arith.mulf %247, %248 : vector<2x8x8xf32>
    %cst_100 = arith.constant dense<0xFF800000> : vector<2x8xf32>
    %250 = vector.multi_reduction <maximumf>, %249, %cst_100 [2] : vector<2x8x8xf32> to vector<2x8xf32>
    %251 = vector.shape_cast %250 : vector<2x8xf32> to vector<2x8x1xf32>
    %252 = vector.broadcast %251 : vector<2x8x1xf32> to vector<2x8x8xf32>
    %253 = arith.subf %249, %252 : vector<2x8x8xf32>
    %254 = math.exp %253 : vector<2x8x8xf32>
    %cst_101 = arith.constant dense<0.000000e+00> : vector<2x8xf32>
    %255 = vector.multi_reduction <add>, %254, %cst_101 [2] : vector<2x8x8xf32> to vector<2x8xf32>
    %256 = vector.shape_cast %255 : vector<2x8xf32> to vector<2x8x1xf32>
    %257 = tpu.reciprocal %256 {approx = true} : vector<2x8x1xf32> -> vector<2x8x1xf32>
    %258 = vector.broadcast %257 : vector<2x8x1xf32> to vector<2x8x8xf32>
    %259 = arith.mulf %254, %258 : vector<2x8x8xf32>
    "tpu.trace_start"() <{level = 10 : i32, message = "bqk,bkd->bqd"}> : () -> ()
    %cst_102 = arith.constant dense<0.000000e+00> : vector<2x8x32xf32>
    %260 = tpu.matmul %259, %246, %cst_102 {dimension_numbers = #tpu.dot_dimension_numbers<[2], [1], [1], [2], [0, 0, 0, 1, 1, 2], [0], [0]>} : vector<2x8x8xf32>, vector<2x8x32xf32>, vector<2x8x32xf32> -> vector<2x8x32xf32>
    "tpu.trace_stop"() : () -> ()
    %261 = vector.shape_cast %260 : vector<2x8x32xf32> to vector<16x32xf32>
    %c0_103 = arith.constant 0 : index
    %c32_104 = arith.constant 32 : index
    %262 = vector.load %arg13[%c0_103, %c32_104] : memref<16x128xf32, #tpu.memory_space<vmem>>, vector<16x32xf32>
    tpu.vector_store %arg13[%c0_103, %c32_104], %261 {strides = array<i32>} : memref<16x128xf32, #tpu.memory_space<vmem>>, vector<16x32xf32>,
    %263 = vector.extract_strided_slice %224 {offsets = [0, 0, 64], sizes = [2, 8, 32], strides = [1, 1, 1]} : vector<2x8x384xf32> to vector<2x8x32xf32>
    %264 = vector.extract_strided_slice %224 {offsets = [0, 0, 192], sizes = [2, 8, 32], strides = [1, 1, 1]} : vector<2x8x384xf32> to vector<2x8x32xf32>
    %265 = vector.extract_strided_slice %224 {offsets = [0, 0, 320], sizes = [2, 8, 32], strides = [1, 1, 1]} : vector<2x8x384xf32> to vector<2x8x32xf32>
    "tpu.trace_start"() <{level = 10 : i32, message = "bqd,bkd->bqk"}> : () -> ()
    %cst_105 = arith.constant dense<0.000000e+00> : vector<2x8x8xf32>
    %266 = tpu.matmul %263, %264, %cst_105 {dimension_numbers = #tpu.dot_dimension_numbers<[2], [2], [1], [1], [0, 0, 0, 1, 1, 1], [0], [0]>} : vector<2x8x32xf32>, vector<2x8x32xf32>, vector<2x8x8xf32> -> vector<2x8x8xf32>
    "tpu.trace_stop"() : () -> ()
    %cst_106 = arith.constant 0.176776692 : f32
    %267 = vector.broadcast %cst_106 : f32 to vector<2x8x8xf32>
    %268 = arith.mulf %266, %267 : vector<2x8x8xf32>
    %cst_107 = arith.constant dense<0xFF800000> : vector<2x8xf32>
    %269 = vector.multi_reduction <maximumf>, %268, %cst_107 [2] : vector<2x8x8xf32> to vector<2x8xf32>
    %270 = vector.shape_cast %269 : vector<2x8xf32> to vector<2x8x1xf32>
    %271 = vector.broadcast %270 : vector<2x8x1xf32> to vector<2x8x8xf32>
    %272 = arith.subf %268, %271 : vector<2x8x8xf32>
    %273 = math.exp %272 : vector<2x8x8xf32>
    %cst_108 = arith.constant dense<0.000000e+00> : vector<2x8xf32>
    %274 = vector.multi_reduction <add>, %273, %cst_108 [2] : vector<2x8x8xf32> to vector<2x8xf32>
    %275 = vector.shape_cast %274 : vector<2x8xf32> to vector<2x8x1xf32>
    %276 = tpu.reciprocal %275 {approx = true} : vector<2x8x1xf32> -> vector<2x8x1xf32>
    %277 = vector.broadcast %276 : vector<2x8x1xf32> to vector<2x8x8xf32>
    %278 = arith.mulf %273, %277 : vector<2x8x8xf32>
    "tpu.trace_start"() <{level = 10 : i32, message = "bqk,bkd->bqd"}> : () -> ()
    %cst_109 = arith.constant dense<0.000000e+00> : vector<2x8x32xf32>
    %279 = tpu.matmul %278, %265, %cst_109 {dimension_numbers = #tpu.dot_dimension_numbers<[2], [1], [1], [2], [0, 0, 0, 1, 1, 2], [0], [0]>} : vector<2x8x8xf32>, vector<2x8x32xf32>, vector<2x8x32xf32> -> vector<2x8x32xf32>
    "tpu.trace_stop"() : () -> ()
    %280 = vector.shape_cast %279 : vector<2x8x32xf32> to vector<16x32xf32>
    %c0_110 = arith.constant 0 : index
    %c64_111 = arith.constant 64 : index
    %281 = vector.load %arg13[%c0_110, %c64_111] : memref<16x128xf32, #tpu.memory_space<vmem>>, vector<16x32xf32>
    tpu.vector_store %arg13[%c0_110, %c64_111], %280 {strides = array<i32>} : memref<16x128xf32, #tpu.memory_space<vmem>>, vector<16x32xf32>,
    %282 = vector.extract_strided_slice %224 {offsets = [0, 0, 96], sizes = [2, 8, 32], strides = [1, 1, 1]} : vector<2x8x384xf32> to vector<2x8x32xf32>
    %283 = vector.extract_strided_slice %224 {offsets = [0, 0, 224], sizes = [2, 8, 32], strides = [1, 1, 1]} : vector<2x8x384xf32> to vector<2x8x32xf32>
    %284 = vector.extract_strided_slice %224 {offsets = [0, 0, 352], sizes = [2, 8, 32], strides = [1, 1, 1]} : vector<2x8x384xf32> to vector<2x8x32xf32>
    "tpu.trace_start"() <{level = 10 : i32, message = "bqd,bkd->bqk"}> : () -> ()
    %cst_112 = arith.constant dense<0.000000e+00> : vector<2x8x8xf32>
    %285 = tpu.matmul %282, %283, %cst_112 {dimension_numbers = #tpu.dot_dimension_numbers<[2], [2], [1], [1], [0, 0, 0, 1, 1, 1], [0], [0]>} : vector<2x8x32xf32>, vector<2x8x32xf32>, vector<2x8x8xf32> -> vector<2x8x8xf32>
    "tpu.trace_stop"() : () -> ()
    %cst_113 = arith.constant 0.176776692 : f32
    %286 = vector.broadcast %cst_113 : f32 to vector<2x8x8xf32>
    %287 = arith.mulf %285, %286 : vector<2x8x8xf32>
    %cst_114 = arith.constant dense<0xFF800000> : vector<2x8xf32>
    %288 = vector.multi_reduction <maximumf>, %287, %cst_114 [2] : vector<2x8x8xf32> to vector<2x8xf32>
    %289 = vector.shape_cast %288 : vector<2x8xf32> to vector<2x8x1xf32>
    %290 = vector.broadcast %289 : vector<2x8x1xf32> to vector<2x8x8xf32>
    %291 = arith.subf %287, %290 : vector<2x8x8xf32>
    %292 = math.exp %291 : vector<2x8x8xf32>
    %cst_115 = arith.constant dense<0.000000e+00> : vector<2x8xf32>
    %293 = vector.multi_reduction <add>, %292, %cst_115 [2] : vector<2x8x8xf32> to vector<2x8xf32>
    %294 = vector.shape_cast %293 : vector<2x8xf32> to vector<2x8x1xf32>
    %295 = tpu.reciprocal %294 {approx = true} : vector<2x8x1xf32> -> vector<2x8x1xf32>
    %296 = vector.broadcast %295 : vector<2x8x1xf32> to vector<2x8x8xf32>
    %297 = arith.mulf %292, %296 : vector<2x8x8xf32>
    "tpu.trace_start"() <{level = 10 : i32, message = "bqk,bkd->bqd"}> : () -> ()
    %cst_116 = arith.constant dense<0.000000e+00> : vector<2x8x32xf32>
    %298 = tpu.matmul %297, %284, %cst_116 {dimension_numbers = #tpu.dot_dimension_numbers<[2], [1], [1], [2], [0, 0, 0, 1, 1, 2], [0], [0]>} : vector<2x8x8xf32>, vector<2x8x32xf32>, vector<2x8x32xf32> -> vector<2x8x32xf32>
    "tpu.trace_stop"() : () -> ()
    %299 = vector.shape_cast %298 : vector<2x8x32xf32> to vector<16x32xf32>
    %c0_117 = arith.constant 0 : index
    %c96_118 = arith.constant 96 : index
    %300 = vector.load %arg13[%c0_117, %c96_118] : memref<16x128xf32, #tpu.memory_space<vmem>>, vector<16x32xf32>
    tpu.vector_store %arg13[%c0_117, %c96_118], %299 {strides = array<i32>} : memref<16x128xf32, #tpu.memory_space<vmem>>, vector<16x32xf32>,
    %c0_119 = arith.constant 0 : index
    %c0_120 = arith.constant 0 : index
    %301 = vector.load %arg13[%c0_119, %c0_120] : memref<16x128xf32, #tpu.memory_space<vmem>>, vector<16x128xf32>
    %c1_121 = arith.constant 1 : index
    %c0_122 = arith.constant 0 : index
    %c0_123 = arith.constant 0 : index
    %302 = vector.load %arg7[%c1_121, %c0_122, %c0_123] : memref<2x128x128xf32, #tpu.memory_space<vmem>>, vector<1x128x128xf32>
    %303 = vector.shape_cast %302 : vector<1x128x128xf32> to vector<128x128xf32>
    %cst_124 = arith.constant dense<0.000000e+00> : vector<16x128xf32>
    %304 = tpu.matmul %301, %303, %cst_124 {dimension_numbers = #tpu.dot_dimension_numbers<[1], [0], [0], [1], [0, 0, 1, 1], [], []>} : vector<16x128xf32>, vector<128x128xf32>, vector<16x128xf32> -> vector<16x128xf32>
    %305 = vector.broadcast %211 : vector<1x128xf32> to vector<16x128xf32>
    %306 = arith.addf %304, %305 : vector<16x128xf32>
    %307 = arith.addf %208, %306 : vector<16x128xf32>
    %cst_125 = arith.constant dense<0.000000e+00> : vector<16xf32>
    %308 = vector.multi_reduction <add>, %307, %cst_125 [1] : vector<16x128xf32> to vector<16xf32>
    %309 = vector.shape_cast %308 : vector<16xf32> to vector<16x1xf32>
    %cst_126 = arith.constant 1.280000e+02 : f32
    %310 = vector.broadcast %cst_126 : f32 to vector<16x1xf32>
    %311 = arith.divf %309, %310 : vector<16x1xf32>
    %312 = vector.broadcast %311 : vector<16x1xf32> to vector<16x128xf32>
    %313 = arith.subf %307, %312 : vector<16x128xf32>
    %314 = arith.mulf %313, %313 : vector<16x128xf32>
    %cst_127 = arith.constant dense<0.000000e+00> : vector<16xf32>
    %315 = vector.multi_reduction <add>, %314, %cst_127 [1] : vector<16x128xf32> to vector<16xf32>
    %316 = vector.shape_cast %315 : vector<16xf32> to vector<16x1xf32>
    %cst_128 = arith.constant 1.280000e+02 : f32
    %317 = vector.broadcast %cst_128 : f32 to vector<16x1xf32>
    %318 = arith.divf %316, %317 : vector<16x1xf32>
    %cst_129 = arith.constant 9.99999996E-13 : f32
    %319 = vector.broadcast %cst_129 : f32 to vector<16x1xf32>
    %320 = arith.addf %318, %319 : vector<16x1xf32>
    %321 = math.rsqrt %320 : vector<16x1xf32>
    %322 = vector.broadcast %311 : vector<16x1xf32> to vector<16x128xf32>
    %323 = arith.subf %307, %322 : vector<16x128xf32>
    %324 = vector.broadcast %321 : vector<16x1xf32> to vector<16x128xf32>
    %325 = arith.mulf %323, %324 : vector<16x128xf32>
    %326 = vector.broadcast %213 : vector<1x128xf32> to vector<16x128xf32>
    %327 = arith.mulf %325, %326 : vector<16x128xf32>
    %328 = vector.broadcast %214 : vector<1x128xf32> to vector<16x128xf32>
    %329 = arith.addf %327, %328 : vector<16x128xf32>
    %c1_130 = arith.constant 1 : index
    %c0_131 = arith.constant 0 : index
    %c0_132 = arith.constant 0 : index
    %330 = vector.load %arg8[%c1_130, %c0_131, %c0_132] : memref<2x128x256xf32, #tpu.memory_space<vmem>>, vector<1x128x256xf32>
    %331 = vector.shape_cast %330 : vector<1x128x256xf32> to vector<128x256xf32>
    %cst_133 = arith.constant dense<0.000000e+00> : vector<16x256xf32>
    %332 = tpu.matmul %329, %331, %cst_133 {dimension_numbers = #tpu.dot_dimension_numbers<[1], [0], [0], [1], [0, 0, 1, 1], [], []>} : vector<16x128xf32>, vector<128x256xf32>, vector<16x256xf32> -> vector<16x256xf32>
    %c1_134 = arith.constant 1 : index
    %c0_135 = arith.constant 0 : index
    %c0_136 = arith.constant 0 : index
    %333 = vector.load %arg9[%c1_134, %c0_135, %c0_136] : memref<2x1x256xf32, #tpu.memory_space<vmem>>, vector<1x1x256xf32>
    %334 = vector.shape_cast %333 : vector<1x1x256xf32> to vector<1x256xf32>
    %335 = vector.broadcast %334 : vector<1x256xf32> to vector<16x256xf32>
    %336 = arith.addf %332, %335 : vector<16x256xf32>
    %cst_137 = arith.constant 5.000000e-01 : f32
    %337 = vector.broadcast %cst_137 : f32 to vector<16x256xf32>
    %338 = arith.mulf %337, %336 : vector<16x256xf32>
    %cst_138 = arith.constant 4.471500e-02 : f32
    %339 = vector.broadcast %cst_138 : f32 to vector<16x256xf32>
    %340 = arith.mulf %339, %336 : vector<16x256xf32>
    %341 = arith.mulf %340, %336 : vector<16x256xf32>
    %342 = arith.mulf %341, %336 : vector<16x256xf32>
    %343 = arith.addf %336, %342 : vector<16x256xf32>
    %cst_139 = arith.constant 0.797884583 : f32
    %344 = vector.broadcast %cst_139 : f32 to vector<16x256xf32>
    %345 = arith.mulf %344, %343 : vector<16x256xf32>
    %346 = math.tanh %345 : vector<16x256xf32>
    %cst_140 = arith.constant 1.000000e+00 : f32
    %347 = vector.broadcast %cst_140 : f32 to vector<16x256xf32>
    %348 = arith.addf %347, %346 : vector<16x256xf32>
    %349 = arith.mulf %338, %348 : vector<16x256xf32>
    %c1_141 = arith.constant 1 : index
    %c0_142 = arith.constant 0 : index
    %c0_143 = arith.constant 0 : index
    %350 = vector.load %arg10[%c1_141, %c0_142, %c0_143] : memref<2x256x128xf32, #tpu.memory_space<vmem>>, vector<1x256x128xf32>
    %351 = vector.shape_cast %350 : vector<1x256x128xf32> to vector<256x128xf32>
    %cst_144 = arith.constant dense<0.000000e+00> : vector<16x128xf32>
    %352 = tpu.matmul %349, %351, %cst_144 {dimension_numbers = #tpu.dot_dimension_numbers<[1], [0], [0], [1], [0, 0, 1, 1], [], []>} : vector<16x256xf32>, vector<256x128xf32>, vector<16x128xf32> -> vector<16x128xf32>
    %353 = vector.broadcast %212 : vector<1x128xf32> to vector<16x128xf32>
    %354 = arith.addf %352, %353 : vector<16x128xf32>
    %355 = arith.addf %329, %354 : vector<16x128xf32>
    %cst_145 = arith.constant dense<0.000000e+00> : vector<16xf32>
    %356 = vector.multi_reduction <add>, %355, %cst_145 [1] : vector<16x128xf32> to vector<16xf32>
    %357 = vector.shape_cast %356 : vector<16xf32> to vector<16x1xf32>
    %cst_146 = arith.constant 1.280000e+02 : f32
    %358 = vector.broadcast %cst_146 : f32 to vector<16x1xf32>
    %359 = arith.divf %357, %358 : vector<16x1xf32>
    %360 = vector.broadcast %359 : vector<16x1xf32> to vector<16x128xf32>
    %361 = arith.subf %355, %360 : vector<16x128xf32>
    %362 = arith.mulf %361, %361 : vector<16x128xf32>
    %cst_147 = arith.constant dense<0.000000e+00> : vector<16xf32>
    %363 = vector.multi_reduction <add>, %362, %cst_147 [1] : vector<16x128xf32> to vector<16xf32>
    %364 = vector.shape_cast %363 : vector<16xf32> to vector<16x1xf32>
    %cst_148 = arith.constant 1.280000e+02 : f32
    %365 = vector.broadcast %cst_148 : f32 to vector<16x1xf32>
    %366 = arith.divf %364, %365 : vector<16x1xf32>
    %cst_149 = arith.constant 9.99999996E-13 : f32
    %367 = vector.broadcast %cst_149 : f32 to vector<16x1xf32>
    %368 = arith.addf %366, %367 : vector<16x1xf32>
    %369 = math.rsqrt %368 : vector<16x1xf32>
    %370 = vector.broadcast %359 : vector<16x1xf32> to vector<16x128xf32>
    %371 = arith.subf %355, %370 : vector<16x128xf32>
    %372 = vector.broadcast %369 : vector<16x1xf32> to vector<16x128xf32>
    %373 = arith.mulf %371, %372 : vector<16x128xf32>
    %374 = vector.broadcast %215 : vector<1x128xf32> to vector<16x128xf32>
    %375 = arith.mulf %373, %374 : vector<16x128xf32>
    %376 = vector.broadcast %216 : vector<1x128xf32> to vector<16x128xf32>
    %377 = arith.addf %375, %376 : vector<16x128xf32>
    %c0_150 = arith.constant 0 : index
    %c0_151 = arith.constant 0 : index
    %378 = vector.load %arg12[%c0_150, %c0_151] : memref<16x128xf32, #tpu.memory_space<vmem>>, vector<16x128xf32>
    tpu.vector_store %arg12[%c0_150, %c0_151], %377 {strides = array<i32>} : memref<16x128xf32, #tpu.memory_space<vmem>>, vector<16x128xf32>,
    return
  }
}

</mosaic_0001>

<llo_original>
// kernel: causal_prompt_encoder_forward.1
$region0: #{causal_prompt_encoder_forward.1}
  #allocation0 [shape = 'u32[]', space=smem, size = 0x4, offset = 0x4, fixed_abs, tag = 'smem constant byte address 0x4 - core index']
  #allocation1 [shape = 'u32[144,128]{1,0:T(1,128)}', space=vmem, size = 0x12000, scoped, tag = 'internal scratch']
  #allocation2 [shape = 'f32[16,128]{1,0:T(8,128)}', space=vmem, size = 0x2000, scoped, tag = 'scratch operand']
  %s0 = inlined_call_operand.vmem [shape: s32[16,1], index: 0, kind: input, shape index: {}]
  %s1 = inlined_call_operand.hbm [shape: f32[64,128], index: 1, kind: input, shape index: {}]
  %s2 = inlined_call_operand.vmem [shape: f32[8,128], index: 2, kind: input, shape index: {}]
  %s3 = inlined_call_operand.vmem [shape: f32[2,128], index: 3, kind: input, shape index: {}]
  %s4 = inlined_call_operand.vmem [shape: f32[2,128], index: 4, kind: input, shape index: {}]
  %s5 = inlined_call_operand.hbm [shape: f32[2,128,384], index: 5, kind: input, shape index: {}]
  %s6 = inlined_call_operand.vmem [shape: f32[2,1,384], index: 6, kind: input, shape index: {}]
  %s7 = inlined_call_operand.hbm [shape: f32[2,128,128], index: 7, kind: input, shape index: {}]
  %s8 = inlined_call_operand.hbm [shape: f32[2,128,256], index: 8, kind: input, shape index: {}]
  %s9 = inlined_call_operand.vmem [shape: f32[2,1,256], index: 9, kind: input, shape index: {}]
  %s10 = inlined_call_operand.hbm [shape: f32[2,256,128], index: 10, kind: input, shape index: {}]
  %s11 = inlined_call_operand.vmem [shape: f32[2,6,128], index: 11, kind: input, shape index: {}]
  %s12 = inlined_call_operand.vmem [shape: f32[16,128], index: 12, kind: output, shape index: {}]
  %s13 = sld [smem:[#allocation0]]
  $region78: #{causal_prompt_encoder_forward.1} parent=0
    _
  %s15 = ssub.s32 1, %s13
  %s16 = scalar_select 0, %s15, %s13
  $region1: #{causal_prompt_encoder_forward.1} parent=0
    #allocation3 [shape = 'u8[32768]{0}', space=vmem, size = 0x8000, scoped, tag = 'input window, operand 1, single buffered']
    #allocation4 [shape = 's32[1]{0}', space=sflag, size = 0x4, scoped, tag = 'scoped memory for causal_prompt_encoder_forward.1']
    #allocation5 [shape = 'u8[393216]{0}', space=vmem, size = 0x60000, scoped, tag = 'input window, operand 5, single buffered']
    #allocation6 [shape = 's32[1]{0}', space=sflag, size = 0x4, scoped, tag = 'scoped memory for causal_prompt_encoder_forward.1']
    #allocation7 [shape = 'u8[131072]{0}', space=vmem, size = 0x20000, scoped, tag = 'input window, operand 7, single buffered']
    #allocation8 [shape = 'u8[262144]{0}', space=vmem, size = 0x40000, scoped, tag = 'input window, operand 8, single buffered']
    #allocation9 [shape = 's32[1]{0}', space=sflag, size = 0x4, scoped, tag = 'scoped memory for causal_prompt_encoder_forward.1']
    #allocation10 [shape = 'u8[262144]{0}', space=vmem, size = 0x40000, scoped, tag = 'input window, operand 10, single buffered']
    %17 = vsyncpa [#allocation4], 0
    %18 = vsyncpa [#allocation6], 0
    %19 = vsyncpa [#allocation9], 0
    // Predicated region
    $region2: #{causal_prompt_encoder_forward.1} parent=1 // pred_check
      _
    $region3: #{causal_prompt_encoder_forward.1} parent=1 // pred_check_branch
      %21 = sbr.rel (0) target = $region5
    $region4: #{causal_prompt_encoder_forward.1} parent=1 // pred_region
      _
    $region5: #{causal_prompt_encoder_forward.1} parent=1 // pred_fallthru
      _
    // Predicated region
    $region6: #{causal_prompt_encoder_forward.1} parent=1 // pred_check
      _
    $region7: #{causal_prompt_encoder_forward.1} parent=1 // pred_check_branch
      %23 = sbr.rel (0) target = $region9
    $region8: #{causal_prompt_encoder_forward.1} parent=1 // pred_region
      %s25 = ssub.s32 1024, 1024
      %26 = vsyncadd [#allocation4], %s25
      %s27 = sshll.u32 [#allocation3], 4
      %s28 = int_to_ptr.vmem [resolvable:$true] %s27
      %33 = dma.hbm_to_vmem [thread:$0]  %s1, 1024, %s28, [#allocation4], 128, 128, 8
    $region9: #{causal_prompt_encoder_forward.1} parent=1 // pred_fallthru
      _
    // Predicated region
    $region10: #{causal_prompt_encoder_forward.1} parent=1 // pred_check
      _
    $region11: #{causal_prompt_encoder_forward.1} parent=1 // pred_check_branch
      %35 = sbr.rel (0) target = $region13
    $region12: #{causal_prompt_encoder_forward.1} parent=1 // pred_region
      _
    $region13: #{causal_prompt_encoder_forward.1} parent=1 // pred_fallthru
      _
    // Predicated region
    $region14: #{causal_prompt_encoder_forward.1} parent=1 // pred_check
      _
    $region15: #{causal_prompt_encoder_forward.1} parent=1 // pred_check_branch
      %37 = sbr.rel (0) target = $region17
    $region16: #{causal_prompt_encoder_forward.1} parent=1 // pred_region
      _
    $region17: #{causal_prompt_encoder_forward.1} parent=1 // pred_fallthru
      _
    // Predicated region
    $region18: #{causal_prompt_encoder_forward.1} parent=1 // pred_check
      _
    $region19: #{causal_prompt_encoder_forward.1} parent=1 // pred_check_branch
      %39 = sbr.rel (0) target = $region21
    $region20: #{causal_prompt_encoder_forward.1} parent=1 // pred_region
      _
    $region21: #{causal_prompt_encoder_forward.1} parent=1 // pred_fallthru
      _
    // Predicated region
    $region22: #{causal_prompt_encoder_forward.1} parent=1 // pred_check
      _
    $region23: #{causal_prompt_encoder_forward.1} parent=1 // pred_check_branch
      %41 = sbr.rel (0) target = $region25
    $region24: #{causal_prompt_encoder_forward.1} parent=1 // pred_region
      %s43 = ssub.s32 12288, 12288
      %44 = vsyncadd [#allocation6], %s43
      %s45 = sshll.u32 [#allocation5], 4
      %s46 = int_to_ptr.vmem [resolvable:$true] %s45
      %51 = dma.hbm_to_vmem [thread:$0]  %s5, 12288, %s46, [#allocation6], 384, 384, 24
    $region25: #{causal_prompt_encoder_forward.1} parent=1 // pred_fallthru
      _
    // Predicated region
    $region26: #{causal_prompt_encoder_forward.1} parent=1 // pred_check
      _
    $region27: #{causal_prompt_encoder_forward.1} parent=1 // pred_check_branch
      %53 = sbr.rel (0) target = $region29
    $region28: #{causal_prompt_encoder_forward.1} parent=1 // pred_region
      _
    $region29: #{causal_prompt_encoder_forward.1} parent=1 // pred_fallthru
      _
    // Predicated region
    $region30: #{causal_prompt_encoder_forward.1} parent=1 // pred_check
      _
    $region31: #{causal_prompt_encoder_forward.1} parent=1 // pred_check_branch
      %55 = sbr.rel (0) target = $region33
    $region32: #{causal_prompt_encoder_forward.1} parent=1 // pred_region
      %s57 = ssub.s32 4096, 4096
      %58 = vsyncadd [#allocation6], %s57
      %s59 = sshll.u32 [#allocation7], 4
      %s60 = int_to_ptr.vmem [resolvable:$true] %s59
      %65 = dma.hbm_to_vmem [thread:$0]  %s7, 4096, %s60, [#allocation6], 128, 128, 8
    $region33: #{causal_prompt_encoder_forward.1} parent=1 // pred_fallthru
      _
    // Predicated region
    $region34: #{causal_prompt_encoder_forward.1} parent=1 // pred_check
      _
    $region35: #{causal_prompt_encoder_forward.1} parent=1 // pred_check_branch
      %67 = sbr.rel (0) target = $region37
    $region36: #{causal_prompt_encoder_forward.1} parent=1 // pred_region
      %s69 = ssub.s32 8192, 8192
      %70 = vsyncadd [#allocation9], %s69
      %s71 = sshll.u32 [#allocation8], 4
      %s72 = int_to_ptr.vmem [resolvable:$true] %s71
      %77 = dma.hbm_to_vmem [thread:$0]  %s8, 8192, %s72, [#allocation9], 256, 256, 16
    $region37: #{causal_prompt_encoder_forward.1} parent=1 // pred_fallthru
      _
    // Predicated region
    $region38: #{causal_prompt_encoder_forward.1} parent=1 // pred_check
      _
    $region39: #{causal_prompt_encoder_forward.1} parent=1 // pred_check_branch
      %79 = sbr.rel (0) target = $region41
    $region40: #{causal_prompt_encoder_forward.1} parent=1 // pred_region
      _
    $region41: #{causal_prompt_encoder_forward.1} parent=1 // pred_fallthru
      _
    // Predicated region
    $region42: #{causal_prompt_encoder_forward.1} parent=1 // pred_check
      _
    $region43: #{causal_prompt_encoder_forward.1} parent=1 // pred_check_branch
      %81 = sbr.rel (0) target = $region45
    $region44: #{causal_prompt_encoder_forward.1} parent=1 // pred_region
      %s83 = ssub.s32 8192, 8192
      %84 = vsyncadd [#allocation9], %s83
      %s85 = sshll.u32 [#allocation10], 4
      %s86 = int_to_ptr.vmem [resolvable:$true] %s85
      %91 = dma.hbm_to_vmem [thread:$0]  %s10, 8192, %s86, [#allocation9], 128, 128, 8
    $region45: #{causal_prompt_encoder_forward.1} parent=1 // pred_fallthru
      _
    // Predicated region
    $region46: #{causal_prompt_encoder_forward.1} parent=1 // pred_check
      _
    $region47: #{causal_prompt_encoder_forward.1} parent=1 // pred_check_branch
      %93 = sbr.rel (0) target = $region49
    $region48: #{causal_prompt_encoder_forward.1} parent=1 // pred_region
      _
    $region49: #{causal_prompt_encoder_forward.1} parent=1 // pred_fallthru
      _
    // Predicated region
    $region50: #{causal_prompt_encoder_forward.1} parent=1 // pred_check
      _
    $region51: #{causal_prompt_encoder_forward.1} parent=1 // pred_check_branch
      %95 = sbr.rel (0) target = $region53
    $region52: #{causal_prompt_encoder_forward.1} parent=1 // pred_region
      %96 = dma.done [#allocation4], 1024
    $region53: #{causal_prompt_encoder_forward.1} parent=1 // pred_fallthru
      _
    // Predicated region
    $region54: #{causal_prompt_encoder_forward.1} parent=1 // pred_check
      _
    $region55: #{causal_prompt_encoder_forward.1} parent=1 // pred_check_branch
      %98 = sbr.rel (0) target = $region57
    $region56: #{causal_prompt_encoder_forward.1} parent=1 // pred_region
      %99 = dma.done [#allocation6], 12288
    $region57: #{causal_prompt_encoder_forward.1} parent=1 // pred_fallthru
      _
    // Predicated region
    $region58: #{causal_prompt_encoder_forward.1} parent=1 // pred_check
      _
    $region59: #{causal_prompt_encoder_forward.1} parent=1 // pred_check_branch
      %101 = sbr.rel (0) target = $region61
    $region60: #{causal_prompt_encoder_forward.1} parent=1 // pred_region
      %102 = dma.done [#allocation6], 4096
    $region61: #{causal_prompt_encoder_forward.1} parent=1 // pred_fallthru
      _
    // Predicated region
    $region62: #{causal_prompt_encoder_forward.1} parent=1 // pred_check
      _
    $region63: #{causal_prompt_encoder_forward.1} parent=1 // pred_check_branch
      %104 = sbr.rel (0) target = $region65
    $region64: #{causal_prompt_encoder_forward.1} parent=1 // pred_region
      %105 = dma.done [#allocation9], 8192
    $region65: #{causal_prompt_encoder_forward.1} parent=1 // pred_fallthru
      _
    // Predicated region
    $region66: #{causal_prompt_encoder_forward.1} parent=1 // pred_check
      _
    $region67: #{causal_prompt_encoder_forward.1} parent=1 // pred_check_branch
      %107 = sbr.rel (0) target = $region69
    $region68: #{causal_prompt_encoder_forward.1} parent=1 // pred_region
      %108 = dma.done [#allocation9], 8192
    $region69: #{causal_prompt_encoder_forward.1} parent=1 // pred_fallthru
      _
    %v109 = vld [vmem:[%s0] sm:$0xff]
    %v110 = vld [vmem:[%s0 + $0x8] sm:$0xff]
    %v111 = vlaneseq
    %v112 = vand.u32 %v111, 127
    %113 = vset.pattern.permute.xlu0 0
    %114 = vperm.xlu0 %113, %v109
    %v115 = vpop.permute.xlu0 %114
    %116 = vset.pattern.permute.xlu0 0
    %117 = vperm.xlu0 %116, %v110
    %v118 = vpop.permute.xlu0 %117
    %vm119 = vcmp.eq.s32.totalorder %v115, %v112
    %vm120 = vcmp.eq.s32.totalorder %v118, %v112
    %v121 = vsel %vm119, 1.0, 0.0
    %v122 = vsel %vm120, 1.0, 0.0
    %v123 = vld [vmem:[#allocation3] sm:$0xff]
    %v124 = vld [vmem:[#allocation3 + $0x8] sm:$0xff]
    %v125 = vld [vmem:[#allocation3 + $0x10] sm:$0xff]
    %v126 = vld [vmem:[#allocation3 + $0x18] sm:$0xff]
    %v127 = vld [vmem:[#allocation3 + $0x20] sm:$0xff]
    %v128 = vld [vmem:[#allocation3 + $0x28] sm:$0xff]
    %v129 = vld [vmem:[#allocation3 + $0x30] sm:$0xff]
    %v130 = vld [vmem:[#allocation3 + $0x38] sm:$0xff]
    %v131 = vld [vmem:[%s2] sm:$0xff]
    %vm132 = vcmask 523264
    %v134 = vsel %vm132, %v121, 0
    %v137 = vsel %vm132, %v122, 0
    %139 = vmatprep.subr.mxu0 0.0
    %140 = vmatpush1.msra.mxu0 %v123
    %141 = vmatprep.subr.mxu0 0.0
    %142 = vmatpush1.msra.mxu0 %v124
    %143 = vmatprep.subr.mxu0 0.0
    %144 = vmatpush1.msra.mxu0 %v125
    %145 = vmatprep.subr.mxu0 0.0
    %146 = vmatpush1.msra.mxu0 %v126
    %147 = vmatprep.subr.mxu0 0.0
    %148 = vmatpush1.msra.mxu0 %v127
    %149 = vmatprep.subr.mxu0 0.0
    %150 = vmatpush1.msra.mxu0 %v128
    %151 = vmatprep.subr.mxu0 0.0
    %152 = vmatpush1.msra.mxu0 %v129
    %153 = vmatprep.subr.mxu0 0.0
    %154 = vmatpush1.msra.mxu0 %v130
    %155 = vmatprep.subr.mxu0 0.0
    %156 = vmatpush1.msra.mxu0 0.0
    %157 = vmatprep.subr.mxu0 0.0
    %158 = vmatpush1.msra.mxu0 0.0
    %159 = vmatprep.subr.mxu0 0.0
    %160 = vmatpush1.msra.mxu0 0.0
    %161 = vmatprep.subr.mxu0 0.0
    %162 = vmatpush1.msra.mxu0 0.0
    %163 = vmatprep.subr.mxu0 0.0
    %164 = vmatpush1.msra.mxu0 0.0
    %165 = vmatprep.subr.mxu0 0.0
    %166 = vmatpush1.msra.mxu0 0.0
    %167 = vmatprep.subr.mxu0 0.0
    %168 = vmatpush1.msra.mxu0 0.0
    %169 = vmatprep.subr.mxu0 0.0
    %170 = vmatpush1.msra.mxu0 0.0
    %171 = vmatprep.subr.mxu0 0.0
    %172 = vmatpush1.msra.mxu0 0.0
    %173 = vmatprep.subr.mxu0 0.0
    %174 = vmatpush1.msra.mxu0 0.0
    %175 = vmatprep.subr.mxu0 0.0
    %176 = vmatpush1.msra.mxu0 0.0
    %177 = vmatprep.subr.mxu0 0.0
    %178 = vmatpush1.msra.mxu0 0.0
    %179 = vmatprep.subr.mxu0 0.0
    %180 = vmatpush1.msra.mxu0 0.0
    %181 = vmatprep.subr.mxu0 0.0
    %182 = vmatpush1.msra.mxu0 0.0
    %183 = vmatprep.subr.mxu0 0.0
    %184 = vmatpush1.msra.mxu0 0.0
    %185 = vmatprep.subr.mxu0 0.0
    %186 = vmatpush1.msra.mxu0 0.0
    %187 = vmatprep.subr.mxu0 0.0
    %188 = vmatpush1.msra.mxu0 0.0
    %189 = vmatprep.subr.mxu0 0.0
    %190 = vmatpush1.msra.mxu0 0.0
    %191 = vmatprep.subr.mxu0 0.0
    %192 = vmatpush1.msra.mxu0 0.0
    %193 = vmatprep.subr.mxu0 0.0
    %194 = vmatpush1.msra.mxu0 0.0
    %195 = vmatprep.subr.mxu0 0.0
    %196 = vmatpush1.msra.mxu0 0.0
    %197 = vmatprep.subr.mxu0 0.0
    %198 = vmatpush1.msra.mxu0 0.0
    %199 = vmatprep.subr.mxu0 0.0
    %200 = vmatpush1.msra.mxu0 0.0
    %201 = vmatprep.subr.mxu0 0.0
    %202 = vmatpush1.msra.mxu0 0.0
    %203 = vmatprep.mubr.f32.mxu0 0.0
    %204 = vmatmul.mubr.f32.gmra.mrb[0].mxu0 %v134
    %v205 = vpop.f32.mrb[0].mxu0
    %v206 = vadd.f32 %v131, %v205
    %v207 = vpop.f32.mrb[0].mxu0
    %208 = vmatprep.mubr.f32.mxu0 0.0
    %209 = vmatmul.mubr.f32.gmra.mrb[0].mxu0 %v137
    %v210 = vpop.f32.mrb[0].mxu0
    %v211 = vadd.f32 %v131, %v210
    %v212 = vpop.f32.mrb[0].mxu0
    %213 = vdwg.mxu0
    %v214 = vld [vmem:[%s3] sm:$0x1]
    %v215 = vlaneseq
    %v216 = vshrl.u32 %v215, 7
    %v217 = vsub.s32 0, %v216
    %v218 = vrot.slane %v214, %v217
    %v219 = vadd.f32 %v206, %v218
    %v220 = vadd.f32 %v211, %v218
    %v221 = vld [vmem:[%s4] sm:$0x3]
    %222 = vadd.xlane.f32.xlu0 %v219
    %v223 = vpop.xlane.xlu0 %222
    %224 = vadd.xlane.f32.xlu0 %v220
    %v225 = vpop.xlane.xlu0 %224
    %v226 = vrcp.pop 128.0
    %v227 = vmul.f32 %v223, %v226
    %v228 = vmul.f32 %v225, %v226
    %v229 = vsub.f32 %v219, %v227
    %v230 = vsub.f32 %v220, %v228
    %v231 = vmul.f32 %v229, %v229
    %v232 = vmul.f32 %v230, %v230
    %233 = vadd.xlane.f32.xlu0 %v231
    %v234 = vpop.xlane.xlu0 %233
    %235 = vadd.xlane.f32.xlu0 %v232
    %v236 = vpop.xlane.xlu0 %235
    %v237 = vmul.f32 %v234, %v226
    %v238 = vmul.f32 %v236, %v226
    %v239 = vadd.f32 %v237, 1e-12
    %v240 = vadd.f32 %v238, 1e-12
    %v241 = vrsqrt.pop %v239
    %v242 = vrsqrt.pop %v240
    %v243 = vmul.f32 %v229, %v241
    %v244 = vmul.f32 %v230, %v242
    %v245 = vlaneseq
    %v246 = vshrl.u32 %v245, 7
    %v247 = vsub.s32 0, %v246
    %v248 = vrot.slane %v221, %v247
    %v249 = vmul.f32 %v243, %v248
    %v250 = vmul.f32 %v244, %v248
    %v251 = vlaneseq
    %v252 = vshrl.u32 %v251, 7
    %v253 = vsub.s32 1, %v252
    %v254 = vrot.slane %v221, %v253
    %v255 = vadd.f32 %v249, %v254
    %v256 = vadd.f32 %v250, %v254
    %v257 = vld [vmem:[%s11] sm:$0x3f]
    %v258 = vld [vmem:[#allocation5] sm:$0xff]
    %v259 = vld [vmem:[#allocation5 + $0x8] sm:$0xff]
    %v260 = vld [vmem:[#allocation5 + $0x10] sm:$0xff]
    %v261 = vld [vmem:[#allocation5 + $0x18] sm:$0xff]
    %v262 = vld [vmem:[#allocation5 + $0x20] sm:$0xff]
    %v263 = vld [vmem:[#allocation5 + $0x28] sm:$0xff]
    %v264 = vld [vmem:[#allocation5 + $0x30] sm:$0xff]
    %v265 = vld [vmem:[#allocation5 + $0x38] sm:$0xff]
    %v266 = vld [vmem:[#allocation5 + $0x40] sm:$0xff]
    %v267 = vld [vmem:[#allocation5 + $0x48] sm:$0xff]
    %v268 = vld [vmem:[#allocation5 + $0x50] sm:$0xff]
    %v269 = vld [vmem:[#allocation5 + $0x58] sm:$0xff]
    %v270 = vld [vmem:[#allocation5 + $0x60] sm:$0xff]
    %v271 = vld [vmem:[#allocation5 + $0x68] sm:$0xff]
    %v272 = vld [vmem:[#allocation5 + $0x70] sm:$0xff]
    %v273 = vld [vmem:[#allocation5 + $0x78] sm:$0xff]
    %v274 = vld [vmem:[#allocation5 + $0x80] sm:$0xff]
    %v275 = vld [vmem:[#allocation5 + $0x88] sm:$0xff]
    %v276 = vld [vmem:[#allocation5 + $0x90] sm:$0xff]
    %v277 = vld [vmem:[#allocation5 + $0x98] sm:$0xff]
    %v278 = vld [vmem:[#allocation5 + $0xa0] sm:$0xff]
    %v279 = vld [vmem:[#allocation5 + $0xa8] sm:$0xff]
    %v280 = vld [vmem:[#allocation5 + $0xb0] sm:$0xff]
    %v281 = vld [vmem:[#allocation5 + $0xb8] sm:$0xff]
    %v282 = vld [vmem:[#allocation5 + $0xc0] sm:$0xff]
    %v283 = vld [vmem:[#allocation5 + $0xc8] sm:$0xff]
    %v284 = vld [vmem:[#allocation5 + $0xd0] sm:$0xff]
    %v285 = vld [vmem:[#allocation5 + $0xd8] sm:$0xff]
    %v286 = vld [vmem:[#allocation5 + $0xe0] sm:$0xff]
    %v287 = vld [vmem:[#allocation5 + $0xe8] sm:$0xff]
    %v288 = vld [vmem:[#allocation5 + $0xf0] sm:$0xff]
    %v289 = vld [vmem:[#allocation5 + $0xf8] sm:$0xff]
    %v290 = vld [vmem:[#allocation5 + $0x100] sm:$0xff]
    %v291 = vld [vmem:[#allocation5 + $0x108] sm:$0xff]
    %v292 = vld [vmem:[#allocation5 + $0x110] sm:$0xff]
    %v293 = vld [vmem:[#allocation5 + $0x118] sm:$0xff]
    %v294 = vld [vmem:[#allocation5 + $0x120] sm:$0xff]
    %v295 = vld [vmem:[#allocation5 + $0x128] sm:$0xff]
    %v296 = vld [vmem:[#allocation5 + $0x130] sm:$0xff]
    %v297 = vld [vmem:[#allocation5 + $0x138] sm:$0xff]
    %v298 = vld [vmem:[#allocation5 + $0x140] sm:$0xff]
    %v299 = vld [vmem:[#allocation5 + $0x148] sm:$0xff]
    %v300 = vld [vmem:[#allocation5 + $0x150] sm:$0xff]
    %v301 = vld [vmem:[#allocation5 + $0x158] sm:$0xff]
    %v302 = vld [vmem:[#allocation5 + $0x160] sm:$0xff]
    %v303 = vld [vmem:[#allocation5 + $0x168] sm:$0xff]
    %v304 = vld [vmem:[#allocation5 + $0x170] sm:$0xff]
    %v305 = vld [vmem:[#allocation5 + $0x178] sm:$0xff]
    %v306 = vld [vmem:[%s6] sm:$0x7]
    %v308 = vlaneseq
    %v309 = vshrl.u32 %v308, 7
    %v310 = vsub.s32 0, %v309
    %v311 = vrot.slane %v306, %v310
    %v312 = vlaneseq
    %v313 = vshrl.u32 %v312, 7
    %v314 = vsub.s32 1, %v313
    %v315 = vrot.slane %v306, %v314
    %v316 = vlaneseq
    %v317 = vshrl.u32 %v316, 7
    %v318 = vsub.s32 2, %v317
    %v319 = vrot.slane %v306, %v318
    %323 = vmatprep.subr.mxu0 %v259
    %324 = vmatpush1.msra.mxu0 %v258
    %325 = vmatprep.subr.mxu0 %v262
    %326 = vmatpush1.msra.mxu0 %v261
    %327 = vmatprep.subr.mxu0 %v265
    %328 = vmatpush1.msra.mxu0 %v264
    %329 = vmatprep.subr.mxu0 %v268
    %330 = vmatpush1.msra.mxu0 %v267
    %331 = vmatprep.subr.mxu0 %v271
    %332 = vmatpush1.msra.mxu0 %v270
    %333 = vmatprep.subr.mxu0 %v274
    %334 = vmatpush1.msra.mxu0 %v273
    %335 = vmatprep.subr.mxu0 %v277
    %336 = vmatpush1.msra.mxu0 %v276
    %337 = vmatprep.subr.mxu0 %v280
    %338 = vmatpush1.msra.mxu0 %v279
    %339 = vmatprep.subr.mxu0 %v283
    %340 = vmatpush1.msra.mxu0 %v282
    %341 = vmatprep.subr.mxu0 %v286
    %342 = vmatpush1.msra.mxu0 %v285
    %343 = vmatprep.subr.mxu0 %v289
    %344 = vmatpush1.msra.mxu0 %v288
    %345 = vmatprep.subr.mxu0 %v292
    %346 = vmatpush1.msra.mxu0 %v291
    %347 = vmatprep.subr.mxu0 %v295
    %348 = vmatpush1.msra.mxu0 %v294
    %349 = vmatprep.subr.mxu0 %v298
    %350 = vmatpush1.msra.mxu0 %v297
    %351 = vmatprep.subr.mxu0 %v301
    %352 = vmatpush1.msra.mxu0 %v300
    %353 = vmatprep.subr.mxu0 %v304
    %354 = vmatpush1.msra.mxu0 %v303
    %355 = vmatprep.subr.mxu0 0.0
    %356 = vmatpush1.msra.mxu0 0.0
    %357 = vmatprep.subr.mxu0 0.0
    %358 = vmatpush1.msra.mxu0 0.0
    %359 = vmatprep.subr.mxu0 0.0
    %360 = vmatpush1.msra.mxu0 0.0
    %361 = vmatprep.subr.mxu0 0.0
    %362 = vmatpush1.msra.mxu0 0.0
    %363 = vmatprep.subr.mxu0 0.0
    %364 = vmatpush1.msra.mxu0 0.0
    %365 = vmatprep.subr.mxu0 0.0
    %366 = vmatpush1.msra.mxu0 0.0
    %367 = vmatprep.subr.mxu0 0.0
    %368 = vmatpush1.msra.mxu0 0.0
    %369 = vmatprep.subr.mxu0 0.0
    %370 = vmatpush1.msra.mxu0 0.0
    %371 = vmatprep.subr.mxu0 0.0
    %372 = vmatpush1.msra.mxu0 0.0
    %373 = vmatprep.subr.mxu0 0.0
    %374 = vmatpush1.msra.mxu0 0.0
    %375 = vmatprep.subr.mxu0 0.0
    %376 = vmatpush1.msra.mxu0 0.0
    %377 = vmatprep.subr.mxu0 0.0
    %378 = vmatpush1.msra.mxu0 0.0
    %379 = vmatprep.subr.mxu0 0.0
    %380 = vmatpush1.msra.mxu0 0.0
    %381 = vmatprep.subr.mxu0 0.0
    %382 = vmatpush1.msra.mxu0 0.0
    %383 = vmatprep.subr.mxu0 0.0
    %384 = vmatpush1.msra.mxu0 0.0
    %385 = vmatprep.subr.mxu0 0.0
    %386 = vmatpush1.msra.mxu0 0.0
    %387 = vmatprep.mubr.f32.mxu0 0.0
    %388 = vmatmul.mubr.f32.gmra.mrb[0].mxu0 %v255
    %v389 = vpop.f32.mrb[0].mxu0
    %v390 = vadd.f32 %v311, %v389
    %v391 = vpop.f32.mrb[0].mxu0
    %v392 = vadd.f32 %v315, %v391
    %393 = vmatprep.mubr.f32.mxu0 0.0
    %394 = vmatmul.mubr.f32.gmra.mrb[0].mxu0 %v256
    %v395 = vpop.f32.mrb[0].mxu0
    %v396 = vadd.f32 %v311, %v395
    %v397 = vpop.f32.mrb[0].mxu0
    %v398 = vadd.f32 %v315, %v397
    %399 = vdwg.mxu0
    %400 = vmatprep.subr.mxu0 0.0
    %401 = vmatpush1.msra.mxu0 %v260
    %402 = vmatprep.subr.mxu0 0.0
    %403 = vmatpush1.msra.mxu0 %v263
    %404 = vmatprep.subr.mxu0 0.0
    %405 = vmatpush1.msra.mxu0 %v266
    %406 = vmatprep.subr.mxu0 0.0
    %407 = vmatpush1.msra.mxu0 %v269
    %408 = vmatprep.subr.mxu0 0.0
    %409 = vmatpush1.msra.mxu0 %v272
    %410 = vmatprep.subr.mxu0 0.0
    %411 = vmatpush1.msra.mxu0 %v275
    %412 = vmatprep.subr.mxu0 0.0
    %413 = vmatpush1.msra.mxu0 %v278
    %414 = vmatprep.subr.mxu0 0.0
    %415 = vmatpush1.msra.mxu0 %v281
    %416 = vmatprep.subr.mxu0 0.0
    %417 = vmatpush1.msra.mxu0 %v284
    %418 = vmatprep.subr.mxu0 0.0
    %419 = vmatpush1.msra.mxu0 %v287
    %420 = vmatprep.subr.mxu0 0.0
    %421 = vmatpush1.msra.mxu0 %v290
    %422 = vmatprep.subr.mxu0 0.0
    %423 = vmatpush1.msra.mxu0 %v293
    %424 = vmatprep.subr.mxu0 0.0
    %425 = vmatpush1.msra.mxu0 %v296
    %426 = vmatprep.subr.mxu0 0.0
    %427 = vmatpush1.msra.mxu0 %v299
    %428 = vmatprep.subr.mxu0 0.0
    %429 = vmatpush1.msra.mxu0 %v302
    %430 = vmatprep.subr.mxu0 0.0
    %431 = vmatpush1.msra.mxu0 %v305
    %432 = vmatprep.subr.mxu0 0.0
    %433 = vmatpush1.msra.mxu0 0.0
    %434 = vmatprep.subr.mxu0 0.0
    %435 = vmatpush1.msra.mxu0 0.0
    %436 = vmatprep.subr.mxu0 0.0
    %437 = vmatpush1.msra.mxu0 0.0
    %438 = vmatprep.subr.mxu0 0.0
    %439 = vmatpush1.msra.mxu0 0.0
    %440 = vmatprep.subr.mxu0 0.0
    %441 = vmatpush1.msra.mxu0 0.0
    %442 = vmatprep.subr.mxu0 0.0
    %443 = vmatpush1.msra.mxu0 0.0
    %444 = vmatprep.subr.mxu0 0.0
    %445 = vmatpush1.msra.mxu0 0.0
    %446 = vmatprep.subr.mxu0 0.0
    %447 = vmatpush1.msra.mxu0 0.0
    %448 = vmatprep.subr.mxu0 0.0
    %449 = vmatpush1.msra.mxu0 0.0
    %450 = vmatprep.subr.mxu0 0.0
    %451 = vmatpush1.msra.mxu0 0.0
    %452 = vmatprep.subr.mxu0 0.0
    %453 = vmatpush1.msra.mxu0 0.0
    %454 = vmatprep.subr.mxu0 0.0
    %455 = vmatpush1.msra.mxu0 0.0
    %456 = vmatprep.subr.mxu0 0.0
    %457 = vmatpush1.msra.mxu0 0.0
    %458 = vmatprep.subr.mxu0 0.0
    %459 = vmatpush1.msra.mxu0 0.0
    %460 = vmatprep.subr.mxu0 0.0
    %461 = vmatpush1.msra.mxu0 0.0
    %462 = vmatprep.subr.mxu0 0.0
    %463 = vmatpush1.msra.mxu0 0.0
    %464 = vmatprep.mubr.f32.mxu0 0.0
    %465 = vmatmul.mubr.f32.gmra.mrb[0].mxu0 %v255
    %v466 = vpop.f32.mrb[0].mxu0
    %v467 = vadd.f32 %v319, %v466
    %v468 = vpop.f32.mrb[0].mxu0
    %469 = vmatprep.mubr.f32.mxu0 0.0
    %470 = vmatmul.mubr.f32.gmra.mrb[0].mxu0 %v256
    %v471 = vpop.f32.mrb[0].mxu0
    %v472 = vadd.f32 %v319, %v471
    %v473 = vpop.f32.mrb[0].mxu0
    %474 = vdwg.mxu0
    %vm475 = vcmask 261120
    %v477 = vsel %vm475, %v390, 0
    %v480 = vsel %vm475, %v392, 0
    %482 = vmatprep.subr.mxu0 0.0
    %483 = vmatpush1.xpose.msra.mxu0 %v480
    %484 = vmatprep.subr.mxu0 0.0
    %485 = vmatpush1.xpose.msra.mxu0 0.0
    %486 = vmatprep.subr.mxu0 0.0
    %487 = vmatpush1.xpose.msra.mxu0 0.0
    %488 = vmatprep.subr.mxu0 0.0
    %489 = vmatpush1.xpose.msra.mxu0 0.0
    %490 = vmatprep.subr.mxu0 0.0
    %491 = vmatpush1.xpose.msra.mxu0 0.0
    %492 = vmatprep.subr.mxu0 0.0
    %493 = vmatpush1.xpose.msra.mxu0 0.0
    %494 = vmatprep.subr.mxu0 0.0
    %495 = vmatpush1.xpose.msra.mxu0 0.0
    %496 = vmatprep.subr.mxu0 0.0
    %497 = vmatpush1.xpose.msra.mxu0 0.0
    %498 = vmatprep.subr.mxu0 0.0
    %499 = vmatpush1.xpose.msra.mxu0 0.0
    %500 = vmatprep.subr.mxu0 0.0
    %501 = vmatpush1.xpose.msra.mxu0 0.0
    %502 = vmatprep.subr.mxu0 0.0
    %503 = vmatpush1.xpose.msra.mxu0 0.0
    %504 = vmatprep.subr.mxu0 0.0
    %505 = vmatpush1.xpose.msra.mxu0 0.0
    %506 = vmatprep.subr.mxu0 0.0
    %507 = vmatpush1.xpose.msra.mxu0 0.0
    %508 = vmatprep.subr.mxu0 0.0
    %509 = vmatpush1.xpose.msra.mxu0 0.0
    %510 = vmatprep.subr.mxu0 0.0
    %511 = vmatpush1.xpose.msra.mxu0 0.0
    %512 = vmatprep.subr.mxu0 0.0
    %513 = vmatpush1.xpose.msra.mxu0 0.0
    %514 = vmatprep.subr.mxu0 0.0
    %515 = vmatpush1.xpose.msra.mxu0 0.0
    %516 = vmatprep.subr.mxu0 0.0
    %517 = vmatpush1.xpose.msra.mxu0 0.0
    %518 = vmatprep.subr.mxu0 0.0
    %519 = vmatpush1.xpose.msra.mxu0 0.0
    %520 = vmatprep.subr.mxu0 0.0
    %521 = vmatpush1.xpose.msra.mxu0 0.0
    %522 = vmatprep.subr.mxu0 0.0
    %523 = vmatpush1.xpose.msra.mxu0 0.0
    %524 = vmatprep.subr.mxu0 0.0
    %525 = vmatpush1.xpose.msra.mxu0 0.0
    %526 = vmatprep.subr.mxu0 0.0
    %527 = vmatpush1.xpose.msra.mxu0 0.0
    %528 = vmatprep.subr.mxu0 0.0
    %529 = vmatpush1.xpose.msra.mxu0 0.0
    %530 = vmatprep.subr.mxu0 0.0
    %531 = vmatpush1.xpose.msra.mxu0 0.0
    %532 = vmatprep.subr.mxu0 0.0
    %533 = vmatpush1.xpose.msra.mxu0 0.0
    %534 = vmatprep.subr.mxu0 0.0
    %535 = vmatpush1.xpose.msra.mxu0 0.0
    %536 = vmatprep.subr.mxu0 0.0
    %537 = vmatpush1.xpose.msra.mxu0 0.0
    %538 = vmatprep.subr.mxu0 0.0
    %539 = vmatpush1.xpose.msra.mxu0 0.0
    %540 = vmatprep.subr.mxu0 0.0
    %541 = vmatpush1.xpose.msra.mxu0 0.0
    %542 = vmatprep.subr.mxu0 0.0
    %543 = vmatpush1.xpose.msra.mxu0 0.0
    %544 = vmatprep.subr.mxu0 0.0
    %545 = vmatpush1.xpose.msra.mxu0 0.0
    %546 = vmatprep.mubr.f32.mxu0 0.0
    %547 = vmatmul.mubr.f32.gmra.mrb[0].mxu0 %v477
    %v548 = vpop.f32.mrb[0].mxu0
    %v549 = vadd.f32 0.0, %v548
    %v550 = vpop.f32.mrb[0].mxu0
    %551 = vdwg.mxu0
    %v553 = vsel %vm475, %v396, 0
    %v556 = vsel %vm475, %v398, 0
    %558 = vmatprep.subr.mxu0 0.0
    %559 = vmatpush1.xpose.msra.mxu0 %v556
    %560 = vmatprep.subr.mxu0 0.0
    %561 = vmatpush1.xpose.msra.mxu0 0.0
    %562 = vmatprep.subr.mxu0 0.0
    %563 = vmatpush1.xpose.msra.mxu0 0.0
    %564 = vmatprep.subr.mxu0 0.0
    %565 = vmatpush1.xpose.msra.mxu0 0.0
    %566 = vmatprep.subr.mxu0 0.0
    %567 = vmatpush1.xpose.msra.mxu0 0.0
    %568 = vmatprep.subr.mxu0 0.0
    %569 = vmatpush1.xpose.msra.mxu0 0.0
    %570 = vmatprep.subr.mxu0 0.0
    %571 = vmatpush1.xpose.msra.mxu0 0.0
    %572 = vmatprep.subr.mxu0 0.0
    %573 = vmatpush1.xpose.msra.mxu0 0.0
    %574 = vmatprep.subr.mxu0 0.0
    %575 = vmatpush1.xpose.msra.mxu0 0.0
    %576 = vmatprep.subr.mxu0 0.0
    %577 = vmatpush1.xpose.msra.mxu0 0.0
    %578 = vmatprep.subr.mxu0 0.0
    %579 = vmatpush1.xpose.msra.mxu0 0.0
    %580 = vmatprep.subr.mxu0 0.0
    %581 = vmatpush1.xpose.msra.mxu0 0.0
    %582 = vmatprep.subr.mxu0 0.0
    %583 = vmatpush1.xpose.msra.mxu0 0.0
    %584 = vmatprep.subr.mxu0 0.0
    %585 = vmatpush1.xpose.msra.mxu0 0.0
    %586 = vmatprep.subr.mxu0 0.0
    %587 = vmatpush1.xpose.msra.mxu0 0.0
    %588 = vmatprep.subr.mxu0 0.0
    %589 = vmatpush1.xpose.msra.mxu0 0.0
    %590 = vmatprep.subr.mxu0 0.0
    %591 = vmatpush1.xpose.msra.mxu0 0.0
    %592 = vmatprep.subr.mxu0 0.0
    %593 = vmatpush1.xpose.msra.mxu0 0.0
    %594 = vmatprep.subr.mxu0 0.0
    %595 = vmatpush1.xpose.msra.mxu0 0.0
    %596 = vmatprep.subr.mxu0 0.0
    %597 = vmatpush1.xpose.msra.mxu0 0.0
    %598 = vmatprep.subr.mxu0 0.0
    %599 = vmatpush1.xpose.msra.mxu0 0.0
    %600 = vmatprep.subr.mxu0 0.0
    %601 = vmatpush1.xpose.msra.mxu0 0.0
    %602 = vmatprep.subr.mxu0 0.0
    %603 = vmatpush1.xpose.msra.mxu0 0.0
    %604 = vmatprep.subr.mxu0 0.0
    %605 = vmatpush1.xpose.msra.mxu0 0.0
    %606 = vmatprep.subr.mxu0 0.0
    %607 = vmatpush1.xpose.msra.mxu0 0.0
    %608 = vmatprep.subr.mxu0 0.0
    %609 = vmatpush1.xpose.msra.mxu0 0.0
    %610 = vmatprep.subr.mxu0 0.0
    %611 = vmatpush1.xpose.msra.mxu0 0.0
    %612 = vmatprep.subr.mxu0 0.0
    %613 = vmatpush1.xpose.msra.mxu0 0.0
    %614 = vmatprep.subr.mxu0 0.0
    %615 = vmatpush1.xpose.msra.mxu0 0.0
    %616 = vmatprep.subr.mxu0 0.0
    %617 = vmatpush1.xpose.msra.mxu0 0.0
    %618 = vmatprep.subr.mxu0 0.0
    %619 = vmatpush1.xpose.msra.mxu0 0.0
    %620 = vmatprep.subr.mxu0 0.0
    %621 = vmatpush1.xpose.msra.mxu0 0.0
    %622 = vmatprep.mubr.f32.mxu0 0.0
    %623 = vmatmul.mubr.f32.gmra.mrb[0].mxu0 %v553
    %v624 = vpop.f32.mrb[0].mxu0
    %v625 = vadd.f32 0.0, %v624
    %v626 = vpop.f32.mrb[0].mxu0
    %627 = vdwg.mxu0
    %v628 = vmul.f32 %v549, 0.17677669
    %v629 = vmul.f32 %v625, 0.17677669
    %vm630 = vcmask 64512
    %v631 = vsel %vm630, %v628, -inf
    %632 = vmax.xlane.f32.xlu0 %v631
    %v633 = vpop.xlane.xlu0 %632
    %v634 = vsel %vm630, %v629, -inf
    %635 = vmax.xlane.f32.xlu0 %v634
    %v636 = vpop.xlane.xlu0 %635
    %v637 = vsub.f32 %v628, %v633
    %v638 = vsub.f32 %v629, %v636
    %v639 = vmul.f32 %v637, 1.442695
    %v640 = vpow.pop %v639
    %v641 = vmul.f32 %v638, 1.442695
    %v642 = vpow.pop %v641
    %v643 = vsel %vm630, %v640, 0.0
    %644 = vadd.xlane.f32.xlu0 %v643
    %v645 = vpop.xlane.xlu0 %644
    %v646 = vsel %vm630, %v642, 0.0
    %647 = vadd.xlane.f32.xlu0 %v646
    %v648 = vpop.xlane.xlu0 %647
    %v649 = vrcp.pop %v645
    %v650 = vrcp.pop %v648
    %v651 = vmul.f32 %v640, %v649
    %v652 = vmul.f32 %v642, %v650
    %v654 = vsel %vm630, %v651, 0
    %656 = vmatprep.subr.mxu0 0.0
    %657 = vmatpush1.msra.mxu0 %v467
    %658 = vmatprep.subr.mxu0 0.0
    %659 = vmatpush1.msra.mxu0 0.0
    %660 = vmatprep.subr.mxu0 0.0
    %661 = vmatpush1.msra.mxu0 0.0
    %662 = vmatprep.subr.mxu0 0.0
    %663 = vmatpush1.msra.mxu0 0.0
    %664 = vmatprep.subr.mxu0 0.0
    %665 = vmatpush1.msra.mxu0 0.0
    %666 = vmatprep.subr.mxu0 0.0
    %667 = vmatpush1.msra.mxu0 0.0
    %668 = vmatprep.subr.mxu0 0.0
    %669 = vmatpush1.msra.mxu0 0.0
    %670 = vmatprep.subr.mxu0 0.0
    %671 = vmatpush1.msra.mxu0 0.0
    %672 = vmatprep.subr.mxu0 0.0
    %673 = vmatpush1.msra.mxu0 0.0
    %674 = vmatprep.subr.mxu0 0.0
    %675 = vmatpush1.msra.mxu0 0.0
    %676 = vmatprep.subr.mxu0 0.0
    %677 = vmatpush1.msra.mxu0 0.0
    %678 = vmatprep.subr.mxu0 0.0
    %679 = vmatpush1.msra.mxu0 0.0
    %680 = vmatprep.subr.mxu0 0.0
    %681 = vmatpush1.msra.mxu0 0.0
    %682 = vmatprep.subr.mxu0 0.0
    %683 = vmatpush1.msra.mxu0 0.0
    %684 = vmatprep.subr.mxu0 0.0
    %685 = vmatpush1.msra.mxu0 0.0
    %686 = vmatprep.subr.mxu0 0.0
    %687 = vmatpush1.msra.mxu0 0.0
    %688 = vmatprep.subr.mxu0 0.0
    %689 = vmatpush1.msra.mxu0 0.0
    %690 = vmatprep.subr.mxu0 0.0
    %691 = vmatpush1.msra.mxu0 0.0
    %692 = vmatprep.subr.mxu0 0.0
    %693 = vmatpush1.msra.mxu0 0.0
    %694 = vmatprep.subr.mxu0 0.0
    %695 = vmatpush1.msra.mxu0 0.0
    %696 = vmatprep.subr.mxu0 0.0
    %697 = vmatpush1.msra.mxu0 0.0
    %698 = vmatprep.subr.mxu0 0.0
    %699 = vmatpush1.msra.mxu0 0.0
    %700 = vmatprep.subr.mxu0 0.0
    %701 = vmatpush1.msra.mxu0 0.0
    %702 = vmatprep.subr.mxu0 0.0
    %703 = vmatpush1.msra.mxu0 0.0
    %704 = vmatprep.subr.mxu0 0.0
    %705 = vmatpush1.msra.mxu0 0.0
    %706 = vmatprep.subr.mxu0 0.0
    %707 = vmatpush1.msra.mxu0 0.0
    %708 = vmatprep.subr.mxu0 0.0
    %709 = vmatpush1.msra.mxu0 0.0
    %710 = vmatprep.subr.mxu0 0.0
    %711 = vmatpush1.msra.mxu0 0.0
    %712 = vmatprep.subr.mxu0 0.0
    %713 = vmatpush1.msra.mxu0 0.0
    %714 = vmatprep.subr.mxu0 0.0
    %715 = vmatpush1.msra.mxu0 0.0
    %716 = vmatprep.subr.mxu0 0.0
    %717 = vmatpush1.msra.mxu0 0.0
    %718 = vmatprep.subr.mxu0 0.0
    %719 = vmatpush1.msra.mxu0 0.0
    %720 = vmatprep.mubr.f32.mxu0 0.0
    %721 = vmatmul.mubr.f32.gmra.mrb[0].mxu0 %v654
    %v722 = vpop.f32.mrb[0].mxu0
    %v723 = vadd.f32 0.0, %v722
    %v724 = vpop.f32.mrb[0].mxu0
    %725 = vdwg.mxu0
    %v727 = vsel %vm630, %v652, 0
    %729 = vmatprep.subr.mxu0 0.0
    %730 = vmatpush1.msra.mxu0 %v472
    %731 = vmatprep.subr.mxu0 0.0
    %732 = vmatpush1.msra.mxu0 0.0
    %733 = vmatprep.subr.mxu0 0.0
    %734 = vmatpush1.msra.mxu0 0.0
    %735 = vmatprep.subr.mxu0 0.0
    %736 = vmatpush1.msra.mxu0 0.0
    %737 = vmatprep.subr.mxu0 0.0
    %738 = vmatpush1.msra.mxu0 0.0
    %739 = vmatprep.subr.mxu0 0.0
    %740 = vmatpush1.msra.mxu0 0.0
    %741 = vmatprep.subr.mxu0 0.0
    %742 = vmatpush1.msra.mxu0 0.0
    %743 = vmatprep.subr.mxu0 0.0
    %744 = vmatpush1.msra.mxu0 0.0
    %745 = vmatprep.subr.mxu0 0.0
    %746 = vmatpush1.msra.mxu0 0.0
    %747 = vmatprep.subr.mxu0 0.0
    %748 = vmatpush1.msra.mxu0 0.0
    %749 = vmatprep.subr.mxu0 0.0
    %750 = vmatpush1.msra.mxu0 0.0
    %751 = vmatprep.subr.mxu0 0.0
    %752 = vmatpush1.msra.mxu0 0.0
    %753 = vmatprep.subr.mxu0 0.0
    %754 = vmatpush1.msra.mxu0 0.0
    %755 = vmatprep.subr.mxu0 0.0
    %756 = vmatpush1.msra.mxu0 0.0
    %757 = vmatprep.subr.mxu0 0.0
    %758 = vmatpush1.msra.mxu0 0.0
    %759 = vmatprep.subr.mxu0 0.0
    %760 = vmatpush1.msra.mxu0 0.0
    %761 = vmatprep.subr.mxu0 0.0
    %762 = vmatpush1.msra.mxu0 0.0
    %763 = vmatprep.subr.mxu0 0.0
    %764 = vmatpush1.msra.mxu0 0.0
    %765 = vmatprep.subr.mxu0 0.0
    %766 = vmatpush1.msra.mxu0 0.0
    %767 = vmatprep.subr.mxu0 0.0
    %768 = vmatpush1.msra.mxu0 0.0
    %769 = vmatprep.subr.mxu0 0.0
    %770 = vmatpush1.msra.mxu0 0.0
    %771 = vmatprep.subr.mxu0 0.0
    %772 = vmatpush1.msra.mxu0 0.0
    %773 = vmatprep.subr.mxu0 0.0
    %774 = vmatpush1.msra.mxu0 0.0
    %775 = vmatprep.subr.mxu0 0.0
    %776 = vmatpush1.msra.mxu0 0.0
    %777 = vmatprep.subr.mxu0 0.0
    %778 = vmatpush1.msra.mxu0 0.0
    %779 = vmatprep.subr.mxu0 0.0
    %780 = vmatpush1.msra.mxu0 0.0
    %781 = vmatprep.subr.mxu0 0.0
    %782 = vmatpush1.msra.mxu0 0.0
    %783 = vmatprep.subr.mxu0 0.0
    %784 = vmatpush1.msra.mxu0 0.0
    %785 = vmatprep.subr.mxu0 0.0
    %786 = vmatpush1.msra.mxu0 0.0
    %787 = vmatprep.subr.mxu0 0.0
    %788 = vmatpush1.msra.mxu0 0.0
    %789 = vmatprep.subr.mxu0 0.0
    %790 = vmatpush1.msra.mxu0 0.0
    %791 = vmatprep.subr.mxu0 0.0
    %792 = vmatpush1.msra.mxu0 0.0
    %793 = vmatprep.mubr.f32.mxu0 0.0
    %794 = vmatmul.mubr.f32.gmra.mrb[0].mxu0 %v727
    %v795 = vpop.f32.mrb[0].mxu0
    %v796 = vadd.f32 0.0, %v795
    %v797 = vpop.f32.mrb[0].mxu0
    %798 = vdwg.mxu0
    %799 = vst.msk [vmem:[#allocation2] sm:$0xff] %vm475, %v723
    %800 = vst.msk [vmem:[#allocation2 + $0x8] sm:$0xff] %vm475, %v796
    %801 = vrot.lane.b32.xlu0 %v390, 96
    %v802 = vpop.permute.xlu0 %801
    %803 = vrot.lane.b32.xlu0 %v392, 96
    %v804 = vpop.permute.xlu0 %803
    %v805 = vsel %vm475, %v802, 0
    %v807 = vsel %vm475, %v804, 0
    %809 = vmatprep.subr.mxu0 0.0
    %810 = vmatpush1.xpose.msra.mxu0 %v807
    %811 = vmatprep.subr.mxu0 0.0
    %812 = vmatpush1.xpose.msra.mxu0 0.0
    %813 = vmatprep.subr.mxu0 0.0
    %814 = vmatpush1.xpose.msra.mxu0 0.0
    %815 = vmatprep.subr.mxu0 0.0
    %816 = vmatpush1.xpose.msra.mxu0 0.0
    %817 = vmatprep.subr.mxu0 0.0
    %818 = vmatpush1.xpose.msra.mxu0 0.0
    %819 = vmatprep.subr.mxu0 0.0
    %820 = vmatpush1.xpose.msra.mxu0 0.0
    %821 = vmatprep.subr.mxu0 0.0
    %822 = vmatpush1.xpose.msra.mxu0 0.0
    %823 = vmatprep.subr.mxu0 0.0
    %824 = vmatpush1.xpose.msra.mxu0 0.0
    %825 = vmatprep.subr.mxu0 0.0
    %826 = vmatpush1.xpose.msra.mxu0 0.0
    %827 = vmatprep.subr.mxu0 0.0
    %828 = vmatpush1.xpose.msra.mxu0 0.0
    %829 = vmatprep.subr.mxu0 0.0
    %830 = vmatpush1.xpose.msra.mxu0 0.0
    %831 = vmatprep.subr.mxu0 0.0
    %832 = vmatpush1.xpose.msra.mxu0 0.0
    %833 = vmatprep.subr.mxu0 0.0
    %834 = vmatpush1.xpose.msra.mxu0 0.0
    %835 = vmatprep.subr.mxu0 0.0
    %836 = vmatpush1.xpose.msra.mxu0 0.0
    %837 = vmatprep.subr.mxu0 0.0
    %838 = vmatpush1.xpose.msra.mxu0 0.0
    %839 = vmatprep.subr.mxu0 0.0
    %840 = vmatpush1.xpose.msra.mxu0 0.0
    %841 = vmatprep.subr.mxu0 0.0
    %842 = vmatpush1.xpose.msra.mxu0 0.0
    %843 = vmatprep.subr.mxu0 0.0
    %844 = vmatpush1.xpose.msra.mxu0 0.0
    %845 = vmatprep.subr.mxu0 0.0
    %846 = vmatpush1.xpose.msra.mxu0 0.0
    %847 = vmatprep.subr.mxu0 0.0
    %848 = vmatpush1.xpose.msra.mxu0 0.0
    %849 = vmatprep.subr.mxu0 0.0
    %850 = vmatpush1.xpose.msra.mxu0 0.0
    %851 = vmatprep.subr.mxu0 0.0
    %852 = vmatpush1.xpose.msra.mxu0 0.0
    %853 = vmatprep.subr.mxu0 0.0
    %854 = vmatpush1.xpose.msra.mxu0 0.0
    %855 = vmatprep.subr.mxu0 0.0
    %856 = vmatpush1.xpose.msra.mxu0 0.0
    %857 = vmatprep.subr.mxu0 0.0
    %858 = vmatpush1.xpose.msra.mxu0 0.0
    %859 = vmatprep.subr.mxu0 0.0
    %860 = vmatpush1.xpose.msra.mxu0 0.0
    %861 = vmatprep.subr.mxu0 0.0
    %862 = vmatpush1.xpose.msra.mxu0 0.0
    %863 = vmatprep.subr.mxu0 0.0
    %864 = vmatpush1.xpose.msra.mxu0 0.0
    %865 = vmatprep.subr.mxu0 0.0
    %866 = vmatpush1.xpose.msra.mxu0 0.0
    %867 = vmatprep.subr.mxu0 0.0
    %868 = vmatpush1.xpose.msra.mxu0 0.0
    %869 = vmatprep.subr.mxu0 0.0
    %870 = vmatpush1.xpose.msra.mxu0 0.0
    %871 = vmatprep.subr.mxu0 0.0
    %872 = vmatpush1.xpose.msra.mxu0 0.0
    %873 = vmatprep.mubr.f32.mxu0 0.0
    %874 = vmatmul.mubr.f32.gmra.mrb[0].mxu0 %v805
    %v875 = vpop.f32.mrb[0].mxu0
    %v876 = vadd.f32 0.0, %v875
    %v877 = vpop.f32.mrb[0].mxu0
    %878 = vdwg.mxu0
    %879 = vrot.lane.b32.xlu0 %v396, 96
    %v880 = vpop.permute.xlu0 %879
    %881 = vrot.lane.b32.xlu0 %v398, 96
    %v882 = vpop.permute.xlu0 %881
    %v883 = vsel %vm475, %v880, 0
    %v885 = vsel %vm475, %v882, 0
    %887 = vmatprep.subr.mxu0 0.0
    %888 = vmatpush1.xpose.msra.mxu0 %v885
    %889 = vmatprep.subr.mxu0 0.0
    %890 = vmatpush1.xpose.msra.mxu0 0.0
    %891 = vmatprep.subr.mxu0 0.0
    %892 = vmatpush1.xpose.msra.mxu0 0.0
    %893 = vmatprep.subr.mxu0 0.0
    %894 = vmatpush1.xpose.msra.mxu0 0.0
    %895 = vmatprep.subr.mxu0 0.0
    %896 = vmatpush1.xpose.msra.mxu0 0.0
    %897 = vmatprep.subr.mxu0 0.0
    %898 = vmatpush1.xpose.msra.mxu0 0.0
    %899 = vmatprep.subr.mxu0 0.0
    %900 = vmatpush1.xpose.msra.mxu0 0.0
    %901 = vmatprep.subr.mxu0 0.0
    %902 = vmatpush1.xpose.msra.mxu0 0.0
    %903 = vmatprep.subr.mxu0 0.0
    %904 = vmatpush1.xpose.msra.mxu0 0.0
    %905 = vmatprep.subr.mxu0 0.0
    %906 = vmatpush1.xpose.msra.mxu0 0.0
    %907 = vmatprep.subr.mxu0 0.0
    %908 = vmatpush1.xpose.msra.mxu0 0.0
    %909 = vmatprep.subr.mxu0 0.0
    %910 = vmatpush1.xpose.msra.mxu0 0.0
    %911 = vmatprep.subr.mxu0 0.0
    %912 = vmatpush1.xpose.msra.mxu0 0.0
    %913 = vmatprep.subr.mxu0 0.0
    %914 = vmatpush1.xpose.msra.mxu0 0.0
    %915 = vmatprep.subr.mxu0 0.0
    %916 = vmatpush1.xpose.msra.mxu0 0.0
    %917 = vmatprep.subr.mxu0 0.0
    %918 = vmatpush1.xpose.msra.mxu0 0.0
    %919 = vmatprep.subr.mxu0 0.0
    %920 = vmatpush1.xpose.msra.mxu0 0.0
    %921 = vmatprep.subr.mxu0 0.0
    %922 = vmatpush1.xpose.msra.mxu0 0.0
    %923 = vmatprep.subr.mxu0 0.0
    %924 = vmatpush1.xpose.msra.mxu0 0.0
    %925 = vmatprep.subr.mxu0 0.0
    %926 = vmatpush1.xpose.msra.mxu0 0.0
    %927 = vmatprep.subr.mxu0 0.0
    %928 = vmatpush1.xpose.msra.mxu0 0.0
    %929 = vmatprep.subr.mxu0 0.0
    %930 = vmatpush1.xpose.msra.mxu0 0.0
    %931 = vmatprep.subr.mxu0 0.0
    %932 = vmatpush1.xpose.msra.mxu0 0.0
    %933 = vmatprep.subr.mxu0 0.0
    %934 = vmatpush1.xpose.msra.mxu0 0.0
    %935 = vmatprep.subr.mxu0 0.0
    %936 = vmatpush1.xpose.msra.mxu0 0.0
    %937 = vmatprep.subr.mxu0 0.0
    %938 = vmatpush1.xpose.msra.mxu0 0.0
    %939 = vmatprep.subr.mxu0 0.0
    %940 = vmatpush1.xpose.msra.mxu0 0.0
    %941 = vmatprep.subr.mxu0 0.0
    %942 = vmatpush1.xpose.msra.mxu0 0.0
    %943 = vmatprep.subr.mxu0 0.0
    %944 = vmatpush1.xpose.msra.mxu0 0.0
    %945 = vmatprep.subr.mxu0 0.0
    %946 = vmatpush1.xpose.msra.mxu0 0.0
    %947 = vmatprep.subr.mxu0 0.0
    %948 = vmatpush1.xpose.msra.mxu0 0.0
    %949 = vmatprep.subr.mxu0 0.0
    %950 = vmatpush1.xpose.msra.mxu0 0.0
    %951 = vmatprep.mubr.f32.mxu0 0.0
    %952 = vmatmul.mubr.f32.gmra.mrb[0].mxu0 %v883
    %v953 = vpop.f32.mrb[0].mxu0
    %v954 = vadd.f32 0.0, %v953
    %v955 = vpop.f32.mrb[0].mxu0
    %956 = vdwg.mxu0
    %v957 = vmul.f32 %v876, 0.17677669
    %v958 = vmul.f32 %v954, 0.17677669
    %v959 = vsel %vm630, %v957, -inf
    %960 = vmax.xlane.f32.xlu0 %v959
    %v961 = vpop.xlane.xlu0 %960
    %v962 = vsel %vm630, %v958, -inf
    %963 = vmax.xlane.f32.xlu0 %v962
    %v964 = vpop.xlane.xlu0 %963
    %v965 = vsub.f32 %v957, %v961
    %v966 = vsub.f32 %v958, %v964
    %v967 = vmul.f32 %v965, 1.442695
    %v968 = vpow.pop %v967
    %v969 = vmul.f32 %v966, 1.442695
    %v970 = vpow.pop %v969
    %v971 = vsel %vm630, %v968, 0.0
    %972 = vadd.xlane.f32.xlu0 %v971
    %v973 = vpop.xlane.xlu0 %972
    %v974 = vsel %vm630, %v970, 0.0
    %975 = vadd.xlane.f32.xlu0 %v974
    %v976 = vpop.xlane.xlu0 %975
    %v977 = vrcp.pop %v973
    %v978 = vrcp.pop %v976
    %v979 = vmul.f32 %v968, %v977
    %v980 = vmul.f32 %v970, %v978
    %982 = vrot.lane.b32.xlu0 %v467, 96
    %v983 = vpop.permute.xlu0 %982
    %v986 = vsel %vm630, %v979, 0
    %988 = vmatprep.subr.mxu0 0.0
    %989 = vmatpush1.msra.mxu0 %v983
    %990 = vmatprep.subr.mxu0 0.0
    %991 = vmatpush1.msra.mxu0 0.0
    %992 = vmatprep.subr.mxu0 0.0
    %993 = vmatpush1.msra.mxu0 0.0
    %994 = vmatprep.subr.mxu0 0.0
    %995 = vmatpush1.msra.mxu0 0.0
    %996 = vmatprep.subr.mxu0 0.0
    %997 = vmatpush1.msra.mxu0 0.0
    %998 = vmatprep.subr.mxu0 0.0
    %999 = vmatpush1.msra.mxu0 0.0
    %1000 = vmatprep.subr.mxu0 0.0
    %1001 = vmatpush1.msra.mxu0 0.0
    %1002 = vmatprep.subr.mxu0 0.0
    %1003 = vmatpush1.msra.mxu0 0.0
    %1004 = vmatprep.subr.mxu0 0.0
    %1005 = vmatpush1.msra.mxu0 0.0
    %1006 = vmatprep.subr.mxu0 0.0
    %1007 = vmatpush1.msra.mxu0 0.0
    %1008 = vmatprep.subr.mxu0 0.0
    %1009 = vmatpush1.msra.mxu0 0.0
    %1010 = vmatprep.subr.mxu0 0.0
    %1011 = vmatpush1.msra.mxu0 0.0
    %1012 = vmatprep.subr.mxu0 0.0
    %1013 = vmatpush1.msra.mxu0 0.0
    %1014 = vmatprep.subr.mxu0 0.0
    %1015 = vmatpush1.msra.mxu0 0.0
    %1016 = vmatprep.subr.mxu0 0.0
    %1017 = vmatpush1.msra.mxu0 0.0
    %1018 = vmatprep.subr.mxu0 0.0
    %1019 = vmatpush1.msra.mxu0 0.0
    %1020 = vmatprep.subr.mxu0 0.0
    %1021 = vmatpush1.msra.mxu0 0.0
    %1022 = vmatprep.subr.mxu0 0.0
    %1023 = vmatpush1.msra.mxu0 0.0
    %1024 = vmatprep.subr.mxu0 0.0
    %1025 = vmatpush1.msra.mxu0 0.0
    %1026 = vmatprep.subr.mxu0 0.0
    %1027 = vmatpush1.msra.mxu0 0.0
    %1028 = vmatprep.subr.mxu0 0.0
    %1029 = vmatpush1.msra.mxu0 0.0
    %1030 = vmatprep.subr.mxu0 0.0
    %1031 = vmatpush1.msra.mxu0 0.0
    %1032 = vmatprep.subr.mxu0 0.0
    %1033 = vmatpush1.msra.mxu0 0.0
    %1034 = vmatprep.subr.mxu0 0.0
    %1035 = vmatpush1.msra.mxu0 0.0
    %1036 = vmatprep.subr.mxu0 0.0
    %1037 = vmatpush1.msra.mxu0 0.0
    %1038 = vmatprep.subr.mxu0 0.0
    %1039 = vmatpush1.msra.mxu0 0.0
    %1040 = vmatprep.subr.mxu0 0.0
    %1041 = vmatpush1.msra.mxu0 0.0
    %1042 = vmatprep.subr.mxu0 0.0
    %1043 = vmatpush1.msra.mxu0 0.0
    %1044 = vmatprep.subr.mxu0 0.0
    %1045 = vmatpush1.msra.mxu0 0.0
    %1046 = vmatprep.subr.mxu0 0.0
    %1047 = vmatpush1.msra.mxu0 0.0
    %1048 = vmatprep.subr.mxu0 0.0
    %1049 = vmatpush1.msra.mxu0 0.0
    %1050 = vmatprep.subr.mxu0 0.0
    %1051 = vmatpush1.msra.mxu0 0.0
    %1052 = vmatprep.mubr.f32.mxu0 0.0
    %1053 = vmatmul.mubr.f32.gmra.mrb[0].mxu0 %v986
    %v1054 = vpop.f32.mrb[0].mxu0
    %v1055 = vadd.f32 0.0, %v1054
    %v1056 = vpop.f32.mrb[0].mxu0
    %1057 = vdwg.mxu0
    %1059 = vrot.lane.b32.xlu0 %v472, 96
    %v1060 = vpop.permute.xlu0 %1059
    %v1063 = vsel %vm630, %v980, 0
    %1065 = vmatprep.subr.mxu0 0.0
    %1066 = vmatpush1.msra.mxu0 %v1060
    %1067 = vmatprep.subr.mxu0 0.0
    %1068 = vmatpush1.msra.mxu0 0.0
    %1069 = vmatprep.subr.mxu0 0.0
    %1070 = vmatpush1.msra.mxu0 0.0
    %1071 = vmatprep.subr.mxu0 0.0
    %1072 = vmatpush1.msra.mxu0 0.0
    %1073 = vmatprep.subr.mxu0 0.0
    %1074 = vmatpush1.msra.mxu0 0.0
    %1075 = vmatprep.subr.mxu0 0.0
    %1076 = vmatpush1.msra.mxu0 0.0
    %1077 = vmatprep.subr.mxu0 0.0
    %1078 = vmatpush1.msra.mxu0 0.0
    %1079 = vmatprep.subr.mxu0 0.0
    %1080 = vmatpush1.msra.mxu0 0.0
    %1081 = vmatprep.subr.mxu0 0.0
    %1082 = vmatpush1.msra.mxu0 0.0
    %1083 = vmatprep.subr.mxu0 0.0
    %1084 = vmatpush1.msra.mxu0 0.0
    %1085 = vmatprep.subr.mxu0 0.0
    %1086 = vmatpush1.msra.mxu0 0.0
    %1087 = vmatprep.subr.mxu0 0.0
    %1088 = vmatpush1.msra.mxu0 0.0
    %1089 = vmatprep.subr.mxu0 0.0
    %1090 = vmatpush1.msra.mxu0 0.0
    %1091 = vmatprep.subr.mxu0 0.0
    %1092 = vmatpush1.msra.mxu0 0.0
    %1093 = vmatprep.subr.mxu0 0.0
    %1094 = vmatpush1.msra.mxu0 0.0
    %1095 = vmatprep.subr.mxu0 0.0
    %1096 = vmatpush1.msra.mxu0 0.0
    %1097 = vmatprep.subr.mxu0 0.0
    %1098 = vmatpush1.msra.mxu0 0.0
    %1099 = vmatprep.subr.mxu0 0.0
    %1100 = vmatpush1.msra.mxu0 0.0
    %1101 = vmatprep.subr.mxu0 0.0
    %1102 = vmatpush1.msra.mxu0 0.0
    %1103 = vmatprep.subr.mxu0 0.0
    %1104 = vmatpush1.msra.mxu0 0.0
    %1105 = vmatprep.subr.mxu0 0.0
    %1106 = vmatpush1.msra.mxu0 0.0
    %1107 = vmatprep.subr.mxu0 0.0
    %1108 = vmatpush1.msra.mxu0 0.0
    %1109 = vmatprep.subr.mxu0 0.0
    %1110 = vmatpush1.msra.mxu0 0.0
    %1111 = vmatprep.subr.mxu0 0.0
    %1112 = vmatpush1.msra.mxu0 0.0
    %1113 = vmatprep.subr.mxu0 0.0
    %1114 = vmatpush1.msra.mxu0 0.0
    %1115 = vmatprep.subr.mxu0 0.0
    %1116 = vmatpush1.msra.mxu0 0.0
    %1117 = vmatprep.subr.mxu0 0.0
    %1118 = vmatpush1.msra.mxu0 0.0
    %1119 = vmatprep.subr.mxu0 0.0
    %1120 = vmatpush1.msra.mxu0 0.0
    %1121 = vmatprep.subr.mxu0 0.0
    %1122 = vmatpush1.msra.mxu0 0.0
    %1123 = vmatprep.subr.mxu0 0.0
    %1124 = vmatpush1.msra.mxu0 0.0
    %1125 = vmatprep.subr.mxu0 0.0
    %1126 = vmatpush1.msra.mxu0 0.0
    %1127 = vmatprep.subr.mxu0 0.0
    %1128 = vmatpush1.msra.mxu0 0.0
    %1129 = vmatprep.mubr.f32.mxu0 0.0
    %1130 = vmatmul.mubr.f32.gmra.mrb[0].mxu0 %v1063
    %v1131 = vpop.f32.mrb[0].mxu0
    %v1132 = vadd.f32 0.0, %v1131
    %v1133 = vpop.f32.mrb[0].mxu0
    %1134 = vdwg.mxu0
    %1137 = vrot.lane.b32.xlu0 %v1055, 32
    %v1138 = vpop.permute.xlu0 %1137
    %1139 = vrot.lane.b32.xlu0 %v1132, 32
    %v1140 = vpop.permute.xlu0 %1139
    %vm1143 = vcmask 523520
    %1144 = vst.msk [vmem:[#allocation2] sm:$0xff] %vm1143, %v1138
    %1145 = vst.msk [vmem:[#allocation2 + $0x8] sm:$0xff] %vm1143, %v1140
    %1146 = vrot.lane.b32.xlu0 %v390, 64
    %v1147 = vpop.permute.xlu0 %1146
    %1148 = vrot.lane.b32.xlu0 %v392, 64
    %v1149 = vpop.permute.xlu0 %1148
    %v1150 = vsel %vm475, %v1147, 0
    %v1152 = vsel %vm475, %v1149, 0
    %1154 = vmatprep.subr.mxu0 0.0
    %1155 = vmatpush1.xpose.msra.mxu0 %v1152
    %1156 = vmatprep.subr.mxu0 0.0
    %1157 = vmatpush1.xpose.msra.mxu0 0.0
    %1158 = vmatprep.subr.mxu0 0.0
    %1159 = vmatpush1.xpose.msra.mxu0 0.0
    %1160 = vmatprep.subr.mxu0 0.0
    %1161 = vmatpush1.xpose.msra.mxu0 0.0
    %1162 = vmatprep.subr.mxu0 0.0
    %1163 = vmatpush1.xpose.msra.mxu0 0.0
    %1164 = vmatprep.subr.mxu0 0.0
    %1165 = vmatpush1.xpose.msra.mxu0 0.0
    %1166 = vmatprep.subr.mxu0 0.0
    %1167 = vmatpush1.xpose.msra.mxu0 0.0
    %1168 = vmatprep.subr.mxu0 0.0
    %1169 = vmatpush1.xpose.msra.mxu0 0.0
    %1170 = vmatprep.subr.mxu0 0.0
    %1171 = vmatpush1.xpose.msra.mxu0 0.0
    %1172 = vmatprep.subr.mxu0 0.0
    %1173 = vmatpush1.xpose.msra.mxu0 0.0
    %1174 = vmatprep.subr.mxu0 0.0
    %1175 = vmatpush1.xpose.msra.mxu0 0.0
    %1176 = vmatprep.subr.mxu0 0.0
    %1177 = vmatpush1.xpose.msra.mxu0 0.0
    %1178 = vmatprep.subr.mxu0 0.0
    %1179 = vmatpush1.xpose.msra.mxu0 0.0
    %1180 = vmatprep.subr.mxu0 0.0
    %1181 = vmatpush1.xpose.msra.mxu0 0.0
    %1182 = vmatprep.subr.mxu0 0.0
    %1183 = vmatpush1.xpose.msra.mxu0 0.0
    %1184 = vmatprep.subr.mxu0 0.0
    %1185 = vmatpush1.xpose.msra.mxu0 0.0
    %1186 = vmatprep.subr.mxu0 0.0
    %1187 = vmatpush1.xpose.msra.mxu0 0.0
    %1188 = vmatprep.subr.mxu0 0.0
    %1189 = vmatpush1.xpose.msra.mxu0 0.0
    %1190 = vmatprep.subr.mxu0 0.0
    %1191 = vmatpush1.xpose.msra.mxu0 0.0
    %1192 = vmatprep.subr.mxu0 0.0
    %1193 = vmatpush1.xpose.msra.mxu0 0.0
    %1194 = vmatprep.subr.mxu0 0.0
    %1195 = vmatpush1.xpose.msra.mxu0 0.0
    %1196 = vmatprep.subr.mxu0 0.0
    %1197 = vmatpush1.xpose.msra.mxu0 0.0
    %1198 = vmatprep.subr.mxu0 0.0
    %1199 = vmatpush1.xpose.msra.mxu0 0.0
    %1200 = vmatprep.subr.mxu0 0.0
    %1201 = vmatpush1.xpose.msra.mxu0 0.0
    %1202 = vmatprep.subr.mxu0 0.0
    %1203 = vmatpush1.xpose.msra.mxu0 0.0
    %1204 = vmatprep.subr.mxu0 0.0
    %1205 = vmatpush1.xpose.msra.mxu0 0.0
    %1206 = vmatprep.subr.mxu0 0.0
    %1207 = vmatpush1.xpose.msra.mxu0 0.0
    %1208 = vmatprep.subr.mxu0 0.0
    %1209 = vmatpush1.xpose.msra.mxu0 0.0
    %1210 = vmatprep.subr.mxu0 0.0
    %1211 = vmatpush1.xpose.msra.mxu0 0.0
    %1212 = vmatprep.subr.mxu0 0.0
    %1213 = vmatpush1.xpose.msra.mxu0 0.0
    %1214 = vmatprep.subr.mxu0 0.0
    %1215 = vmatpush1.xpose.msra.mxu0 0.0
    %1216 = vmatprep.subr.mxu0 0.0
    %1217 = vmatpush1.xpose.msra.mxu0 0.0
    %1218 = vmatprep.mubr.f32.mxu0 0.0
    %1219 = vmatmul.mubr.f32.gmra.mrb[0].mxu0 %v1150
    %v1220 = vpop.f32.mrb[0].mxu0
    %v1221 = vadd.f32 0.0, %v1220
    %v1222 = vpop.f32.mrb[0].mxu0
    %1223 = vdwg.mxu0
    %1224 = vrot.lane.b32.xlu0 %v396, 64
    %v1225 = vpop.permute.xlu0 %1224
    %1226 = vrot.lane.b32.xlu0 %v398, 64
    %v1227 = vpop.permute.xlu0 %1226
    %v1228 = vsel %vm475, %v1225, 0
    %v1230 = vsel %vm475, %v1227, 0
    %1232 = vmatprep.subr.mxu0 0.0
    %1233 = vmatpush1.xpose.msra.mxu0 %v1230
    %1234 = vmatprep.subr.mxu0 0.0
    %1235 = vmatpush1.xpose.msra.mxu0 0.0
    %1236 = vmatprep.subr.mxu0 0.0
    %1237 = vmatpush1.xpose.msra.mxu0 0.0
    %1238 = vmatprep.subr.mxu0 0.0
    %1239 = vmatpush1.xpose.msra.mxu0 0.0
    %1240 = vmatprep.subr.mxu0 0.0
    %1241 = vmatpush1.xpose.msra.mxu0 0.0
    %1242 = vmatprep.subr.mxu0 0.0
    %1243 = vmatpush1.xpose.msra.mxu0 0.0
    %1244 = vmatprep.subr.mxu0 0.0
    %1245 = vmatpush1.xpose.msra.mxu0 0.0
    %1246 = vmatprep.subr.mxu0 0.0
    %1247 = vmatpush1.xpose.msra.mxu0 0.0
    %1248 = vmatprep.subr.mxu0 0.0
    %1249 = vmatpush1.xpose.msra.mxu0 0.0
    %1250 = vmatprep.subr.mxu0 0.0
    %1251 = vmatpush1.xpose.msra.mxu0 0.0
    %1252 = vmatprep.subr.mxu0 0.0
    %1253 = vmatpush1.xpose.msra.mxu0 0.0
    %1254 = vmatprep.subr.mxu0 0.0
    %1255 = vmatpush1.xpose.msra.mxu0 0.0
    %1256 = vmatprep.subr.mxu0 0.0
    %1257 = vmatpush1.xpose.msra.mxu0 0.0
    %1258 = vmatprep.subr.mxu0 0.0
    %1259 = vmatpush1.xpose.msra.mxu0 0.0
    %1260 = vmatprep.subr.mxu0 0.0
    %1261 = vmatpush1.xpose.msra.mxu0 0.0
    %1262 = vmatprep.subr.mxu0 0.0
    %1263 = vmatpush1.xpose.msra.mxu0 0.0
    %1264 = vmatprep.subr.mxu0 0.0
    %1265 = vmatpush1.xpose.msra.mxu0 0.0
    %1266 = vmatprep.subr.mxu0 0.0
    %1267 = vmatpush1.xpose.msra.mxu0 0.0
    %1268 = vmatprep.subr.mxu0 0.0
    %1269 = vmatpush1.xpose.msra.mxu0 0.0
    %1270 = vmatprep.subr.mxu0 0.0
    %1271 = vmatpush1.xpose.msra.mxu0 0.0
    %1272 = vmatprep.subr.mxu0 0.0
    %1273 = vmatpush1.xpose.msra.mxu0 0.0
    %1274 = vmatprep.subr.mxu0 0.0
    %1275 = vmatpush1.xpose.msra.mxu0 0.0
    %1276 = vmatprep.subr.mxu0 0.0
    %1277 = vmatpush1.xpose.msra.mxu0 0.0
    %1278 = vmatprep.subr.mxu0 0.0
    %1279 = vmatpush1.xpose.msra.mxu0 0.0
    %1280 = vmatprep.subr.mxu0 0.0
    %1281 = vmatpush1.xpose.msra.mxu0 0.0
    %1282 = vmatprep.subr.mxu0 0.0
    %1283 = vmatpush1.xpose.msra.mxu0 0.0
    %1284 = vmatprep.subr.mxu0 0.0
    %1285 = vmatpush1.xpose.msra.mxu0 0.0
    %1286 = vmatprep.subr.mxu0 0.0
    %1287 = vmatpush1.xpose.msra.mxu0 0.0
    %1288 = vmatprep.subr.mxu0 0.0
    %1289 = vmatpush1.xpose.msra.mxu0 0.0
    %1290 = vmatprep.subr.mxu0 0.0
    %1291 = vmatpush1.xpose.msra.mxu0 0.0
    %1292 = vmatprep.subr.mxu0 0.0
    %1293 = vmatpush1.xpose.msra.mxu0 0.0
    %1294 = vmatprep.subr.mxu0 0.0
    %1295 = vmatpush1.xpose.msra.mxu0 0.0
    %1296 = vmatprep.mubr.f32.mxu0 0.0
    %1297 = vmatmul.mubr.f32.gmra.mrb[0].mxu0 %v1228
    %v1298 = vpop.f32.mrb[0].mxu0
    %v1299 = vadd.f32 0.0, %v1298
    %v1300 = vpop.f32.mrb[0].mxu0
    %1301 = vdwg.mxu0
    %v1302 = vmul.f32 %v1221, 0.17677669
    %v1303 = vmul.f32 %v1299, 0.17677669
    %v1304 = vsel %vm630, %v1302, -inf
    %1305 = vmax.xlane.f32.xlu0 %v1304
    %v1306 = vpop.xlane.xlu0 %1305
    %v1307 = vsel %vm630, %v1303, -inf
    %1308 = vmax.xlane.f32.xlu0 %v1307
    %v1309 = vpop.xlane.xlu0 %1308
    %v1310 = vsub.f32 %v1302, %v1306
    %v1311 = vsub.f32 %v1303, %v1309
    %v1312 = vmul.f32 %v1310, 1.442695
    %v1313 = vpow.pop %v1312
    %v1314 = vmul.f32 %v1311, 1.442695
    %v1315 = vpow.pop %v1314
    %v1316 = vsel %vm630, %v1313, 0.0
    %1317 = vadd.xlane.f32.xlu0 %v1316
    %v1318 = vpop.xlane.xlu0 %1317
    %v1319 = vsel %vm630, %v1315, 0.0
    %1320 = vadd.xlane.f32.xlu0 %v1319
    %v1321 = vpop.xlane.xlu0 %1320
    %v1322 = vrcp.pop %v1318
    %v1323 = vrcp.pop %v1321
    %v1324 = vmul.f32 %v1313, %v1322
    %v1325 = vmul.f32 %v1315, %v1323
    %1326 = vrot.lane.b32.xlu0 %v467, 64
    %v1327 = vpop.permute.xlu0 %1326
    %v1330 = vsel %vm630, %v1324, 0
    %1332 = vmatprep.subr.mxu0 0.0
    %1333 = vmatpush1.msra.mxu0 %v1327
    %1334 = vmatprep.subr.mxu0 0.0
    %1335 = vmatpush1.msra.mxu0 0.0
    %1336 = vmatprep.subr.mxu0 0.0
    %1337 = vmatpush1.msra.mxu0 0.0
    %1338 = vmatprep.subr.mxu0 0.0
    %1339 = vmatpush1.msra.mxu0 0.0
    %1340 = vmatprep.subr.mxu0 0.0
    %1341 = vmatpush1.msra.mxu0 0.0
    %1342 = vmatprep.subr.mxu0 0.0
    %1343 = vmatpush1.msra.mxu0 0.0
    %1344 = vmatprep.subr.mxu0 0.0
    %1345 = vmatpush1.msra.mxu0 0.0
    %1346 = vmatprep.subr.mxu0 0.0
    %1347 = vmatpush1.msra.mxu0 0.0
    %1348 = vmatprep.subr.mxu0 0.0
    %1349 = vmatpush1.msra.mxu0 0.0
    %1350 = vmatprep.subr.mxu0 0.0
    %1351 = vmatpush1.msra.mxu0 0.0
    %1352 = vmatprep.subr.mxu0 0.0
    %1353 = vmatpush1.msra.mxu0 0.0
    %1354 = vmatprep.subr.mxu0 0.0
    %1355 = vmatpush1.msra.mxu0 0.0
    %1356 = vmatprep.subr.mxu0 0.0
    %1357 = vmatpush1.msra.mxu0 0.0
    %1358 = vmatprep.subr.mxu0 0.0
    %1359 = vmatpush1.msra.mxu0 0.0
    %1360 = vmatprep.subr.mxu0 0.0
    %1361 = vmatpush1.msra.mxu0 0.0
    %1362 = vmatprep.subr.mxu0 0.0
    %1363 = vmatpush1.msra.mxu0 0.0
    %1364 = vmatprep.subr.mxu0 0.0
    %1365 = vmatpush1.msra.mxu0 0.0
    %1366 = vmatprep.subr.mxu0 0.0
    %1367 = vmatpush1.msra.mxu0 0.0
    %1368 = vmatprep.subr.mxu0 0.0
    %1369 = vmatpush1.msra.mxu0 0.0
    %1370 = vmatprep.subr.mxu0 0.0
    %1371 = vmatpush1.msra.mxu0 0.0
    %1372 = vmatprep.subr.mxu0 0.0
    %1373 = vmatpush1.msra.mxu0 0.0
    %1374 = vmatprep.subr.mxu0 0.0
    %1375 = vmatpush1.msra.mxu0 0.0
    %1376 = vmatprep.subr.mxu0 0.0
    %1377 = vmatpush1.msra.mxu0 0.0
    %1378 = vmatprep.subr.mxu0 0.0
    %1379 = vmatpush1.msra.mxu0 0.0
    %1380 = vmatprep.subr.mxu0 0.0
    %1381 = vmatpush1.msra.mxu0 0.0
    %1382 = vmatprep.subr.mxu0 0.0
    %1383 = vmatpush1.msra.mxu0 0.0
    %1384 = vmatprep.subr.mxu0 0.0
    %1385 = vmatpush1.msra.mxu0 0.0
    %1386 = vmatprep.subr.mxu0 0.0
    %1387 = vmatpush1.msra.mxu0 0.0
    %1388 = vmatprep.subr.mxu0 0.0
    %1389 = vmatpush1.msra.mxu0 0.0
    %1390 = vmatprep.subr.mxu0 0.0
    %1391 = vmatpush1.msra.mxu0 0.0
    %1392 = vmatprep.subr.mxu0 0.0
    %1393 = vmatpush1.msra.mxu0 0.0
    %1394 = vmatprep.subr.mxu0 0.0
    %1395 = vmatpush1.msra.mxu0 0.0
    %1396 = vmatprep.mubr.f32.mxu0 0.0
    %1397 = vmatmul.mubr.f32.gmra.mrb[0].mxu0 %v1330
    %v1398 = vpop.f32.mrb[0].mxu0
    %v1399 = vadd.f32 0.0, %v1398
    %v1400 = vpop.f32.mrb[0].mxu0
    %1401 = vdwg.mxu0
    %1402 = vrot.lane.b32.xlu0 %v472, 64
    %v1403 = vpop.permute.xlu0 %1402
    %v1406 = vsel %vm630, %v1325, 0
    %1408 = vmatprep.subr.mxu0 0.0
    %1409 = vmatpush1.msra.mxu0 %v1403
    %1410 = vmatprep.subr.mxu0 0.0
    %1411 = vmatpush1.msra.mxu0 0.0
    %1412 = vmatprep.subr.mxu0 0.0
    %1413 = vmatpush1.msra.mxu0 0.0
    %1414 = vmatprep.subr.mxu0 0.0
    %1415 = vmatpush1.msra.mxu0 0.0
    %1416 = vmatprep.subr.mxu0 0.0
    %1417 = vmatpush1.msra.mxu0 0.0
    %1418 = vmatprep.subr.mxu0 0.0
    %1419 = vmatpush1.msra.mxu0 0.0
    %1420 = vmatprep.subr.mxu0 0.0
    %1421 = vmatpush1.msra.mxu0 0.0
    %1422 = vmatprep.subr.mxu0 0.0
    %1423 = vmatpush1.msra.mxu0 0.0
    %1424 = vmatprep.subr.mxu0 0.0
    %1425 = vmatpush1.msra.mxu0 0.0
    %1426 = vmatprep.subr.mxu0 0.0
    %1427 = vmatpush1.msra.mxu0 0.0
    %1428 = vmatprep.subr.mxu0 0.0
    %1429 = vmatpush1.msra.mxu0 0.0
    %1430 = vmatprep.subr.mxu0 0.0
    %1431 = vmatpush1.msra.mxu0 0.0
    %1432 = vmatprep.subr.mxu0 0.0
    %1433 = vmatpush1.msra.mxu0 0.0
    %1434 = vmatprep.subr.mxu0 0.0
    %1435 = vmatpush1.msra.mxu0 0.0
    %1436 = vmatprep.subr.mxu0 0.0
    %1437 = vmatpush1.msra.mxu0 0.0
    %1438 = vmatprep.subr.mxu0 0.0
    %1439 = vmatpush1.msra.mxu0 0.0
    %1440 = vmatprep.subr.mxu0 0.0
    %1441 = vmatpush1.msra.mxu0 0.0
    %1442 = vmatprep.subr.mxu0 0.0
    %1443 = vmatpush1.msra.mxu0 0.0
    %1444 = vmatprep.subr.mxu0 0.0
    %1445 = vmatpush1.msra.mxu0 0.0
    %1446 = vmatprep.subr.mxu0 0.0
    %1447 = vmatpush1.msra.mxu0 0.0
    %1448 = vmatprep.subr.mxu0 0.0
    %1449 = vmatpush1.msra.mxu0 0.0
    %1450 = vmatprep.subr.mxu0 0.0
    %1451 = vmatpush1.msra.mxu0 0.0
    %1452 = vmatprep.subr.mxu0 0.0
    %1453 = vmatpush1.msra.mxu0 0.0
    %1454 = vmatprep.subr.mxu0 0.0
    %1455 = vmatpush1.msra.mxu0 0.0
    %1456 = vmatprep.subr.mxu0 0.0
    %1457 = vmatpush1.msra.mxu0 0.0
    %1458 = vmatprep.subr.mxu0 0.0
    %1459 = vmatpush1.msra.mxu0 0.0
    %1460 = vmatprep.subr.mxu0 0.0
    %1461 = vmatpush1.msra.mxu0 0.0
    %1462 = vmatprep.subr.mxu0 0.0
    %1463 = vmatpush1.msra.mxu0 0.0
    %1464 = vmatprep.subr.mxu0 0.0
    %1465 = vmatpush1.msra.mxu0 0.0
    %1466 = vmatprep.subr.mxu0 0.0
    %1467 = vmatpush1.msra.mxu0 0.0
    %1468 = vmatprep.subr.mxu0 0.0
    %1469 = vmatpush1.msra.mxu0 0.0
    %1470 = vmatprep.subr.mxu0 0.0
    %1471 = vmatpush1.msra.mxu0 0.0
    %1472 = vmatprep.mubr.f32.mxu0 0.0
    %1473 = vmatmul.mubr.f32.gmra.mrb[0].mxu0 %v1406
    %v1474 = vpop.f32.mrb[0].mxu0
    %v1475 = vadd.f32 0.0, %v1474
    %v1476 = vpop.f32.mrb[0].mxu0
    %1477 = vdwg.mxu0
    %1480 = vrot.lane.b32.xlu0 %v1399, 64
    %v1481 = vpop.permute.xlu0 %1480
    %1482 = vrot.lane.b32.xlu0 %v1475, 64
    %v1483 = vpop.permute.xlu0 %1482
    %vm1486 = vcmask 785920
    %1487 = vst.msk [vmem:[#allocation2] sm:$0xff] %vm1486, %v1481
    %1488 = vst.msk [vmem:[#allocation2 + $0x8] sm:$0xff] %vm1486, %v1483
    %1489 = vrot.lane.b32.xlu0 %v390, 32
    %v1490 = vpop.permute.xlu0 %1489
    %1491 = vrot.lane.b32.xlu0 %v392, 32
    %v1492 = vpop.permute.xlu0 %1491
    %v1493 = vsel %vm475, %v1490, 0
    %v1495 = vsel %vm475, %v1492, 0
    %1497 = vmatprep.subr.mxu0 0.0
    %1498 = vmatpush1.xpose.msra.mxu0 %v1495
    %1499 = vmatprep.subr.mxu0 0.0
    %1500 = vmatpush1.xpose.msra.mxu0 0.0
    %1501 = vmatprep.subr.mxu0 0.0
    %1502 = vmatpush1.xpose.msra.mxu0 0.0
    %1503 = vmatprep.subr.mxu0 0.0
    %1504 = vmatpush1.xpose.msra.mxu0 0.0
    %1505 = vmatprep.subr.mxu0 0.0
    %1506 = vmatpush1.xpose.msra.mxu0 0.0
    %1507 = vmatprep.subr.mxu0 0.0
    %1508 = vmatpush1.xpose.msra.mxu0 0.0
    %1509 = vmatprep.subr.mxu0 0.0
    %1510 = vmatpush1.xpose.msra.mxu0 0.0
    %1511 = vmatprep.subr.mxu0 0.0
    %1512 = vmatpush1.xpose.msra.mxu0 0.0
    %1513 = vmatprep.subr.mxu0 0.0
    %1514 = vmatpush1.xpose.msra.mxu0 0.0
    %1515 = vmatprep.subr.mxu0 0.0
    %1516 = vmatpush1.xpose.msra.mxu0 0.0
    %1517 = vmatprep.subr.mxu0 0.0
    %1518 = vmatpush1.xpose.msra.mxu0 0.0
    %1519 = vmatprep.subr.mxu0 0.0
    %1520 = vmatpush1.xpose.msra.mxu0 0.0
    %1521 = vmatprep.subr.mxu0 0.0
    %1522 = vmatpush1.xpose.msra.mxu0 0.0
    %1523 = vmatprep.subr.mxu0 0.0
    %1524 = vmatpush1.xpose.msra.mxu0 0.0
    %1525 = vmatprep.subr.mxu0 0.0
    %1526 = vmatpush1.xpose.msra.mxu0 0.0
    %1527 = vmatprep.subr.mxu0 0.0
    %1528 = vmatpush1.xpose.msra.mxu0 0.0
    %1529 = vmatprep.subr.mxu0 0.0
    %1530 = vmatpush1.xpose.msra.mxu0 0.0
    %1531 = vmatprep.subr.mxu0 0.0
    %1532 = vmatpush1.xpose.msra.mxu0 0.0
    %1533 = vmatprep.subr.mxu0 0.0
    %1534 = vmatpush1.xpose.msra.mxu0 0.0
    %1535 = vmatprep.subr.mxu0 0.0
    %1536 = vmatpush1.xpose.msra.mxu0 0.0
    %1537 = vmatprep.subr.mxu0 0.0
    %1538 = vmatpush1.xpose.msra.mxu0 0.0
    %1539 = vmatprep.subr.mxu0 0.0
    %1540 = vmatpush1.xpose.msra.mxu0 0.0
    %1541 = vmatprep.subr.mxu0 0.0
    %1542 = vmatpush1.xpose.msra.mxu0 0.0
    %1543 = vmatprep.subr.mxu0 0.0
    %1544 = vmatpush1.xpose.msra.mxu0 0.0
    %1545 = vmatprep.subr.mxu0 0.0
    %1546 = vmatpush1.xpose.msra.mxu0 0.0
    %1547 = vmatprep.subr.mxu0 0.0
    %1548 = vmatpush1.xpose.msra.mxu0 0.0
    %1549 = vmatprep.subr.mxu0 0.0
    %1550 = vmatpush1.xpose.msra.mxu0 0.0
    %1551 = vmatprep.subr.mxu0 0.0
    %1552 = vmatpush1.xpose.msra.mxu0 0.0
    %1553 = vmatprep.subr.mxu0 0.0
    %1554 = vmatpush1.xpose.msra.mxu0 0.0
    %1555 = vmatprep.subr.mxu0 0.0
    %1556 = vmatpush1.xpose.msra.mxu0 0.0
    %1557 = vmatprep.subr.mxu0 0.0
    %1558 = vmatpush1.xpose.msra.mxu0 0.0
    %1559 = vmatprep.subr.mxu0 0.0
    %1560 = vmatpush1.xpose.msra.mxu0 0.0
    %1561 = vmatprep.mubr.f32.mxu0 0.0
    %1562 = vmatmul.mubr.f32.gmra.mrb[0].mxu0 %v1493
    %v1563 = vpop.f32.mrb[0].mxu0
    %v1564 = vadd.f32 0.0, %v1563
    %v1565 = vpop.f32.mrb[0].mxu0
    %1566 = vdwg.mxu0
    %1567 = vrot.lane.b32.xlu0 %v396, 32
    %v1568 = vpop.permute.xlu0 %1567
    %1569 = vrot.lane.b32.xlu0 %v398, 32
    %v1570 = vpop.permute.xlu0 %1569
    %v1571 = vsel %vm475, %v1568, 0
    %v1573 = vsel %vm475, %v1570, 0
    %1575 = vmatprep.subr.mxu0 0.0
    %1576 = vmatpush1.xpose.msra.mxu0 %v1573
    %1577 = vmatprep.subr.mxu0 0.0
    %1578 = vmatpush1.xpose.msra.mxu0 0.0
    %1579 = vmatprep.subr.mxu0 0.0
    %1580 = vmatpush1.xpose.msra.mxu0 0.0
    %1581 = vmatprep.subr.mxu0 0.0
    %1582 = vmatpush1.xpose.msra.mxu0 0.0
    %1583 = vmatprep.subr.mxu0 0.0
    %1584 = vmatpush1.xpose.msra.mxu0 0.0
    %1585 = vmatprep.subr.mxu0 0.0
    %1586 = vmatpush1.xpose.msra.mxu0 0.0
    %1587 = vmatprep.subr.mxu0 0.0
    %1588 = vmatpush1.xpose.msra.mxu0 0.0
    %1589 = vmatprep.subr.mxu0 0.0
    %1590 = vmatpush1.xpose.msra.mxu0 0.0
    %1591 = vmatprep.subr.mxu0 0.0
    %1592 = vmatpush1.xpose.msra.mxu0 0.0
    %1593 = vmatprep.subr.mxu0 0.0
    %1594 = vmatpush1.xpose.msra.mxu0 0.0
    %1595 = vmatprep.subr.mxu0 0.0
    %1596 = vmatpush1.xpose.msra.mxu0 0.0
    %1597 = vmatprep.subr.mxu0 0.0
    %1598 = vmatpush1.xpose.msra.mxu0 0.0
    %1599 = vmatprep.subr.mxu0 0.0
    %1600 = vmatpush1.xpose.msra.mxu0 0.0
    %1601 = vmatprep.subr.mxu0 0.0
    %1602 = vmatpush1.xpose.msra.mxu0 0.0
    %1603 = vmatprep.subr.mxu0 0.0
    %1604 = vmatpush1.xpose.msra.mxu0 0.0
    %1605 = vmatprep.subr.mxu0 0.0
    %1606 = vmatpush1.xpose.msra.mxu0 0.0
    %1607 = vmatprep.subr.mxu0 0.0
    %1608 = vmatpush1.xpose.msra.mxu0 0.0
    %1609 = vmatprep.subr.mxu0 0.0
    %1610 = vmatpush1.xpose.msra.mxu0 0.0
    %1611 = vmatprep.subr.mxu0 0.0
    %1612 = vmatpush1.xpose.msra.mxu0 0.0
    %1613 = vmatprep.subr.mxu0 0.0
    %1614 = vmatpush1.xpose.msra.mxu0 0.0
    %1615 = vmatprep.subr.mxu0 0.0
    %1616 = vmatpush1.xpose.msra.mxu0 0.0
    %1617 = vmatprep.subr.mxu0 0.0
    %1618 = vmatpush1.xpose.msra.mxu0 0.0
    %1619 = vmatprep.subr.mxu0 0.0
    %1620 = vmatpush1.xpose.msra.mxu0 0.0
    %1621 = vmatprep.subr.mxu0 0.0
    %1622 = vmatpush1.xpose.msra.mxu0 0.0
    %1623 = vmatprep.subr.mxu0 0.0
    %1624 = vmatpush1.xpose.msra.mxu0 0.0
    %1625 = vmatprep.subr.mxu0 0.0
    %1626 = vmatpush1.xpose.msra.mxu0 0.0
    %1627 = vmatprep.subr.mxu0 0.0
    %1628 = vmatpush1.xpose.msra.mxu0 0.0
    %1629 = vmatprep.subr.mxu0 0.0
    %1630 = vmatpush1.xpose.msra.mxu0 0.0
    %1631 = vmatprep.subr.mxu0 0.0
    %1632 = vmatpush1.xpose.msra.mxu0 0.0
    %1633 = vmatprep.subr.mxu0 0.0
    %1634 = vmatpush1.xpose.msra.mxu0 0.0
    %1635 = vmatprep.subr.mxu0 0.0
    %1636 = vmatpush1.xpose.msra.mxu0 0.0
    %1637 = vmatprep.subr.mxu0 0.0
    %1638 = vmatpush1.xpose.msra.mxu0 0.0
    %1639 = vmatprep.mubr.f32.mxu0 0.0
    %1640 = vmatmul.mubr.f32.gmra.mrb[0].mxu0 %v1571
    %v1641 = vpop.f32.mrb[0].mxu0
    %v1642 = vadd.f32 0.0, %v1641
    %v1643 = vpop.f32.mrb[0].mxu0
    %1644 = vdwg.mxu0
    %v1645 = vmul.f32 %v1564, 0.17677669
    %v1646 = vmul.f32 %v1642, 0.17677669
    %v1647 = vsel %vm630, %v1645, -inf
    %1648 = vmax.xlane.f32.xlu0 %v1647
    %v1649 = vpop.xlane.xlu0 %1648
    %v1650 = vsel %vm630, %v1646, -inf
    %1651 = vmax.xlane.f32.xlu0 %v1650
    %v1652 = vpop.xlane.xlu0 %1651
    %v1653 = vsub.f32 %v1645, %v1649
    %v1654 = vsub.f32 %v1646, %v1652
    %v1655 = vmul.f32 %v1653, 1.442695
    %v1656 = vpow.pop %v1655
    %v1657 = vmul.f32 %v1654, 1.442695
    %v1658 = vpow.pop %v1657
    %v1659 = vsel %vm630, %v1656, 0.0
    %1660 = vadd.xlane.f32.xlu0 %v1659
    %v1661 = vpop.xlane.xlu0 %1660
    %v1662 = vsel %vm630, %v1658, 0.0
    %1663 = vadd.xlane.f32.xlu0 %v1662
    %v1664 = vpop.xlane.xlu0 %1663
    %v1665 = vrcp.pop %v1661
    %v1666 = vrcp.pop %v1664
    %v1667 = vmul.f32 %v1656, %v1665
    %v1668 = vmul.f32 %v1658, %v1666
    %1669 = vrot.lane.b32.xlu0 %v467, 32
    %v1670 = vpop.permute.xlu0 %1669
    %v1673 = vsel %vm630, %v1667, 0
    %1675 = vmatprep.subr.mxu0 0.0
    %1676 = vmatpush1.msra.mxu0 %v1670
    %1677 = vmatprep.subr.mxu0 0.0
    %1678 = vmatpush1.msra.mxu0 0.0
    %1679 = vmatprep.subr.mxu0 0.0
    %1680 = vmatpush1.msra.mxu0 0.0
    %1681 = vmatprep.subr.mxu0 0.0
    %1682 = vmatpush1.msra.mxu0 0.0
    %1683 = vmatprep.subr.mxu0 0.0
    %1684 = vmatpush1.msra.mxu0 0.0
    %1685 = vmatprep.subr.mxu0 0.0
    %1686 = vmatpush1.msra.mxu0 0.0
    %1687 = vmatprep.subr.mxu0 0.0
    %1688 = vmatpush1.msra.mxu0 0.0
    %1689 = vmatprep.subr.mxu0 0.0
    %1690 = vmatpush1.msra.mxu0 0.0
    %1691 = vmatprep.subr.mxu0 0.0
    %1692 = vmatpush1.msra.mxu0 0.0
    %1693 = vmatprep.subr.mxu0 0.0
    %1694 = vmatpush1.msra.mxu0 0.0
    %1695 = vmatprep.subr.mxu0 0.0
    %1696 = vmatpush1.msra.mxu0 0.0
    %1697 = vmatprep.subr.mxu0 0.0
    %1698 = vmatpush1.msra.mxu0 0.0
    %1699 = vmatprep.subr.mxu0 0.0
    %1700 = vmatpush1.msra.mxu0 0.0
    %1701 = vmatprep.subr.mxu0 0.0
    %1702 = vmatpush1.msra.mxu0 0.0
    %1703 = vmatprep.subr.mxu0 0.0
    %1704 = vmatpush1.msra.mxu0 0.0
    %1705 = vmatprep.subr.mxu0 0.0
    %1706 = vmatpush1.msra.mxu0 0.0
    %1707 = vmatprep.subr.mxu0 0.0
    %1708 = vmatpush1.msra.mxu0 0.0
    %1709 = vmatprep.subr.mxu0 0.0
    %1710 = vmatpush1.msra.mxu0 0.0
    %1711 = vmatprep.subr.mxu0 0.0
    %1712 = vmatpush1.msra.mxu0 0.0
    %1713 = vmatprep.subr.mxu0 0.0
    %1714 = vmatpush1.msra.mxu0 0.0
    %1715 = vmatprep.subr.mxu0 0.0
    %1716 = vmatpush1.msra.mxu0 0.0
    %1717 = vmatprep.subr.mxu0 0.0
    %1718 = vmatpush1.msra.mxu0 0.0
    %1719 = vmatprep.subr.mxu0 0.0
    %1720 = vmatpush1.msra.mxu0 0.0
    %1721 = vmatprep.subr.mxu0 0.0
    %1722 = vmatpush1.msra.mxu0 0.0
    %1723 = vmatprep.subr.mxu0 0.0
    %1724 = vmatpush1.msra.mxu0 0.0
    %1725 = vmatprep.subr.mxu0 0.0
    %1726 = vmatpush1.msra.mxu0 0.0
    %1727 = vmatprep.subr.mxu0 0.0
    %1728 = vmatpush1.msra.mxu0 0.0
    %1729 = vmatprep.subr.mxu0 0.0
    %1730 = vmatpush1.msra.mxu0 0.0
    %1731 = vmatprep.subr.mxu0 0.0
    %1732 = vmatpush1.msra.mxu0 0.0
    %1733 = vmatprep.subr.mxu0 0.0
    %1734 = vmatpush1.msra.mxu0 0.0
    %1735 = vmatprep.subr.mxu0 0.0
    %1736 = vmatpush1.msra.mxu0 0.0
    %1737 = vmatprep.subr.mxu0 0.0
    %1738 = vmatpush1.msra.mxu0 0.0
    %1739 = vmatprep.mubr.f32.mxu0 0.0
    %1740 = vmatmul.mubr.f32.gmra.mrb[0].mxu0 %v1673
    %v1741 = vpop.f32.mrb[0].mxu0
    %v1742 = vadd.f32 0.0, %v1741
    %v1743 = vpop.f32.mrb[0].mxu0
    %1744 = vdwg.mxu0
    %1745 = vrot.lane.b32.xlu0 %v472, 32
    %v1746 = vpop.permute.xlu0 %1745
    %v1749 = vsel %vm630, %v1668, 0
    %1751 = vmatprep.subr.mxu0 0.0
    %1752 = vmatpush1.msra.mxu0 %v1746
    %1753 = vmatprep.subr.mxu0 0.0
    %1754 = vmatpush1.msra.mxu0 0.0
    %1755 = vmatprep.subr.mxu0 0.0
    %1756 = vmatpush1.msra.mxu0 0.0
    %1757 = vmatprep.subr.mxu0 0.0
    %1758 = vmatpush1.msra.mxu0 0.0
    %1759 = vmatprep.subr.mxu0 0.0
    %1760 = vmatpush1.msra.mxu0 0.0
    %1761 = vmatprep.subr.mxu0 0.0
    %1762 = vmatpush1.msra.mxu0 0.0
    %1763 = vmatprep.subr.mxu0 0.0
    %1764 = vmatpush1.msra.mxu0 0.0
    %1765 = vmatprep.subr.mxu0 0.0
    %1766 = vmatpush1.msra.mxu0 0.0
    %1767 = vmatprep.subr.mxu0 0.0
    %1768 = vmatpush1.msra.mxu0 0.0
    %1769 = vmatprep.subr.mxu0 0.0
    %1770 = vmatpush1.msra.mxu0 0.0
    %1771 = vmatprep.subr.mxu0 0.0
    %1772 = vmatpush1.msra.mxu0 0.0
    %1773 = vmatprep.subr.mxu0 0.0
    %1774 = vmatpush1.msra.mxu0 0.0
    %1775 = vmatprep.subr.mxu0 0.0
    %1776 = vmatpush1.msra.mxu0 0.0
    %1777 = vmatprep.subr.mxu0 0.0
    %1778 = vmatpush1.msra.mxu0 0.0
    %1779 = vmatprep.subr.mxu0 0.0
    %1780 = vmatpush1.msra.mxu0 0.0
    %1781 = vmatprep.subr.mxu0 0.0
    %1782 = vmatpush1.msra.mxu0 0.0
    %1783 = vmatprep.subr.mxu0 0.0
    %1784 = vmatpush1.msra.mxu0 0.0
    %1785 = vmatprep.subr.mxu0 0.0
    %1786 = vmatpush1.msra.mxu0 0.0
    %1787 = vmatprep.subr.mxu0 0.0
    %1788 = vmatpush1.msra.mxu0 0.0
    %1789 = vmatprep.subr.mxu0 0.0
    %1790 = vmatpush1.msra.mxu0 0.0
    %1791 = vmatprep.subr.mxu0 0.0
    %1792 = vmatpush1.msra.mxu0 0.0
    %1793 = vmatprep.subr.mxu0 0.0
    %1794 = vmatpush1.msra.mxu0 0.0
    %1795 = vmatprep.subr.mxu0 0.0
    %1796 = vmatpush1.msra.mxu0 0.0
    %1797 = vmatprep.subr.mxu0 0.0
    %1798 = vmatpush1.msra.mxu0 0.0
    %1799 = vmatprep.subr.mxu0 0.0
    %1800 = vmatpush1.msra.mxu0 0.0
    %1801 = vmatprep.subr.mxu0 0.0
    %1802 = vmatpush1.msra.mxu0 0.0
    %1803 = vmatprep.subr.mxu0 0.0
    %1804 = vmatpush1.msra.mxu0 0.0
    %1805 = vmatprep.subr.mxu0 0.0
    %1806 = vmatpush1.msra.mxu0 0.0
    %1807 = vmatprep.subr.mxu0 0.0
    %1808 = vmatpush1.msra.mxu0 0.0
    %1809 = vmatprep.subr.mxu0 0.0
    %1810 = vmatpush1.msra.mxu0 0.0
    %1811 = vmatprep.subr.mxu0 0.0
    %1812 = vmatpush1.msra.mxu0 0.0
    %1813 = vmatprep.subr.mxu0 0.0
    %1814 = vmatpush1.msra.mxu0 0.0
    %1815 = vmatprep.mubr.f32.mxu0 0.0
    %1816 = vmatmul.mubr.f32.gmra.mrb[0].mxu0 %v1749
    %v1817 = vpop.f32.mrb[0].mxu0
    %v1818 = vadd.f32 0.0, %v1817
    %v1819 = vpop.f32.mrb[0].mxu0
    %1820 = vdwg.mxu0
    %1823 = vrot.lane.b32.xlu0 %v1742, 96
    %v1824 = vpop.permute.xlu0 %1823
    %1825 = vrot.lane.b32.xlu0 %v1818, 96
    %v1826 = vpop.permute.xlu0 %1825
    %vm1829 = vcmask 1048320
    %1830 = vst.msk [vmem:[#allocation2] sm:$0xff] %vm1829, %v1824
    %1831 = vst.msk [vmem:[#allocation2 + $0x8] sm:$0xff] %vm1829, %v1826
    %v1832 = vld [vmem:[#allocation2] sm:$0xff]
    %v1833 = vld [vmem:[#allocation2 + $0x8] sm:$0xff]
    %v1834 = vld [vmem:[#allocation7] sm:$0xff]
    %v1835 = vld [vmem:[#allocation7 + $0x8] sm:$0xff]
    %v1836 = vld [vmem:[#allocation7 + $0x10] sm:$0xff]
    %v1837 = vld [vmem:[#allocation7 + $0x18] sm:$0xff]
    %v1838 = vld [vmem:[#allocation7 + $0x20] sm:$0xff]
    %v1839 = vld [vmem:[#allocation7 + $0x28] sm:$0xff]
    %v1840 = vld [vmem:[#allocation7 + $0x30] sm:$0xff]
    %v1841 = vld [vmem:[#allocation7 + $0x38] sm:$0xff]
    %v1842 = vld [vmem:[#allocation7 + $0x40] sm:$0xff]
    %v1843 = vld [vmem:[#allocation7 + $0x48] sm:$0xff]
    %v1844 = vld [vmem:[#allocation7 + $0x50] sm:$0xff]
    %v1845 = vld [vmem:[#allocation7 + $0x58] sm:$0xff]
    %v1846 = vld [vmem:[#allocation7 + $0x60] sm:$0xff]
    %v1847 = vld [vmem:[#allocation7 + $0x68] sm:$0xff]
    %v1848 = vld [vmem:[#allocation7 + $0x70] sm:$0xff]
    %v1849 = vld [vmem:[#allocation7 + $0x78] sm:$0xff]
    %v1850 = vlaneseq
    %v1851 = vshrl.u32 %v1850, 7
    %v1852 = vsub.s32 0, %v1851
    %v1853 = vrot.slane %v257, %v1852
    %1854 = vmatprep.subr.mxu0 0.0
    %1855 = vmatpush1.msra.mxu0 %v1834
    %1856 = vmatprep.subr.mxu0 0.0
    %1857 = vmatpush1.msra.mxu0 %v1835
    %1858 = vmatprep.subr.mxu0 0.0
    %1859 = vmatpush1.msra.mxu0 %v1836
    %1860 = vmatprep.subr.mxu0 0.0
    %1861 = vmatpush1.msra.mxu0 %v1837
    %1862 = vmatprep.subr.mxu0 0.0
    %1863 = vmatpush1.msra.mxu0 %v1838
    %1864 = vmatprep.subr.mxu0 0.0
    %1865 = vmatpush1.msra.mxu0 %v1839
    %1866 = vmatprep.subr.mxu0 0.0
    %1867 = vmatpush1.msra.mxu0 %v1840
    %1868 = vmatprep.subr.mxu0 0.0
    %1869 = vmatpush1.msra.mxu0 %v1841
    %1870 = vmatprep.subr.mxu0 0.0
    %1871 = vmatpush1.msra.mxu0 %v1842
    %1872 = vmatprep.subr.mxu0 0.0
    %1873 = vmatpush1.msra.mxu0 %v1843
    %1874 = vmatprep.subr.mxu0 0.0
    %1875 = vmatpush1.msra.mxu0 %v1844
    %1876 = vmatprep.subr.mxu0 0.0
    %1877 = vmatpush1.msra.mxu0 %v1845
    %1878 = vmatprep.subr.mxu0 0.0
    %1879 = vmatpush1.msra.mxu0 %v1846
    %1880 = vmatprep.subr.mxu0 0.0
    %1881 = vmatpush1.msra.mxu0 %v1847
    %1882 = vmatprep.subr.mxu0 0.0
    %1883 = vmatpush1.msra.mxu0 %v1848
    %1884 = vmatprep.subr.mxu0 0.0
    %1885 = vmatpush1.msra.mxu0 %v1849
    %1886 = vmatprep.subr.mxu0 0.0
    %1887 = vmatpush1.msra.mxu0 0.0
    %1888 = vmatprep.subr.mxu0 0.0
    %1889 = vmatpush1.msra.mxu0 0.0
    %1890 = vmatprep.subr.mxu0 0.0
    %1891 = vmatpush1.msra.mxu0 0.0
    %1892 = vmatprep.subr.mxu0 0.0
    %1893 = vmatpush1.msra.mxu0 0.0
    %1894 = vmatprep.subr.mxu0 0.0
    %1895 = vmatpush1.msra.mxu0 0.0
    %1896 = vmatprep.subr.mxu0 0.0
    %1897 = vmatpush1.msra.mxu0 0.0
    %1898 = vmatprep.subr.mxu0 0.0
    %1899 = vmatpush1.msra.mxu0 0.0
    %1900 = vmatprep.subr.mxu0 0.0
    %1901 = vmatpush1.msra.mxu0 0.0
    %1902 = vmatprep.subr.mxu0 0.0
    %1903 = vmatpush1.msra.mxu0 0.0
    %1904 = vmatprep.subr.mxu0 0.0
    %1905 = vmatpush1.msra.mxu0 0.0
    %1906 = vmatprep.subr.mxu0 0.0
    %1907 = vmatpush1.msra.mxu0 0.0
    %1908 = vmatprep.subr.mxu0 0.0
    %1909 = vmatpush1.msra.mxu0 0.0
    %1910 = vmatprep.subr.mxu0 0.0
    %1911 = vmatpush1.msra.mxu0 0.0
    %1912 = vmatprep.subr.mxu0 0.0
    %1913 = vmatpush1.msra.mxu0 0.0
    %1914 = vmatprep.subr.mxu0 0.0
    %1915 = vmatpush1.msra.mxu0 0.0
    %1916 = vmatprep.subr.mxu0 0.0
    %1917 = vmatpush1.msra.mxu0 0.0
    %1918 = vmatprep.mubr.f32.mxu0 0.0
    %1919 = vmatmul.mubr.f32.gmra.mrb[0].mxu0 %v1832
    %v1920 = vpop.f32.mrb[0].mxu0
    %v1921 = vadd.f32 %v1853, %v1920
    %v1922 = vpop.f32.mrb[0].mxu0
    %1923 = vmatprep.mubr.f32.mxu0 0.0
    %1924 = vmatmul.mubr.f32.gmra.mrb[0].mxu0 %v1833
    %v1925 = vpop.f32.mrb[0].mxu0
    %v1926 = vadd.f32 %v1853, %v1925
    %v1927 = vpop.f32.mrb[0].mxu0
    %1928 = vdwg.mxu0
    %v1929 = vadd.f32 %v255, %v1921
    %v1930 = vadd.f32 %v256, %v1926
    %1931 = vadd.xlane.f32.xlu0 %v1929
    %v1932 = vpop.xlane.xlu0 %1931
    %1933 = vadd.xlane.f32.xlu0 %v1930
    %v1934 = vpop.xlane.xlu0 %1933
    %v1935 = vmul.f32 %v1932, %v226
    %v1936 = vmul.f32 %v1934, %v226
    %v1937 = vsub.f32 %v1929, %v1935
    %v1938 = vsub.f32 %v1930, %v1936
    %v1939 = vmul.f32 %v1937, %v1937
    %v1940 = vmul.f32 %v1938, %v1938
    %1941 = vadd.xlane.f32.xlu0 %v1939
    %v1942 = vpop.xlane.xlu0 %1941
    %1943 = vadd.xlane.f32.xlu0 %v1940
    %v1944 = vpop.xlane.xlu0 %1943
    %v1945 = vmul.f32 %v1942, %v226
    %v1946 = vmul.f32 %v1944, %v226
    %v1947 = vadd.f32 %v1945, 1e-12
    %v1948 = vadd.f32 %v1946, 1e-12
    %v1949 = vrsqrt.pop %v1947
    %v1950 = vrsqrt.pop %v1948
    %v1951 = vmul.f32 %v1937, %v1949
    %v1952 = vmul.f32 %v1938, %v1950
    %v1953 = vlaneseq
    %v1954 = vshrl.u32 %v1953, 7
    %v1955 = vsub.s32 2, %v1954
    %v1956 = vrot.slane %v257, %v1955
    %v1957 = vmul.f32 %v1951, %v1956
    %v1958 = vmul.f32 %v1952, %v1956
    %v1959 = vlaneseq
    %v1960 = vshrl.u32 %v1959, 7
    %v1961 = vsub.s32 3, %v1960
    %v1962 = vrot.slane %v257, %v1961
    %v1963 = vadd.f32 %v1957, %v1962
    %v1964 = vadd.f32 %v1958, %v1962
    %v1965 = vld [vmem:[#allocation8] sm:$0xff]
    %v1966 = vld [vmem:[#allocation8 + $0x8] sm:$0xff]
    %v1967 = vld [vmem:[#allocation8 + $0x10] sm:$0xff]
    %v1968 = vld [vmem:[#allocation8 + $0x18] sm:$0xff]
    %v1969 = vld [vmem:[#allocation8 + $0x20] sm:$0xff]
    %v1970 = vld [vmem:[#allocation8 + $0x28] sm:$0xff]
    %v1971 = vld [vmem:[#allocation8 + $0x30] sm:$0xff]
    %v1972 = vld [vmem:[#allocation8 + $0x38] sm:$0xff]
    %v1973 = vld [vmem:[#allocation8 + $0x40] sm:$0xff]
    %v1974 = vld [vmem:[#allocation8 + $0x48] sm:$0xff]
    %v1975 = vld [vmem:[#allocation8 + $0x50] sm:$0xff]
    %v1976 = vld [vmem:[#allocation8 + $0x58] sm:$0xff]
    %v1977 = vld [vmem:[#allocation8 + $0x60] sm:$0xff]
    %v1978 = vld [vmem:[#allocation8 + $0x68] sm:$0xff]
    %v1979 = vld [vmem:[#allocation8 + $0x70] sm:$0xff]
    %v1980 = vld [vmem:[#allocation8 + $0x78] sm:$0xff]
    %v1981 = vld [vmem:[#allocation8 + $0x80] sm:$0xff]
    %v1982 = vld [vmem:[#allocation8 + $0x88] sm:$0xff]
    %v1983 = vld [vmem:[#allocation8 + $0x90] sm:$0xff]
    %v1984 = vld [vmem:[#allocation8 + $0x98] sm:$0xff]
    %v1985 = vld [vmem:[#allocation8 + $0xa0] sm:$0xff]
    %v1986 = vld [vmem:[#allocation8 + $0xa8] sm:$0xff]
    %v1987 = vld [vmem:[#allocation8 + $0xb0] sm:$0xff]
    %v1988 = vld [vmem:[#allocation8 + $0xb8] sm:$0xff]
    %v1989 = vld [vmem:[#allocation8 + $0xc0] sm:$0xff]
    %v1990 = vld [vmem:[#allocation8 + $0xc8] sm:$0xff]
    %v1991 = vld [vmem:[#allocation8 + $0xd0] sm:$0xff]
    %v1992 = vld [vmem:[#allocation8 + $0xd8] sm:$0xff]
    %v1993 = vld [vmem:[#allocation8 + $0xe0] sm:$0xff]
    %v1994 = vld [vmem:[#allocation8 + $0xe8] sm:$0xff]
    %v1995 = vld [vmem:[#allocation8 + $0xf0] sm:$0xff]
    %v1996 = vld [vmem:[#allocation8 + $0xf8] sm:$0xff]
    %v1997 = vld [vmem:[%s9] sm:$0x3]
    %v1999 = vlaneseq
    %v2000 = vshrl.u32 %v1999, 7
    %v2001 = vsub.s32 0, %v2000
    %v2002 = vrot.slane %v1997, %v2001
    %v2003 = vlaneseq
    %v2004 = vshrl.u32 %v2003, 7
    %v2005 = vsub.s32 1, %v2004
    %v2006 = vrot.slane %v1997, %v2005
    %2009 = vmatprep.subr.mxu0 %v1966
    %2010 = vmatpush1.msra.mxu0 %v1965
    %2011 = vmatprep.subr.mxu0 %v1968
    %2012 = vmatpush1.msra.mxu0 %v1967
    %2013 = vmatprep.subr.mxu0 %v1970
    %2014 = vmatpush1.msra.mxu0 %v1969
    %2015 = vmatprep.subr.mxu0 %v1972
    %2016 = vmatpush1.msra.mxu0 %v1971
    %2017 = vmatprep.subr.mxu0 %v1974
    %2018 = vmatpush1.msra.mxu0 %v1973
    %2019 = vmatprep.subr.mxu0 %v1976
    %2020 = vmatpush1.msra.mxu0 %v1975
    %2021 = vmatprep.subr.mxu0 %v1978
    %2022 = vmatpush1.msra.mxu0 %v1977
    %2023 = vmatprep.subr.mxu0 %v1980
    %2024 = vmatpush1.msra.mxu0 %v1979
    %2025 = vmatprep.subr.mxu0 %v1982
    %2026 = vmatpush1.msra.mxu0 %v1981
    %2027 = vmatprep.subr.mxu0 %v1984
    %2028 = vmatpush1.msra.mxu0 %v1983
    %2029 = vmatprep.subr.mxu0 %v1986
    %2030 = vmatpush1.msra.mxu0 %v1985
    %2031 = vmatprep.subr.mxu0 %v1988
    %2032 = vmatpush1.msra.mxu0 %v1987
    %2033 = vmatprep.subr.mxu0 %v1990
    %2034 = vmatpush1.msra.mxu0 %v1989
    %2035 = vmatprep.subr.mxu0 %v1992
    %2036 = vmatpush1.msra.mxu0 %v1991
    %2037 = vmatprep.subr.mxu0 %v1994
    %2038 = vmatpush1.msra.mxu0 %v1993
    %2039 = vmatprep.subr.mxu0 %v1996
    %2040 = vmatpush1.msra.mxu0 %v1995
    %2041 = vmatprep.subr.mxu0 0.0
    %2042 = vmatpush1.msra.mxu0 0.0
    %2043 = vmatprep.subr.mxu0 0.0
    %2044 = vmatpush1.msra.mxu0 0.0
    %2045 = vmatprep.subr.mxu0 0.0
    %2046 = vmatpush1.msra.mxu0 0.0
    %2047 = vmatprep.subr.mxu0 0.0
    %2048 = vmatpush1.msra.mxu0 0.0
    %2049 = vmatprep.subr.mxu0 0.0
    %2050 = vmatpush1.msra.mxu0 0.0
    %2051 = vmatprep.subr.mxu0 0.0
    %2052 = vmatpush1.msra.mxu0 0.0
    %2053 = vmatprep.subr.mxu0 0.0
    %2054 = vmatpush1.msra.mxu0 0.0
    %2055 = vmatprep.subr.mxu0 0.0
    %2056 = vmatpush1.msra.mxu0 0.0
    %2057 = vmatprep.subr.mxu0 0.0
    %2058 = vmatpush1.msra.mxu0 0.0
    %2059 = vmatprep.subr.mxu0 0.0
    %2060 = vmatpush1.msra.mxu0 0.0
    %2061 = vmatprep.subr.mxu0 0.0
    %2062 = vmatpush1.msra.mxu0 0.0
    %2063 = vmatprep.subr.mxu0 0.0
    %2064 = vmatpush1.msra.mxu0 0.0
    %2065 = vmatprep.subr.mxu0 0.0
    %2066 = vmatpush1.msra.mxu0 0.0
    %2067 = vmatprep.subr.mxu0 0.0
    %2068 = vmatpush1.msra.mxu0 0.0
    %2069 = vmatprep.subr.mxu0 0.0
    %2070 = vmatpush1.msra.mxu0 0.0
    %2071 = vmatprep.subr.mxu0 0.0
    %2072 = vmatpush1.msra.mxu0 0.0
    %2073 = vmatprep.mubr.f32.mxu0 0.0
    %2074 = vmatmul.mubr.f32.gmra.mrb[0].mxu0 %v1963
    %v2075 = vpop.f32.mrb[0].mxu0
    %v2076 = vadd.f32 %v2002, %v2075
    %v2077 = vpop.f32.mrb[0].mxu0
    %v2078 = vadd.f32 %v2006, %v2077
    %2079 = vmatprep.mubr.f32.mxu0 0.0
    %2080 = vmatmul.mubr.f32.gmra.mrb[0].mxu0 %v1964
    %v2081 = vpop.f32.mrb[0].mxu0
    %v2082 = vadd.f32 %v2002, %v2081
    %v2083 = vpop.f32.mrb[0].mxu0
    %v2084 = vadd.f32 %v2006, %v2083
    %2085 = vdwg.mxu0
    %v2086 = vmul.f32 %v2076, 0.5
    %v2087 = vmul.f32 %v2078, 0.5
    %v2088 = vmul.f32 %v2082, 0.5
    %v2089 = vmul.f32 %v2084, 0.5
    %v2090 = vmul.f32 %v2076, 0.044715
    %v2091 = vmul.f32 %v2078, 0.044715
    %v2092 = vmul.f32 %v2082, 0.044715
    %v2093 = vmul.f32 %v2084, 0.044715
    %v2094 = vmul.f32 %v2090, %v2076
    %v2095 = vmul.f32 %v2091, %v2078
    %v2096 = vmul.f32 %v2092, %v2082
    %v2097 = vmul.f32 %v2093, %v2084
    %v2098 = vmul.f32 %v2094, %v2076
    %v2099 = vmul.f32 %v2095, %v2078
    %v2100 = vmul.f32 %v2096, %v2082
    %v2101 = vmul.f32 %v2097, %v2084
    %v2102 = vadd.f32 %v2076, %v2098
    %v2103 = vadd.f32 %v2078, %v2099
    %v2104 = vadd.f32 %v2082, %v2100
    %v2105 = vadd.f32 %v2084, %v2101
    %v2106 = vmul.f32 %v2102, 0.7978846
    %v2107 = vmul.f32 %v2103, 0.7978846
    %v2108 = vmul.f32 %v2104, 0.7978846
    %v2109 = vmul.f32 %v2105, 0.7978846
    %v2110 = vtanh.pop %v2106
    %v2111 = vtanh.pop %v2107
    %v2112 = vtanh.pop %v2108
    %v2113 = vtanh.pop %v2109
    %v2114 = vadd.f32 %v2110, 1.0
    %v2115 = vadd.f32 %v2111, 1.0
    %v2116 = vadd.f32 %v2112, 1.0
    %v2117 = vadd.f32 %v2113, 1.0
    %v2118 = vmul.f32 %v2086, %v2114
    %v2119 = vmul.f32 %v2087, %v2115
    %v2120 = vmul.f32 %v2088, %v2116
    %v2121 = vmul.f32 %v2089, %v2117
    %v2122 = vld [vmem:[#allocation10] sm:$0xff]
    %v2123 = vld [vmem:[#allocation10 + $0x8] sm:$0xff]
    %v2124 = vld [vmem:[#allocation10 + $0x10] sm:$0xff]
    %v2125 = vld [vmem:[#allocation10 + $0x18] sm:$0xff]
    %v2126 = vld [vmem:[#allocation10 + $0x20] sm:$0xff]
    %v2127 = vld [vmem:[#allocation10 + $0x28] sm:$0xff]
    %v2128 = vld [vmem:[#allocation10 + $0x30] sm:$0xff]
    %v2129 = vld [vmem:[#allocation10 + $0x38] sm:$0xff]
    %v2130 = vld [vmem:[#allocation10 + $0x40] sm:$0xff]
    %v2131 = vld [vmem:[#allocation10 + $0x48] sm:$0xff]
    %v2132 = vld [vmem:[#allocation10 + $0x50] sm:$0xff]
    %v2133 = vld [vmem:[#allocation10 + $0x58] sm:$0xff]
    %v2134 = vld [vmem:[#allocation10 + $0x60] sm:$0xff]
    %v2135 = vld [vmem:[#allocation10 + $0x68] sm:$0xff]
    %v2136 = vld [vmem:[#allocation10 + $0x70] sm:$0xff]
    %v2137 = vld [vmem:[#allocation10 + $0x78] sm:$0xff]
    %v2138 = vld [vmem:[#allocation10 + $0x80] sm:$0xff]
    %v2139 = vld [vmem:[#allocation10 + $0x88] sm:$0xff]
    %v2140 = vld [vmem:[#allocation10 + $0x90] sm:$0xff]
    %v2141 = vld [vmem:[#allocation10 + $0x98] sm:$0xff]
    %v2142 = vld [vmem:[#allocation10 + $0xa0] sm:$0xff]
    %v2143 = vld [vmem:[#allocation10 + $0xa8] sm:$0xff]
    %v2144 = vld [vmem:[#allocation10 + $0xb0] sm:$0xff]
    %v2145 = vld [vmem:[#allocation10 + $0xb8] sm:$0xff]
    %v2146 = vld [vmem:[#allocation10 + $0xc0] sm:$0xff]
    %v2147 = vld [vmem:[#allocation10 + $0xc8] sm:$0xff]
    %v2148 = vld [vmem:[#allocation10 + $0xd0] sm:$0xff]
    %v2149 = vld [vmem:[#allocation10 + $0xd8] sm:$0xff]
    %v2150 = vld [vmem:[#allocation10 + $0xe0] sm:$0xff]
    %v2151 = vld [vmem:[#allocation10 + $0xe8] sm:$0xff]
    %v2152 = vld [vmem:[#allocation10 + $0xf0] sm:$0xff]
    %v2153 = vld [vmem:[#allocation10 + $0xf8] sm:$0xff]
    %v2154 = vlaneseq
    %v2155 = vshrl.u32 %v2154, 7
    %v2156 = vsub.s32 1, %v2155
    %v2157 = vrot.slane %v257, %v2156
    %2158 = vmatprep.subr.mxu0 0.0
    %2159 = vmatpush1.msra.mxu0 %v2122
    %2160 = vmatprep.subr.mxu0 0.0
    %2161 = vmatpush1.msra.mxu0 %v2123
    %2162 = vmatprep.subr.mxu0 0.0
    %2163 = vmatpush1.msra.mxu0 %v2124
    %2164 = vmatprep.subr.mxu0 0.0
    %2165 = vmatpush1.msra.mxu0 %v2125
    %2166 = vmatprep.subr.mxu0 0.0
    %2167 = vmatpush1.msra.mxu0 %v2126
    %2168 = vmatprep.subr.mxu0 0.0
    %2169 = vmatpush1.msra.mxu0 %v2127
    %2170 = vmatprep.subr.mxu0 0.0
    %2171 = vmatpush1.msra.mxu0 %v2128
    %2172 = vmatprep.subr.mxu0 0.0
    %2173 = vmatpush1.msra.mxu0 %v2129
    %2174 = vmatprep.subr.mxu0 0.0
    %2175 = vmatpush1.msra.mxu0 %v2130
    %2176 = vmatprep.subr.mxu0 0.0
    %2177 = vmatpush1.msra.mxu0 %v2131
    %2178 = vmatprep.subr.mxu0 0.0
    %2179 = vmatpush1.msra.mxu0 %v2132
    %2180 = vmatprep.subr.mxu0 0.0
    %2181 = vmatpush1.msra.mxu0 %v2133
    %2182 = vmatprep.subr.mxu0 0.0
    %2183 = vmatpush1.msra.mxu0 %v2134
    %2184 = vmatprep.subr.mxu0 0.0
    %2185 = vmatpush1.msra.mxu0 %v2135
    %2186 = vmatprep.subr.mxu0 0.0
    %2187 = vmatpush1.msra.mxu0 %v2136
    %2188 = vmatprep.subr.mxu0 0.0
    %2189 = vmatpush1.msra.mxu0 %v2137
    %2190 = vmatprep.subr.mxu0 0.0
    %2191 = vmatpush1.msra.mxu0 %v2138
    %2192 = vmatprep.subr.mxu0 0.0
    %2193 = vmatpush1.msra.mxu0 %v2139
    %2194 = vmatprep.subr.mxu0 0.0
    %2195 = vmatpush1.msra.mxu0 %v2140
    %2196 = vmatprep.subr.mxu0 0.0
    %2197 = vmatpush1.msra.mxu0 %v2141
    %2198 = vmatprep.subr.mxu0 0.0
    %2199 = vmatpush1.msra.mxu0 %v2142
    %2200 = vmatprep.subr.mxu0 0.0
    %2201 = vmatpush1.msra.mxu0 %v2143
    %2202 = vmatprep.subr.mxu0 0.0
    %2203 = vmatpush1.msra.mxu0 %v2144
    %2204 = vmatprep.subr.mxu0 0.0
    %2205 = vmatpush1.msra.mxu0 %v2145
    %2206 = vmatprep.subr.mxu0 0.0
    %2207 = vmatpush1.msra.mxu0 %v2146
    %2208 = vmatprep.subr.mxu0 0.0
    %2209 = vmatpush1.msra.mxu0 %v2147
    %2210 = vmatprep.subr.mxu0 0.0
    %2211 = vmatpush1.msra.mxu0 %v2148
    %2212 = vmatprep.subr.mxu0 0.0
    %2213 = vmatpush1.msra.mxu0 %v2149
    %2214 = vmatprep.subr.mxu0 0.0
    %2215 = vmatpush1.msra.mxu0 %v2150
    %2216 = vmatprep.subr.mxu0 0.0
    %2217 = vmatpush1.msra.mxu0 %v2151
    %2218 = vmatprep.subr.mxu0 0.0
    %2219 = vmatpush1.msra.mxu0 %v2152
    %2220 = vmatprep.subr.mxu0 0.0
    %2221 = vmatpush1.msra.mxu0 %v2153
    %2222 = vmatprep.mubr.f32.mxu0 %v2119
    %2223 = vmatmul.mubr.f32.gmra.mrb[0].mxu0 %v2118
    %v2224 = vpop.f32.mrb[0].mxu0
    %v2225 = vadd.f32 %v2157, %v2224
    %v2226 = vpop.f32.mrb[0].mxu0
    %2227 = vmatprep.mubr.f32.mxu0 %v2121
    %2228 = vmatmul.mubr.f32.gmra.mrb[0].mxu0 %v2120
    %v2229 = vpop.f32.mrb[0].mxu0
    %v2230 = vadd.f32 %v2157, %v2229
    %v2231 = vpop.f32.mrb[0].mxu0
    %2232 = vdwg.mxu0
    %v2233 = vadd.f32 %v1963, %v2225
    %v2234 = vadd.f32 %v1964, %v2230
    %2235 = vadd.xlane.f32.xlu0 %v2233
    %v2236 = vpop.xlane.xlu0 %2235
    %2237 = vadd.xlane.f32.xlu0 %v2234
    %v2238 = vpop.xlane.xlu0 %2237
    %v2239 = vmul.f32 %v2236, %v226
    %v2240 = vmul.f32 %v2238, %v226
    %v2241 = vsub.f32 %v2233, %v2239
    %v2242 = vsub.f32 %v2234, %v2240
    %v2243 = vmul.f32 %v2241, %v2241
    %v2244 = vmul.f32 %v2242, %v2242
    %2245 = vadd.xlane.f32.xlu0 %v2243
    %v2246 = vpop.xlane.xlu0 %2245
    %2247 = vadd.xlane.f32.xlu0 %v2244
    %v2248 = vpop.xlane.xlu0 %2247
    %v2249 = vmul.f32 %v2246, %v226
    %v2250 = vmul.f32 %v2248, %v226
    %v2251 = vadd.f32 %v2249, 1e-12
    %v2252 = vadd.f32 %v2250, 1e-12
    %v2253 = vrsqrt.pop %v2251
    %v2254 = vrsqrt.pop %v2252
    %v2255 = vmul.f32 %v2241, %v2253
    %v2256 = vmul.f32 %v2242, %v2254
    %v2257 = vlaneseq
    %v2258 = vshrl.u32 %v2257, 7
    %v2259 = vsub.s32 4, %v2258
    %v2260 = vrot.slane %v257, %v2259
    %v2261 = vmul.f32 %v2255, %v2260
    %v2262 = vmul.f32 %v2256, %v2260
    %v2263 = vlaneseq
    %v2264 = vshrl.u32 %v2263, 7
    %v2265 = vsub.s32 5, %v2264
    %v2266 = vrot.slane %v257, %v2265
    %v2267 = vadd.f32 %v2261, %v2266
    %v2268 = vadd.f32 %v2262, %v2266
    %s2269 = scalar_lea.vmem %s11, 8
    %v2270 = vld [vmem:[%s2269] sm:$0x3f]
    %s2271 = scalar_lea.vmem [#allocation5], 384
    %v2272 = vld [vmem:[%s2271] sm:$0xff]
    %v2273 = vld [vmem:[%s2271 + $0x8] sm:$0xff]
    %v2274 = vld [vmem:[%s2271 + $0x10] sm:$0xff]
    %v2275 = vld [vmem:[%s2271 + $0x18] sm:$0xff]
    %v2276 = vld [vmem:[%s2271 + $0x20] sm:$0xff]
    %v2277 = vld [vmem:[%s2271 + $0x28] sm:$0xff]
    %v2278 = vld [vmem:[%s2271 + $0x30] sm:$0xff]
    %v2279 = vld [vmem:[%s2271 + $0x38] sm:$0xff]
    %v2280 = vld [vmem:[%s2271 + $0x40] sm:$0xff]
    %v2281 = vld [vmem:[%s2271 + $0x48] sm:$0xff]
    %v2282 = vld [vmem:[%s2271 + $0x50] sm:$0xff]
    %v2283 = vld [vmem:[%s2271 + $0x58] sm:$0xff]
    %v2284 = vld [vmem:[%s2271 + $0x60] sm:$0xff]
    %v2285 = vld [vmem:[%s2271 + $0x68] sm:$0xff]
    %v2286 = vld [vmem:[%s2271 + $0x70] sm:$0xff]
    %v2287 = vld [vmem:[%s2271 + $0x78] sm:$0xff]
    %v2288 = vld [vmem:[%s2271 + $0x80] sm:$0xff]
    %v2289 = vld [vmem:[%s2271 + $0x88] sm:$0xff]
    %v2290 = vld [vmem:[%s2271 + $0x90] sm:$0xff]
    %v2291 = vld [vmem:[%s2271 + $0x98] sm:$0xff]
    %v2292 = vld [vmem:[%s2271 + $0xa0] sm:$0xff]
    %v2293 = vld [vmem:[%s2271 + $0xa8] sm:$0xff]
    %v2294 = vld [vmem:[%s2271 + $0xb0] sm:$0xff]
    %v2295 = vld [vmem:[%s2271 + $0xb8] sm:$0xff]
    %v2296 = vld [vmem:[%s2271 + $0xc0] sm:$0xff]
    %v2297 = vld [vmem:[%s2271 + $0xc8] sm:$0xff]
    %v2298 = vld [vmem:[%s2271 + $0xd0] sm:$0xff]
    %v2299 = vld [vmem:[%s2271 + $0xd8] sm:$0xff]
    %v2300 = vld [vmem:[%s2271 + $0xe0] sm:$0xff]
    %v2301 = vld [vmem:[%s2271 + $0xe8] sm:$0xff]
    %v2302 = vld [vmem:[%s2271 + $0xf0] sm:$0xff]
    %v2303 = vld [vmem:[%s2271 + $0xf8] sm:$0xff]
    %v2304 = vld [vmem:[%s2271 + $0x100] sm:$0xff]
    %v2305 = vld [vmem:[%s2271 + $0x108] sm:$0xff]
    %v2306 = vld [vmem:[%s2271 + $0x110] sm:$0xff]
    %v2307 = vld [vmem:[%s2271 + $0x118] sm:$0xff]
    %v2308 = vld [vmem:[%s2271 + $0x120] sm:$0xff]
    %v2309 = vld [vmem:[%s2271 + $0x128] sm:$0xff]
    %v2310 = vld [vmem:[%s2271 + $0x130] sm:$0xff]
    %v2311 = vld [vmem:[%s2271 + $0x138] sm:$0xff]
    %v2312 = vld [vmem:[%s2271 + $0x140] sm:$0xff]
    %v2313 = vld [vmem:[%s2271 + $0x148] sm:$0xff]
    %v2314 = vld [vmem:[%s2271 + $0x150] sm:$0xff]
    %v2315 = vld [vmem:[%s2271 + $0x158] sm:$0xff]
    %v2316 = vld [vmem:[%s2271 + $0x160] sm:$0xff]
    %v2317 = vld [vmem:[%s2271 + $0x168] sm:$0xff]
    %v2318 = vld [vmem:[%s2271 + $0x170] sm:$0xff]
    %v2319 = vld [vmem:[%s2271 + $0x178] sm:$0xff]
    %s2320 = scalar_lea.vmem %s6, 3
    %v2321 = vld [vmem:[%s2320] sm:$0x7]
    %v2323 = vlaneseq
    %v2324 = vshrl.u32 %v2323, 7
    %v2325 = vsub.s32 0, %v2324
    %v2326 = vrot.slane %v2321, %v2325
    %v2327 = vlaneseq
    %v2328 = vshrl.u32 %v2327, 7
    %v2329 = vsub.s32 1, %v2328
    %v2330 = vrot.slane %v2321, %v2329
    %v2331 = vlaneseq
    %v2332 = vshrl.u32 %v2331, 7
    %v2333 = vsub.s32 2, %v2332
    %v2334 = vrot.slane %v2321, %v2333
    %2338 = vmatprep.subr.mxu0 %v2273
    %2339 = vmatpush1.msra.mxu0 %v2272
    %2340 = vmatprep.subr.mxu0 %v2276
    %2341 = vmatpush1.msra.mxu0 %v2275
    %2342 = vmatprep.subr.mxu0 %v2279
    %2343 = vmatpush1.msra.mxu0 %v2278
    %2344 = vmatprep.subr.mxu0 %v2282
    %2345 = vmatpush1.msra.mxu0 %v2281
    %2346 = vmatprep.subr.mxu0 %v2285
    %2347 = vmatpush1.msra.mxu0 %v2284
    %2348 = vmatprep.subr.mxu0 %v2288
    %2349 = vmatpush1.msra.mxu0 %v2287
    %2350 = vmatprep.subr.mxu0 %v2291
    %2351 = vmatpush1.msra.mxu0 %v2290
    %2352 = vmatprep.subr.mxu0 %v2294
    %2353 = vmatpush1.msra.mxu0 %v2293
    %2354 = vmatprep.subr.mxu0 %v2297
    %2355 = vmatpush1.msra.mxu0 %v2296
    %2356 = vmatprep.subr.mxu0 %v2300
    %2357 = vmatpush1.msra.mxu0 %v2299
    %2358 = vmatprep.subr.mxu0 %v2303
    %2359 = vmatpush1.msra.mxu0 %v2302
    %2360 = vmatprep.subr.mxu0 %v2306
    %2361 = vmatpush1.msra.mxu0 %v2305
    %2362 = vmatprep.subr.mxu0 %v2309
    %2363 = vmatpush1.msra.mxu0 %v2308
    %2364 = vmatprep.subr.mxu0 %v2312
    %2365 = vmatpush1.msra.mxu0 %v2311
    %2366 = vmatprep.subr.mxu0 %v2315
    %2367 = vmatpush1.msra.mxu0 %v2314
    %2368 = vmatprep.subr.mxu0 %v2318
    %2369 = vmatpush1.msra.mxu0 %v2317
    %2370 = vmatprep.subr.mxu0 0.0
    %2371 = vmatpush1.msra.mxu0 0.0
    %2372 = vmatprep.subr.mxu0 0.0
    %2373 = vmatpush1.msra.mxu0 0.0
    %2374 = vmatprep.subr.mxu0 0.0
    %2375 = vmatpush1.msra.mxu0 0.0
    %2376 = vmatprep.subr.mxu0 0.0
    %2377 = vmatpush1.msra.mxu0 0.0
    %2378 = vmatprep.subr.mxu0 0.0
    %2379 = vmatpush1.msra.mxu0 0.0
    %2380 = vmatprep.subr.mxu0 0.0
    %2381 = vmatpush1.msra.mxu0 0.0
    %2382 = vmatprep.subr.mxu0 0.0
    %2383 = vmatpush1.msra.mxu0 0.0
    %2384 = vmatprep.subr.mxu0 0.0
    %2385 = vmatpush1.msra.mxu0 0.0
    %2386 = vmatprep.subr.mxu0 0.0
    %2387 = vmatpush1.msra.mxu0 0.0
    %2388 = vmatprep.subr.mxu0 0.0
    %2389 = vmatpush1.msra.mxu0 0.0
    %2390 = vmatprep.subr.mxu0 0.0
    %2391 = vmatpush1.msra.mxu0 0.0
    %2392 = vmatprep.subr.mxu0 0.0
    %2393 = vmatpush1.msra.mxu0 0.0
    %2394 = vmatprep.subr.mxu0 0.0
    %2395 = vmatpush1.msra.mxu0 0.0
    %2396 = vmatprep.subr.mxu0 0.0
    %2397 = vmatpush1.msra.mxu0 0.0
    %2398 = vmatprep.subr.mxu0 0.0
    %2399 = vmatpush1.msra.mxu0 0.0
    %2400 = vmatprep.subr.mxu0 0.0
    %2401 = vmatpush1.msra.mxu0 0.0
    %2402 = vmatprep.mubr.f32.mxu0 0.0
    %2403 = vmatmul.mubr.f32.gmra.mrb[0].mxu0 %v2267
    %v2404 = vpop.f32.mrb[0].mxu0
    %v2405 = vadd.f32 %v2326, %v2404
    %v2406 = vpop.f32.mrb[0].mxu0
    %v2407 = vadd.f32 %v2330, %v2406
    %2408 = vmatprep.mubr.f32.mxu0 0.0
    %2409 = vmatmul.mubr.f32.gmra.mrb[0].mxu0 %v2268
    %v2410 = vpop.f32.mrb[0].mxu0
    %v2411 = vadd.f32 %v2326, %v2410
    %v2412 = vpop.f32.mrb[0].mxu0
    %v2413 = vadd.f32 %v2330, %v2412
    %2414 = vdwg.mxu0
    %2415 = vmatprep.subr.mxu0 0.0
    %2416 = vmatpush1.msra.mxu0 %v2274
    %2417 = vmatprep.subr.mxu0 0.0
    %2418 = vmatpush1.msra.mxu0 %v2277
    %2419 = vmatprep.subr.mxu0 0.0
    %2420 = vmatpush1.msra.mxu0 %v2280
    %2421 = vmatprep.subr.mxu0 0.0
    %2422 = vmatpush1.msra.mxu0 %v2283
    %2423 = vmatprep.subr.mxu0 0.0
    %2424 = vmatpush1.msra.mxu0 %v2286
    %2425 = vmatprep.subr.mxu0 0.0
    %2426 = vmatpush1.msra.mxu0 %v2289
    %2427 = vmatprep.subr.mxu0 0.0
    %2428 = vmatpush1.msra.mxu0 %v2292
    %2429 = vmatprep.subr.mxu0 0.0
    %2430 = vmatpush1.msra.mxu0 %v2295
    %2431 = vmatprep.subr.mxu0 0.0
    %2432 = vmatpush1.msra.mxu0 %v2298
    %2433 = vmatprep.subr.mxu0 0.0
    %2434 = vmatpush1.msra.mxu0 %v2301
    %2435 = vmatprep.subr.mxu0 0.0
    %2436 = vmatpush1.msra.mxu0 %v2304
    %2437 = vmatprep.subr.mxu0 0.0
    %2438 = vmatpush1.msra.mxu0 %v2307
    %2439 = vmatprep.subr.mxu0 0.0
    %2440 = vmatpush1.msra.mxu0 %v2310
    %2441 = vmatprep.subr.mxu0 0.0
    %2442 = vmatpush1.msra.mxu0 %v2313
    %2443 = vmatprep.subr.mxu0 0.0
    %2444 = vmatpush1.msra.mxu0 %v2316
    %2445 = vmatprep.subr.mxu0 0.0
    %2446 = vmatpush1.msra.mxu0 %v2319
    %2447 = vmatprep.subr.mxu0 0.0
    %2448 = vmatpush1.msra.mxu0 0.0
    %2449 = vmatprep.subr.mxu0 0.0
    %2450 = vmatpush1.msra.mxu0 0.0
    %2451 = vmatprep.subr.mxu0 0.0
    %2452 = vmatpush1.msra.mxu0 0.0
    %2453 = vmatprep.subr.mxu0 0.0
    %2454 = vmatpush1.msra.mxu0 0.0
    %2455 = vmatprep.subr.mxu0 0.0
    %2456 = vmatpush1.msra.mxu0 0.0
    %2457 = vmatprep.subr.mxu0 0.0
    %2458 = vmatpush1.msra.mxu0 0.0
    %2459 = vmatprep.subr.mxu0 0.0
    %2460 = vmatpush1.msra.mxu0 0.0
    %2461 = vmatprep.subr.mxu0 0.0
    %2462 = vmatpush1.msra.mxu0 0.0
    %2463 = vmatprep.subr.mxu0 0.0
    %2464 = vmatpush1.msra.mxu0 0.0
    %2465 = vmatprep.subr.mxu0 0.0
    %2466 = vmatpush1.msra.mxu0 0.0
    %2467 = vmatprep.subr.mxu0 0.0
    %2468 = vmatpush1.msra.mxu0 0.0
    %2469 = vmatprep.subr.mxu0 0.0
    %2470 = vmatpush1.msra.mxu0 0.0
    %2471 = vmatprep.subr.mxu0 0.0
    %2472 = vmatpush1.msra.mxu0 0.0
    %2473 = vmatprep.subr.mxu0 0.0
    %2474 = vmatpush1.msra.mxu0 0.0
    %2475 = vmatprep.subr.mxu0 0.0
    %2476 = vmatpush1.msra.mxu0 0.0
    %2477 = vmatprep.subr.mxu0 0.0
    %2478 = vmatpush1.msra.mxu0 0.0
    %2479 = vmatprep.mubr.f32.mxu0 0.0
    %2480 = vmatmul.mubr.f32.gmra.mrb[0].mxu0 %v2267
    %v2481 = vpop.f32.mrb[0].mxu0
    %v2482 = vadd.f32 %v2334, %v2481
    %v2483 = vpop.f32.mrb[0].mxu0
    %2484 = vmatprep.mubr.f32.mxu0 0.0
    %2485 = vmatmul.mubr.f32.gmra.mrb[0].mxu0 %v2268
    %v2486 = vpop.f32.mrb[0].mxu0
    %v2487 = vadd.f32 %v2334, %v2486
    %v2488 = vpop.f32.mrb[0].mxu0
    %2489 = vdwg.mxu0
    %v2491 = vsel %vm475, %v2405, 0
    %v2494 = vsel %vm475, %v2407, 0
    %2496 = vmatprep.subr.mxu0 0.0
    %2497 = vmatpush1.xpose.msra.mxu0 %v2494
    %2498 = vmatprep.subr.mxu0 0.0
    %2499 = vmatpush1.xpose.msra.mxu0 0.0
    %2500 = vmatprep.subr.mxu0 0.0
    %2501 = vmatpush1.xpose.msra.mxu0 0.0
    %2502 = vmatprep.subr.mxu0 0.0
    %2503 = vmatpush1.xpose.msra.mxu0 0.0
    %2504 = vmatprep.subr.mxu0 0.0
    %2505 = vmatpush1.xpose.msra.mxu0 0.0
    %2506 = vmatprep.subr.mxu0 0.0
    %2507 = vmatpush1.xpose.msra.mxu0 0.0
    %2508 = vmatprep.subr.mxu0 0.0
    %2509 = vmatpush1.xpose.msra.mxu0 0.0
    %2510 = vmatprep.subr.mxu0 0.0
    %2511 = vmatpush1.xpose.msra.mxu0 0.0
    %2512 = vmatprep.subr.mxu0 0.0
    %2513 = vmatpush1.xpose.msra.mxu0 0.0
    %2514 = vmatprep.subr.mxu0 0.0
    %2515 = vmatpush1.xpose.msra.mxu0 0.0
    %2516 = vmatprep.subr.mxu0 0.0
    %2517 = vmatpush1.xpose.msra.mxu0 0.0
    %2518 = vmatprep.subr.mxu0 0.0
    %2519 = vmatpush1.xpose.msra.mxu0 0.0
    %2520 = vmatprep.subr.mxu0 0.0
    %2521 = vmatpush1.xpose.msra.mxu0 0.0
    %2522 = vmatprep.subr.mxu0 0.0
    %2523 = vmatpush1.xpose.msra.mxu0 0.0
    %2524 = vmatprep.subr.mxu0 0.0
    %2525 = vmatpush1.xpose.msra.mxu0 0.0
    %2526 = vmatprep.subr.mxu0 0.0
    %2527 = vmatpush1.xpose.msra.mxu0 0.0
    %2528 = vmatprep.subr.mxu0 0.0
    %2529 = vmatpush1.xpose.msra.mxu0 0.0
    %2530 = vmatprep.subr.mxu0 0.0
    %2531 = vmatpush1.xpose.msra.mxu0 0.0
    %2532 = vmatprep.subr.mxu0 0.0
    %2533 = vmatpush1.xpose.msra.mxu0 0.0
    %2534 = vmatprep.subr.mxu0 0.0
    %2535 = vmatpush1.xpose.msra.mxu0 0.0
    %2536 = vmatprep.subr.mxu0 0.0
    %2537 = vmatpush1.xpose.msra.mxu0 0.0
    %2538 = vmatprep.subr.mxu0 0.0
    %2539 = vmatpush1.xpose.msra.mxu0 0.0
    %2540 = vmatprep.subr.mxu0 0.0
    %2541 = vmatpush1.xpose.msra.mxu0 0.0
    %2542 = vmatprep.subr.mxu0 0.0
    %2543 = vmatpush1.xpose.msra.mxu0 0.0
    %2544 = vmatprep.subr.mxu0 0.0
    %2545 = vmatpush1.xpose.msra.mxu0 0.0
    %2546 = vmatprep.subr.mxu0 0.0
    %2547 = vmatpush1.xpose.msra.mxu0 0.0
    %2548 = vmatprep.subr.mxu0 0.0
    %2549 = vmatpush1.xpose.msra.mxu0 0.0
    %2550 = vmatprep.subr.mxu0 0.0
    %2551 = vmatpush1.xpose.msra.mxu0 0.0
    %2552 = vmatprep.subr.mxu0 0.0
    %2553 = vmatpush1.xpose.msra.mxu0 0.0
    %2554 = vmatprep.subr.mxu0 0.0
    %2555 = vmatpush1.xpose.msra.mxu0 0.0
    %2556 = vmatprep.subr.mxu0 0.0
    %2557 = vmatpush1.xpose.msra.mxu0 0.0
    %2558 = vmatprep.subr.mxu0 0.0
    %2559 = vmatpush1.xpose.msra.mxu0 0.0
    %2560 = vmatprep.mubr.f32.mxu0 0.0
    %2561 = vmatmul.mubr.f32.gmra.mrb[0].mxu0 %v2491
    %v2562 = vpop.f32.mrb[0].mxu0
    %v2563 = vadd.f32 0.0, %v2562
    %v2564 = vpop.f32.mrb[0].mxu0
    %2565 = vdwg.mxu0
    %v2567 = vsel %vm475, %v2411, 0
    %v2570 = vsel %vm475, %v2413, 0
    %2572 = vmatprep.subr.mxu0 0.0
    %2573 = vmatpush1.xpose.msra.mxu0 %v2570
    %2574 = vmatprep.subr.mxu0 0.0
    %2575 = vmatpush1.xpose.msra.mxu0 0.0
    %2576 = vmatprep.subr.mxu0 0.0
    %2577 = vmatpush1.xpose.msra.mxu0 0.0
    %2578 = vmatprep.subr.mxu0 0.0
    %2579 = vmatpush1.xpose.msra.mxu0 0.0
    %2580 = vmatprep.subr.mxu0 0.0
    %2581 = vmatpush1.xpose.msra.mxu0 0.0
    %2582 = vmatprep.subr.mxu0 0.0
    %2583 = vmatpush1.xpose.msra.mxu0 0.0
    %2584 = vmatprep.subr.mxu0 0.0
    %2585 = vmatpush1.xpose.msra.mxu0 0.0
    %2586 = vmatprep.subr.mxu0 0.0
    %2587 = vmatpush1.xpose.msra.mxu0 0.0
    %2588 = vmatprep.subr.mxu0 0.0
    %2589 = vmatpush1.xpose.msra.mxu0 0.0
    %2590 = vmatprep.subr.mxu0 0.0
    %2591 = vmatpush1.xpose.msra.mxu0 0.0
    %2592 = vmatprep.subr.mxu0 0.0
    %2593 = vmatpush1.xpose.msra.mxu0 0.0
    %2594 = vmatprep.subr.mxu0 0.0
    %2595 = vmatpush1.xpose.msra.mxu0 0.0
    %2596 = vmatprep.subr.mxu0 0.0
    %2597 = vmatpush1.xpose.msra.mxu0 0.0
    %2598 = vmatprep.subr.mxu0 0.0
    %2599 = vmatpush1.xpose.msra.mxu0 0.0
    %2600 = vmatprep.subr.mxu0 0.0
    %2601 = vmatpush1.xpose.msra.mxu0 0.0
    %2602 = vmatprep.subr.mxu0 0.0
    %2603 = vmatpush1.xpose.msra.mxu0 0.0
    %2604 = vmatprep.subr.mxu0 0.0
    %2605 = vmatpush1.xpose.msra.mxu0 0.0
    %2606 = vmatprep.subr.mxu0 0.0
    %2607 = vmatpush1.xpose.msra.mxu0 0.0
    %2608 = vmatprep.subr.mxu0 0.0
    %2609 = vmatpush1.xpose.msra.mxu0 0.0
    %2610 = vmatprep.subr.mxu0 0.0
    %2611 = vmatpush1.xpose.msra.mxu0 0.0
    %2612 = vmatprep.subr.mxu0 0.0
    %2613 = vmatpush1.xpose.msra.mxu0 0.0
    %2614 = vmatprep.subr.mxu0 0.0
    %2615 = vmatpush1.xpose.msra.mxu0 0.0
    %2616 = vmatprep.subr.mxu0 0.0
    %2617 = vmatpush1.xpose.msra.mxu0 0.0
    %2618 = vmatprep.subr.mxu0 0.0
    %2619 = vmatpush1.xpose.msra.mxu0 0.0
    %2620 = vmatprep.subr.mxu0 0.0
    %2621 = vmatpush1.xpose.msra.mxu0 0.0
    %2622 = vmatprep.subr.mxu0 0.0
    %2623 = vmatpush1.xpose.msra.mxu0 0.0
    %2624 = vmatprep.subr.mxu0 0.0
    %2625 = vmatpush1.xpose.msra.mxu0 0.0
    %2626 = vmatprep.subr.mxu0 0.0
    %2627 = vmatpush1.xpose.msra.mxu0 0.0
    %2628 = vmatprep.subr.mxu0 0.0
    %2629 = vmatpush1.xpose.msra.mxu0 0.0
    %2630 = vmatprep.subr.mxu0 0.0
    %2631 = vmatpush1.xpose.msra.mxu0 0.0
    %2632 = vmatprep.subr.mxu0 0.0
    %2633 = vmatpush1.xpose.msra.mxu0 0.0
    %2634 = vmatprep.subr.mxu0 0.0
    %2635 = vmatpush1.xpose.msra.mxu0 0.0
    %2636 = vmatprep.mubr.f32.mxu0 0.0
    %2637 = vmatmul.mubr.f32.gmra.mrb[0].mxu0 %v2567
    %v2638 = vpop.f32.mrb[0].mxu0
    %v2639 = vadd.f32 0.0, %v2638
    %v2640 = vpop.f32.mrb[0].mxu0
    %2641 = vdwg.mxu0
    %v2642 = vmul.f32 %v2563, 0.17677669
    %v2643 = vmul.f32 %v2639, 0.17677669
    %v2644 = vsel %vm630, %v2642, -inf
    %2645 = vmax.xlane.f32.xlu0 %v2644
    %v2646 = vpop.xlane.xlu0 %2645
    %v2647 = vsel %vm630, %v2643, -inf
    %2648 = vmax.xlane.f32.xlu0 %v2647
    %v2649 = vpop.xlane.xlu0 %2648
    %v2650 = vsub.f32 %v2642, %v2646
    %v2651 = vsub.f32 %v2643, %v2649
    %v2652 = vmul.f32 %v2650, 1.442695
    %v2653 = vpow.pop %v2652
    %v2654 = vmul.f32 %v2651, 1.442695
    %v2655 = vpow.pop %v2654
    %v2656 = vsel %vm630, %v2653, 0.0
    %2657 = vadd.xlane.f32.xlu0 %v2656
    %v2658 = vpop.xlane.xlu0 %2657
    %v2659 = vsel %vm630, %v2655, 0.0
    %2660 = vadd.xlane.f32.xlu0 %v2659
    %v2661 = vpop.xlane.xlu0 %2660
    %v2662 = vrcp.pop %v2658
    %v2663 = vrcp.pop %v2661
    %v2664 = vmul.f32 %v2653, %v2662
    %v2665 = vmul.f32 %v2655, %v2663
    %v2667 = vsel %vm630, %v2664, 0
    %2669 = vmatprep.subr.mxu0 0.0
    %2670 = vmatpush1.msra.mxu0 %v2482
    %2671 = vmatprep.subr.mxu0 0.0
    %2672 = vmatpush1.msra.mxu0 0.0
    %2673 = vmatprep.subr.mxu0 0.0
    %2674 = vmatpush1.msra.mxu0 0.0
    %2675 = vmatprep.subr.mxu0 0.0
    %2676 = vmatpush1.msra.mxu0 0.0
    %2677 = vmatprep.subr.mxu0 0.0
    %2678 = vmatpush1.msra.mxu0 0.0
    %2679 = vmatprep.subr.mxu0 0.0
    %2680 = vmatpush1.msra.mxu0 0.0
    %2681 = vmatprep.subr.mxu0 0.0
    %2682 = vmatpush1.msra.mxu0 0.0
    %2683 = vmatprep.subr.mxu0 0.0
    %2684 = vmatpush1.msra.mxu0 0.0
    %2685 = vmatprep.subr.mxu0 0.0
    %2686 = vmatpush1.msra.mxu0 0.0
    %2687 = vmatprep.subr.mxu0 0.0
    %2688 = vmatpush1.msra.mxu0 0.0
    %2689 = vmatprep.subr.mxu0 0.0
    %2690 = vmatpush1.msra.mxu0 0.0
    %2691 = vmatprep.subr.mxu0 0.0
    %2692 = vmatpush1.msra.mxu0 0.0
    %2693 = vmatprep.subr.mxu0 0.0
    %2694 = vmatpush1.msra.mxu0 0.0
    %2695 = vmatprep.subr.mxu0 0.0
    %2696 = vmatpush1.msra.mxu0 0.0
    %2697 = vmatprep.subr.mxu0 0.0
    %2698 = vmatpush1.msra.mxu0 0.0
    %2699 = vmatprep.subr.mxu0 0.0
    %2700 = vmatpush1.msra.mxu0 0.0
    %2701 = vmatprep.subr.mxu0 0.0
    %2702 = vmatpush1.msra.mxu0 0.0
    %2703 = vmatprep.subr.mxu0 0.0
    %2704 = vmatpush1.msra.mxu0 0.0
    %2705 = vmatprep.subr.mxu0 0.0
    %2706 = vmatpush1.msra.mxu0 0.0
    %2707 = vmatprep.subr.mxu0 0.0
    %2708 = vmatpush1.msra.mxu0 0.0
    %2709 = vmatprep.subr.mxu0 0.0
    %2710 = vmatpush1.msra.mxu0 0.0
    %2711 = vmatprep.subr.mxu0 0.0
    %2712 = vmatpush1.msra.mxu0 0.0
    %2713 = vmatprep.subr.mxu0 0.0
    %2714 = vmatpush1.msra.mxu0 0.0
    %2715 = vmatprep.subr.mxu0 0.0
    %2716 = vmatpush1.msra.mxu0 0.0
    %2717 = vmatprep.subr.mxu0 0.0
    %2718 = vmatpush1.msra.mxu0 0.0
    %2719 = vmatprep.subr.mxu0 0.0
    %2720 = vmatpush1.msra.mxu0 0.0
    %2721 = vmatprep.subr.mxu0 0.0
    %2722 = vmatpush1.msra.mxu0 0.0
    %2723 = vmatprep.subr.mxu0 0.0
    %2724 = vmatpush1.msra.mxu0 0.0
    %2725 = vmatprep.subr.mxu0 0.0
    %2726 = vmatpush1.msra.mxu0 0.0
    %2727 = vmatprep.subr.mxu0 0.0
    %2728 = vmatpush1.msra.mxu0 0.0
    %2729 = vmatprep.subr.mxu0 0.0
    %2730 = vmatpush1.msra.mxu0 0.0
    %2731 = vmatprep.subr.mxu0 0.0
    %2732 = vmatpush1.msra.mxu0 0.0
    %2733 = vmatprep.mubr.f32.mxu0 0.0
    %2734 = vmatmul.mubr.f32.gmra.mrb[0].mxu0 %v2667
    %v2735 = vpop.f32.mrb[0].mxu0
    %v2736 = vadd.f32 0.0, %v2735
    %v2737 = vpop.f32.mrb[0].mxu0
    %2738 = vdwg.mxu0
    %v2740 = vsel %vm630, %v2665, 0
    %2742 = vmatprep.subr.mxu0 0.0
    %2743 = vmatpush1.msra.mxu0 %v2487
    %2744 = vmatprep.subr.mxu0 0.0
    %2745 = vmatpush1.msra.mxu0 0.0
    %2746 = vmatprep.subr.mxu0 0.0
    %2747 = vmatpush1.msra.mxu0 0.0
    %2748 = vmatprep.subr.mxu0 0.0
    %2749 = vmatpush1.msra.mxu0 0.0
    %2750 = vmatprep.subr.mxu0 0.0
    %2751 = vmatpush1.msra.mxu0 0.0
    %2752 = vmatprep.subr.mxu0 0.0
    %2753 = vmatpush1.msra.mxu0 0.0
    %2754 = vmatprep.subr.mxu0 0.0
    %2755 = vmatpush1.msra.mxu0 0.0
    %2756 = vmatprep.subr.mxu0 0.0
    %2757 = vmatpush1.msra.mxu0 0.0
    %2758 = vmatprep.subr.mxu0 0.0
    %2759 = vmatpush1.msra.mxu0 0.0
    %2760 = vmatprep.subr.mxu0 0.0
    %2761 = vmatpush1.msra.mxu0 0.0
    %2762 = vmatprep.subr.mxu0 0.0
    %2763 = vmatpush1.msra.mxu0 0.0
    %2764 = vmatprep.subr.mxu0 0.0
    %2765 = vmatpush1.msra.mxu0 0.0
    %2766 = vmatprep.subr.mxu0 0.0
    %2767 = vmatpush1.msra.mxu0 0.0
    %2768 = vmatprep.subr.mxu0 0.0
    %2769 = vmatpush1.msra.mxu0 0.0
    %2770 = vmatprep.subr.mxu0 0.0
    %2771 = vmatpush1.msra.mxu0 0.0
    %2772 = vmatprep.subr.mxu0 0.0
    %2773 = vmatpush1.msra.mxu0 0.0
    %2774 = vmatprep.subr.mxu0 0.0
    %2775 = vmatpush1.msra.mxu0 0.0
    %2776 = vmatprep.subr.mxu0 0.0
    %2777 = vmatpush1.msra.mxu0 0.0
    %2778 = vmatprep.subr.mxu0 0.0
    %2779 = vmatpush1.msra.mxu0 0.0
    %2780 = vmatprep.subr.mxu0 0.0
    %2781 = vmatpush1.msra.mxu0 0.0
    %2782 = vmatprep.subr.mxu0 0.0
    %2783 = vmatpush1.msra.mxu0 0.0
    %2784 = vmatprep.subr.mxu0 0.0
    %2785 = vmatpush1.msra.mxu0 0.0
    %2786 = vmatprep.subr.mxu0 0.0
    %2787 = vmatpush1.msra.mxu0 0.0
    %2788 = vmatprep.subr.mxu0 0.0
    %2789 = vmatpush1.msra.mxu0 0.0
    %2790 = vmatprep.subr.mxu0 0.0
    %2791 = vmatpush1.msra.mxu0 0.0
    %2792 = vmatprep.subr.mxu0 0.0
    %2793 = vmatpush1.msra.mxu0 0.0
    %2794 = vmatprep.subr.mxu0 0.0
    %2795 = vmatpush1.msra.mxu0 0.0
    %2796 = vmatprep.subr.mxu0 0.0
    %2797 = vmatpush1.msra.mxu0 0.0
    %2798 = vmatprep.subr.mxu0 0.0
    %2799 = vmatpush1.msra.mxu0 0.0
    %2800 = vmatprep.subr.mxu0 0.0
    %2801 = vmatpush1.msra.mxu0 0.0
    %2802 = vmatprep.subr.mxu0 0.0
    %2803 = vmatpush1.msra.mxu0 0.0
    %2804 = vmatprep.subr.mxu0 0.0
    %2805 = vmatpush1.msra.mxu0 0.0
    %2806 = vmatprep.mubr.f32.mxu0 0.0
    %2807 = vmatmul.mubr.f32.gmra.mrb[0].mxu0 %v2740
    %v2808 = vpop.f32.mrb[0].mxu0
    %v2809 = vadd.f32 0.0, %v2808
    %v2810 = vpop.f32.mrb[0].mxu0
    %2811 = vdwg.mxu0
    %2812 = vst.msk [vmem:[#allocation2] sm:$0xff] %vm475, %v2736
    %2813 = vst.msk [vmem:[#allocation2 + $0x8] sm:$0xff] %vm475, %v2809
    %2814 = vrot.lane.b32.xlu0 %v2405, 96
    %v2815 = vpop.permute.xlu0 %2814
    %2816 = vrot.lane.b32.xlu0 %v2407, 96
    %v2817 = vpop.permute.xlu0 %2816
    %v2818 = vsel %vm475, %v2815, 0
    %v2820 = vsel %vm475, %v2817, 0
    %2822 = vmatprep.subr.mxu0 0.0
    %2823 = vmatpush1.xpose.msra.mxu0 %v2820
    %2824 = vmatprep.subr.mxu0 0.0
    %2825 = vmatpush1.xpose.msra.mxu0 0.0
    %2826 = vmatprep.subr.mxu0 0.0
    %2827 = vmatpush1.xpose.msra.mxu0 0.0
    %2828 = vmatprep.subr.mxu0 0.0
    %2829 = vmatpush1.xpose.msra.mxu0 0.0
    %2830 = vmatprep.subr.mxu0 0.0
    %2831 = vmatpush1.xpose.msra.mxu0 0.0
    %2832 = vmatprep.subr.mxu0 0.0
    %2833 = vmatpush1.xpose.msra.mxu0 0.0
    %2834 = vmatprep.subr.mxu0 0.0
    %2835 = vmatpush1.xpose.msra.mxu0 0.0
    %2836 = vmatprep.subr.mxu0 0.0
    %2837 = vmatpush1.xpose.msra.mxu0 0.0
    %2838 = vmatprep.subr.mxu0 0.0
    %2839 = vmatpush1.xpose.msra.mxu0 0.0
    %2840 = vmatprep.subr.mxu0 0.0
    %2841 = vmatpush1.xpose.msra.mxu0 0.0
    %2842 = vmatprep.subr.mxu0 0.0
    %2843 = vmatpush1.xpose.msra.mxu0 0.0
    %2844 = vmatprep.subr.mxu0 0.0
    %2845 = vmatpush1.xpose.msra.mxu0 0.0
    %2846 = vmatprep.subr.mxu0 0.0
    %2847 = vmatpush1.xpose.msra.mxu0 0.0
    %2848 = vmatprep.subr.mxu0 0.0
    %2849 = vmatpush1.xpose.msra.mxu0 0.0
    %2850 = vmatprep.subr.mxu0 0.0
    %2851 = vmatpush1.xpose.msra.mxu0 0.0
    %2852 = vmatprep.subr.mxu0 0.0
    %2853 = vmatpush1.xpose.msra.mxu0 0.0
    %2854 = vmatprep.subr.mxu0 0.0
    %2855 = vmatpush1.xpose.msra.mxu0 0.0
    %2856 = vmatprep.subr.mxu0 0.0
    %2857 = vmatpush1.xpose.msra.mxu0 0.0
    %2858 = vmatprep.subr.mxu0 0.0
    %2859 = vmatpush1.xpose.msra.mxu0 0.0
    %2860 = vmatprep.subr.mxu0 0.0
    %2861 = vmatpush1.xpose.msra.mxu0 0.0
    %2862 = vmatprep.subr.mxu0 0.0
    %2863 = vmatpush1.xpose.msra.mxu0 0.0
    %2864 = vmatprep.subr.mxu0 0.0
    %2865 = vmatpush1.xpose.msra.mxu0 0.0
    %2866 = vmatprep.subr.mxu0 0.0
    %2867 = vmatpush1.xpose.msra.mxu0 0.0
    %2868 = vmatprep.subr.mxu0 0.0
    %2869 = vmatpush1.xpose.msra.mxu0 0.0
    %2870 = vmatprep.subr.mxu0 0.0
    %2871 = vmatpush1.xpose.msra.mxu0 0.0
    %2872 = vmatprep.subr.mxu0 0.0
    %2873 = vmatpush1.xpose.msra.mxu0 0.0
    %2874 = vmatprep.subr.mxu0 0.0
    %2875 = vmatpush1.xpose.msra.mxu0 0.0
    %2876 = vmatprep.subr.mxu0 0.0
    %2877 = vmatpush1.xpose.msra.mxu0 0.0
    %2878 = vmatprep.subr.mxu0 0.0
    %2879 = vmatpush1.xpose.msra.mxu0 0.0
    %2880 = vmatprep.subr.mxu0 0.0
    %2881 = vmatpush1.xpose.msra.mxu0 0.0
    %2882 = vmatprep.subr.mxu0 0.0
    %2883 = vmatpush1.xpose.msra.mxu0 0.0
    %2884 = vmatprep.subr.mxu0 0.0
    %2885 = vmatpush1.xpose.msra.mxu0 0.0
    %2886 = vmatprep.mubr.f32.mxu0 0.0
    %2887 = vmatmul.mubr.f32.gmra.mrb[0].mxu0 %v2818
    %v2888 = vpop.f32.mrb[0].mxu0
    %v2889 = vadd.f32 0.0, %v2888
    %v2890 = vpop.f32.mrb[0].mxu0
    %2891 = vdwg.mxu0
    %2892 = vrot.lane.b32.xlu0 %v2411, 96
    %v2893 = vpop.permute.xlu0 %2892
    %2894 = vrot.lane.b32.xlu0 %v2413, 96
    %v2895 = vpop.permute.xlu0 %2894
    %v2896 = vsel %vm475, %v2893, 0
    %v2898 = vsel %vm475, %v2895, 0
    %2900 = vmatprep.subr.mxu0 0.0
    %2901 = vmatpush1.xpose.msra.mxu0 %v2898
    %2902 = vmatprep.subr.mxu0 0.0
    %2903 = vmatpush1.xpose.msra.mxu0 0.0
    %2904 = vmatprep.subr.mxu0 0.0
    %2905 = vmatpush1.xpose.msra.mxu0 0.0
    %2906 = vmatprep.subr.mxu0 0.0
    %2907 = vmatpush1.xpose.msra.mxu0 0.0
    %2908 = vmatprep.subr.mxu0 0.0
    %2909 = vmatpush1.xpose.msra.mxu0 0.0
    %2910 = vmatprep.subr.mxu0 0.0
    %2911 = vmatpush1.xpose.msra.mxu0 0.0
    %2912 = vmatprep.subr.mxu0 0.0
    %2913 = vmatpush1.xpose.msra.mxu0 0.0
    %2914 = vmatprep.subr.mxu0 0.0
    %2915 = vmatpush1.xpose.msra.mxu0 0.0
    %2916 = vmatprep.subr.mxu0 0.0
    %2917 = vmatpush1.xpose.msra.mxu0 0.0
    %2918 = vmatprep.subr.mxu0 0.0
    %2919 = vmatpush1.xpose.msra.mxu0 0.0
    %2920 = vmatprep.subr.mxu0 0.0
    %2921 = vmatpush1.xpose.msra.mxu0 0.0
    %2922 = vmatprep.subr.mxu0 0.0
    %2923 = vmatpush1.xpose.msra.mxu0 0.0
    %2924 = vmatprep.subr.mxu0 0.0
    %2925 = vmatpush1.xpose.msra.mxu0 0.0
    %2926 = vmatprep.subr.mxu0 0.0
    %2927 = vmatpush1.xpose.msra.mxu0 0.0
    %2928 = vmatprep.subr.mxu0 0.0
    %2929 = vmatpush1.xpose.msra.mxu0 0.0
    %2930 = vmatprep.subr.mxu0 0.0
    %2931 = vmatpush1.xpose.msra.mxu0 0.0
    %2932 = vmatprep.subr.mxu0 0.0
    %2933 = vmatpush1.xpose.msra.mxu0 0.0
    %2934 = vmatprep.subr.mxu0 0.0
    %2935 = vmatpush1.xpose.msra.mxu0 0.0
    %2936 = vmatprep.subr.mxu0 0.0
    %2937 = vmatpush1.xpose.msra.mxu0 0.0
    %2938 = vmatprep.subr.mxu0 0.0
    %2939 = vmatpush1.xpose.msra.mxu0 0.0
    %2940 = vmatprep.subr.mxu0 0.0
    %2941 = vmatpush1.xpose.msra.mxu0 0.0
    %2942 = vmatprep.subr.mxu0 0.0
    %2943 = vmatpush1.xpose.msra.mxu0 0.0
    %2944 = vmatprep.subr.mxu0 0.0
    %2945 = vmatpush1.xpose.msra.mxu0 0.0
    %2946 = vmatprep.subr.mxu0 0.0
    %2947 = vmatpush1.xpose.msra.mxu0 0.0
    %2948 = vmatprep.subr.mxu0 0.0
    %2949 = vmatpush1.xpose.msra.mxu0 0.0
    %2950 = vmatprep.subr.mxu0 0.0
    %2951 = vmatpush1.xpose.msra.mxu0 0.0
    %2952 = vmatprep.subr.mxu0 0.0
    %2953 = vmatpush1.xpose.msra.mxu0 0.0
    %2954 = vmatprep.subr.mxu0 0.0
    %2955 = vmatpush1.xpose.msra.mxu0 0.0
    %2956 = vmatprep.subr.mxu0 0.0
    %2957 = vmatpush1.xpose.msra.mxu0 0.0
    %2958 = vmatprep.subr.mxu0 0.0
    %2959 = vmatpush1.xpose.msra.mxu0 0.0
    %2960 = vmatprep.subr.mxu0 0.0
    %2961 = vmatpush1.xpose.msra.mxu0 0.0
    %2962 = vmatprep.subr.mxu0 0.0
    %2963 = vmatpush1.xpose.msra.mxu0 0.0
    %2964 = vmatprep.mubr.f32.mxu0 0.0
    %2965 = vmatmul.mubr.f32.gmra.mrb[0].mxu0 %v2896
    %v2966 = vpop.f32.mrb[0].mxu0
    %v2967 = vadd.f32 0.0, %v2966
    %v2968 = vpop.f32.mrb[0].mxu0
    %2969 = vdwg.mxu0
    %v2970 = vmul.f32 %v2889, 0.17677669
    %v2971 = vmul.f32 %v2967, 0.17677669
    %v2972 = vsel %vm630, %v2970, -inf
    %2973 = vmax.xlane.f32.xlu0 %v2972
    %v2974 = vpop.xlane.xlu0 %2973
    %v2975 = vsel %vm630, %v2971, -inf
    %2976 = vmax.xlane.f32.xlu0 %v2975
    %v2977 = vpop.xlane.xlu0 %2976
    %v2978 = vsub.f32 %v2970, %v2974
    %v2979 = vsub.f32 %v2971, %v2977
    %v2980 = vmul.f32 %v2978, 1.442695
    %v2981 = vpow.pop %v2980
    %v2982 = vmul.f32 %v2979, 1.442695
    %v2983 = vpow.pop %v2982
    %v2984 = vsel %vm630, %v2981, 0.0
    %2985 = vadd.xlane.f32.xlu0 %v2984
    %v2986 = vpop.xlane.xlu0 %2985
    %v2987 = vsel %vm630, %v2983, 0.0
    %2988 = vadd.xlane.f32.xlu0 %v2987
    %v2989 = vpop.xlane.xlu0 %2988
    %v2990 = vrcp.pop %v2986
    %v2991 = vrcp.pop %v2989
    %v2992 = vmul.f32 %v2981, %v2990
    %v2993 = vmul.f32 %v2983, %v2991
    %2995 = vrot.lane.b32.xlu0 %v2482, 96
    %v2996 = vpop.permute.xlu0 %2995
    %v2999 = vsel %vm630, %v2992, 0
    %3001 = vmatprep.subr.mxu0 0.0
    %3002 = vmatpush1.msra.mxu0 %v2996
    %3003 = vmatprep.subr.mxu0 0.0
    %3004 = vmatpush1.msra.mxu0 0.0
    %3005 = vmatprep.subr.mxu0 0.0
    %3006 = vmatpush1.msra.mxu0 0.0
    %3007 = vmatprep.subr.mxu0 0.0
    %3008 = vmatpush1.msra.mxu0 0.0
    %3009 = vmatprep.subr.mxu0 0.0
    %3010 = vmatpush1.msra.mxu0 0.0
    %3011 = vmatprep.subr.mxu0 0.0
    %3012 = vmatpush1.msra.mxu0 0.0
    %3013 = vmatprep.subr.mxu0 0.0
    %3014 = vmatpush1.msra.mxu0 0.0
    %3015 = vmatprep.subr.mxu0 0.0
    %3016 = vmatpush1.msra.mxu0 0.0
    %3017 = vmatprep.subr.mxu0 0.0
    %3018 = vmatpush1.msra.mxu0 0.0
    %3019 = vmatprep.subr.mxu0 0.0
    %3020 = vmatpush1.msra.mxu0 0.0
    %3021 = vmatprep.subr.mxu0 0.0
    %3022 = vmatpush1.msra.mxu0 0.0
    %3023 = vmatprep.subr.mxu0 0.0
    %3024 = vmatpush1.msra.mxu0 0.0
    %3025 = vmatprep.subr.mxu0 0.0
    %3026 = vmatpush1.msra.mxu0 0.0
    %3027 = vmatprep.subr.mxu0 0.0
    %3028 = vmatpush1.msra.mxu0 0.0
    %3029 = vmatprep.subr.mxu0 0.0
    %3030 = vmatpush1.msra.mxu0 0.0
    %3031 = vmatprep.subr.mxu0 0.0
    %3032 = vmatpush1.msra.mxu0 0.0
    %3033 = vmatprep.subr.mxu0 0.0
    %3034 = vmatpush1.msra.mxu0 0.0
    %3035 = vmatprep.subr.mxu0 0.0
    %3036 = vmatpush1.msra.mxu0 0.0
    %3037 = vmatprep.subr.mxu0 0.0
    %3038 = vmatpush1.msra.mxu0 0.0
    %3039 = vmatprep.subr.mxu0 0.0
    %3040 = vmatpush1.msra.mxu0 0.0
    %3041 = vmatprep.subr.mxu0 0.0
    %3042 = vmatpush1.msra.mxu0 0.0
    %3043 = vmatprep.subr.mxu0 0.0
    %3044 = vmatpush1.msra.mxu0 0.0
    %3045 = vmatprep.subr.mxu0 0.0
    %3046 = vmatpush1.msra.mxu0 0.0
    %3047 = vmatprep.subr.mxu0 0.0
    %3048 = vmatpush1.msra.mxu0 0.0
    %3049 = vmatprep.subr.mxu0 0.0
    %3050 = vmatpush1.msra.mxu0 0.0
    %3051 = vmatprep.subr.mxu0 0.0
    %3052 = vmatpush1.msra.mxu0 0.0
    %3053 = vmatprep.subr.mxu0 0.0
    %3054 = vmatpush1.msra.mxu0 0.0
    %3055 = vmatprep.subr.mxu0 0.0
    %3056 = vmatpush1.msra.mxu0 0.0
    %3057 = vmatprep.subr.mxu0 0.0
    %3058 = vmatpush1.msra.mxu0 0.0
    %3059 = vmatprep.subr.mxu0 0.0
    %3060 = vmatpush1.msra.mxu0 0.0
    %3061 = vmatprep.subr.mxu0 0.0
    %3062 = vmatpush1.msra.mxu0 0.0
    %3063 = vmatprep.subr.mxu0 0.0
    %3064 = vmatpush1.msra.mxu0 0.0
    %3065 = vmatprep.mubr.f32.mxu0 0.0
    %3066 = vmatmul.mubr.f32.gmra.mrb[0].mxu0 %v2999
    %v3067 = vpop.f32.mrb[0].mxu0
    %v3068 = vadd.f32 0.0, %v3067
    %v3069 = vpop.f32.mrb[0].mxu0
    %3070 = vdwg.mxu0
    %3072 = vrot.lane.b32.xlu0 %v2487, 96
    %v3073 = vpop.permute.xlu0 %3072
    %v3076 = vsel %vm630, %v2993, 0
    %3078 = vmatprep.subr.mxu0 0.0
    %3079 = vmatpush1.msra.mxu0 %v3073
    %3080 = vmatprep.subr.mxu0 0.0
    %3081 = vmatpush1.msra.mxu0 0.0
    %3082 = vmatprep.subr.mxu0 0.0
    %3083 = vmatpush1.msra.mxu0 0.0
    %3084 = vmatprep.subr.mxu0 0.0
    %3085 = vmatpush1.msra.mxu0 0.0
    %3086 = vmatprep.subr.mxu0 0.0
    %3087 = vmatpush1.msra.mxu0 0.0
    %3088 = vmatprep.subr.mxu0 0.0
    %3089 = vmatpush1.msra.mxu0 0.0
    %3090 = vmatprep.subr.mxu0 0.0
    %3091 = vmatpush1.msra.mxu0 0.0
    %3092 = vmatprep.subr.mxu0 0.0
    %3093 = vmatpush1.msra.mxu0 0.0
    %3094 = vmatprep.subr.mxu0 0.0
    %3095 = vmatpush1.msra.mxu0 0.0
    %3096 = vmatprep.subr.mxu0 0.0
    %3097 = vmatpush1.msra.mxu0 0.0
    %3098 = vmatprep.subr.mxu0 0.0
    %3099 = vmatpush1.msra.mxu0 0.0
    %3100 = vmatprep.subr.mxu0 0.0
    %3101 = vmatpush1.msra.mxu0 0.0
    %3102 = vmatprep.subr.mxu0 0.0
    %3103 = vmatpush1.msra.mxu0 0.0
    %3104 = vmatprep.subr.mxu0 0.0
    %3105 = vmatpush1.msra.mxu0 0.0
    %3106 = vmatprep.subr.mxu0 0.0
    %3107 = vmatpush1.msra.mxu0 0.0
    %3108 = vmatprep.subr.mxu0 0.0
    %3109 = vmatpush1.msra.mxu0 0.0
    %3110 = vmatprep.subr.mxu0 0.0
    %3111 = vmatpush1.msra.mxu0 0.0
    %3112 = vmatprep.subr.mxu0 0.0
    %3113 = vmatpush1.msra.mxu0 0.0
    %3114 = vmatprep.subr.mxu0 0.0
    %3115 = vmatpush1.msra.mxu0 0.0
    %3116 = vmatprep.subr.mxu0 0.0
    %3117 = vmatpush1.msra.mxu0 0.0
    %3118 = vmatprep.subr.mxu0 0.0
    %3119 = vmatpush1.msra.mxu0 0.0
    %3120 = vmatprep.subr.mxu0 0.0
    %3121 = vmatpush1.msra.mxu0 0.0
    %3122 = vmatprep.subr.mxu0 0.0
    %3123 = vmatpush1.msra.mxu0 0.0
    %3124 = vmatprep.subr.mxu0 0.0
    %3125 = vmatpush1.msra.mxu0 0.0
    %3126 = vmatprep.subr.mxu0 0.0
    %3127 = vmatpush1.msra.mxu0 0.0
    %3128 = vmatprep.subr.mxu0 0.0
    %3129 = vmatpush1.msra.mxu0 0.0
    %3130 = vmatprep.subr.mxu0 0.0
    %3131 = vmatpush1.msra.mxu0 0.0
    %3132 = vmatprep.subr.mxu0 0.0
    %3133 = vmatpush1.msra.mxu0 0.0
    %3134 = vmatprep.subr.mxu0 0.0
    %3135 = vmatpush1.msra.mxu0 0.0
    %3136 = vmatprep.subr.mxu0 0.0
    %3137 = vmatpush1.msra.mxu0 0.0
    %3138 = vmatprep.subr.mxu0 0.0
    %3139 = vmatpush1.msra.mxu0 0.0
    %3140 = vmatprep.subr.mxu0 0.0
    %3141 = vmatpush1.msra.mxu0 0.0
    %3142 = vmatprep.mubr.f32.mxu0 0.0
    %3143 = vmatmul.mubr.f32.gmra.mrb[0].mxu0 %v3076
    %v3144 = vpop.f32.mrb[0].mxu0
    %v3145 = vadd.f32 0.0, %v3144
    %v3146 = vpop.f32.mrb[0].mxu0
    %3147 = vdwg.mxu0
    %3150 = vrot.lane.b32.xlu0 %v3068, 32
    %v3151 = vpop.permute.xlu0 %3150
    %3152 = vrot.lane.b32.xlu0 %v3145, 32
    %v3153 = vpop.permute.xlu0 %3152
    %3156 = vst.msk [vmem:[#allocation2] sm:$0xff] %vm1143, %v3151
    %3157 = vst.msk [vmem:[#allocation2 + $0x8] sm:$0xff] %vm1143, %v3153
    %3158 = vrot.lane.b32.xlu0 %v2405, 64
    %v3159 = vpop.permute.xlu0 %3158
    %3160 = vrot.lane.b32.xlu0 %v2407, 64
    %v3161 = vpop.permute.xlu0 %3160
    %v3162 = vsel %vm475, %v3159, 0
    %v3164 = vsel %vm475, %v3161, 0
    %3166 = vmatprep.subr.mxu0 0.0
    %3167 = vmatpush1.xpose.msra.mxu0 %v3164
    %3168 = vmatprep.subr.mxu0 0.0
    %3169 = vmatpush1.xpose.msra.mxu0 0.0
    %3170 = vmatprep.subr.mxu0 0.0
    %3171 = vmatpush1.xpose.msra.mxu0 0.0
    %3172 = vmatprep.subr.mxu0 0.0
    %3173 = vmatpush1.xpose.msra.mxu0 0.0
    %3174 = vmatprep.subr.mxu0 0.0
    %3175 = vmatpush1.xpose.msra.mxu0 0.0
    %3176 = vmatprep.subr.mxu0 0.0
    %3177 = vmatpush1.xpose.msra.mxu0 0.0
    %3178 = vmatprep.subr.mxu0 0.0
    %3179 = vmatpush1.xpose.msra.mxu0 0.0
    %3180 = vmatprep.subr.mxu0 0.0
    %3181 = vmatpush1.xpose.msra.mxu0 0.0
    %3182 = vmatprep.subr.mxu0 0.0
    %3183 = vmatpush1.xpose.msra.mxu0 0.0
    %3184 = vmatprep.subr.mxu0 0.0
    %3185 = vmatpush1.xpose.msra.mxu0 0.0
    %3186 = vmatprep.subr.mxu0 0.0
    %3187 = vmatpush1.xpose.msra.mxu0 0.0
    %3188 = vmatprep.subr.mxu0 0.0
    %3189 = vmatpush1.xpose.msra.mxu0 0.0
    %3190 = vmatprep.subr.mxu0 0.0
    %3191 = vmatpush1.xpose.msra.mxu0 0.0
    %3192 = vmatprep.subr.mxu0 0.0
    %3193 = vmatpush1.xpose.msra.mxu0 0.0
    %3194 = vmatprep.subr.mxu0 0.0
    %3195 = vmatpush1.xpose.msra.mxu0 0.0
    %3196 = vmatprep.subr.mxu0 0.0
    %3197 = vmatpush1.xpose.msra.mxu0 0.0
    %3198 = vmatprep.subr.mxu0 0.0
    %3199 = vmatpush1.xpose.msra.mxu0 0.0
    %3200 = vmatprep.subr.mxu0 0.0
    %3201 = vmatpush1.xpose.msra.mxu0 0.0
    %3202 = vmatprep.subr.mxu0 0.0
    %3203 = vmatpush1.xpose.msra.mxu0 0.0
    %3204 = vmatprep.subr.mxu0 0.0
    %3205 = vmatpush1.xpose.msra.mxu0 0.0
    %3206 = vmatprep.subr.mxu0 0.0
    %3207 = vmatpush1.xpose.msra.mxu0 0.0
    %3208 = vmatprep.subr.mxu0 0.0
    %3209 = vmatpush1.xpose.msra.mxu0 0.0
    %3210 = vmatprep.subr.mxu0 0.0
    %3211 = vmatpush1.xpose.msra.mxu0 0.0
    %3212 = vmatprep.subr.mxu0 0.0
    %3213 = vmatpush1.xpose.msra.mxu0 0.0
    %3214 = vmatprep.subr.mxu0 0.0
    %3215 = vmatpush1.xpose.msra.mxu0 0.0
    %3216 = vmatprep.subr.mxu0 0.0
    %3217 = vmatpush1.xpose.msra.mxu0 0.0
    %3218 = vmatprep.subr.mxu0 0.0
    %3219 = vmatpush1.xpose.msra.mxu0 0.0
    %3220 = vmatprep.subr.mxu0 0.0
    %3221 = vmatpush1.xpose.msra.mxu0 0.0
    %3222 = vmatprep.subr.mxu0 0.0
    %3223 = vmatpush1.xpose.msra.mxu0 0.0
    %3224 = vmatprep.subr.mxu0 0.0
    %3225 = vmatpush1.xpose.msra.mxu0 0.0
    %3226 = vmatprep.subr.mxu0 0.0
    %3227 = vmatpush1.xpose.msra.mxu0 0.0
    %3228 = vmatprep.subr.mxu0 0.0
    %3229 = vmatpush1.xpose.msra.mxu0 0.0
    %3230 = vmatprep.mubr.f32.mxu0 0.0
    %3231 = vmatmul.mubr.f32.gmra.mrb[0].mxu0 %v3162
    %v3232 = vpop.f32.mrb[0].mxu0
    %v3233 = vadd.f32 0.0, %v3232
    %v3234 = vpop.f32.mrb[0].mxu0
    %3235 = vdwg.mxu0
    %3236 = vrot.lane.b32.xlu0 %v2411, 64
    %v3237 = vpop.permute.xlu0 %3236
    %3238 = vrot.lane.b32.xlu0 %v2413, 64
    %v3239 = vpop.permute.xlu0 %3238
    %v3240 = vsel %vm475, %v3237, 0
    %v3242 = vsel %vm475, %v3239, 0
    %3244 = vmatprep.subr.mxu0 0.0
    %3245 = vmatpush1.xpose.msra.mxu0 %v3242
    %3246 = vmatprep.subr.mxu0 0.0
    %3247 = vmatpush1.xpose.msra.mxu0 0.0
    %3248 = vmatprep.subr.mxu0 0.0
    %3249 = vmatpush1.xpose.msra.mxu0 0.0
    %3250 = vmatprep.subr.mxu0 0.0
    %3251 = vmatpush1.xpose.msra.mxu0 0.0
    %3252 = vmatprep.subr.mxu0 0.0
    %3253 = vmatpush1.xpose.msra.mxu0 0.0
    %3254 = vmatprep.subr.mxu0 0.0
    %3255 = vmatpush1.xpose.msra.mxu0 0.0
    %3256 = vmatprep.subr.mxu0 0.0
    %3257 = vmatpush1.xpose.msra.mxu0 0.0
    %3258 = vmatprep.subr.mxu0 0.0
    %3259 = vmatpush1.xpose.msra.mxu0 0.0
    %3260 = vmatprep.subr.mxu0 0.0
    %3261 = vmatpush1.xpose.msra.mxu0 0.0
    %3262 = vmatprep.subr.mxu0 0.0
    %3263 = vmatpush1.xpose.msra.mxu0 0.0
    %3264 = vmatprep.subr.mxu0 0.0
    %3265 = vmatpush1.xpose.msra.mxu0 0.0
    %3266 = vmatprep.subr.mxu0 0.0
    %3267 = vmatpush1.xpose.msra.mxu0 0.0
    %3268 = vmatprep.subr.mxu0 0.0
    %3269 = vmatpush1.xpose.msra.mxu0 0.0
    %3270 = vmatprep.subr.mxu0 0.0
    %3271 = vmatpush1.xpose.msra.mxu0 0.0
    %3272 = vmatprep.subr.mxu0 0.0
    %3273 = vmatpush1.xpose.msra.mxu0 0.0
    %3274 = vmatprep.subr.mxu0 0.0
    %3275 = vmatpush1.xpose.msra.mxu0 0.0
    %3276 = vmatprep.subr.mxu0 0.0
    %3277 = vmatpush1.xpose.msra.mxu0 0.0
    %3278 = vmatprep.subr.mxu0 0.0
    %3279 = vmatpush1.xpose.msra.mxu0 0.0
    %3280 = vmatprep.subr.mxu0 0.0
    %3281 = vmatpush1.xpose.msra.mxu0 0.0
    %3282 = vmatprep.subr.mxu0 0.0
    %3283 = vmatpush1.xpose.msra.mxu0 0.0
    %3284 = vmatprep.subr.mxu0 0.0
    %3285 = vmatpush1.xpose.msra.mxu0 0.0
    %3286 = vmatprep.subr.mxu0 0.0
    %3287 = vmatpush1.xpose.msra.mxu0 0.0
    %3288 = vmatprep.subr.mxu0 0.0
    %3289 = vmatpush1.xpose.msra.mxu0 0.0
    %3290 = vmatprep.subr.mxu0 0.0
    %3291 = vmatpush1.xpose.msra.mxu0 0.0
    %3292 = vmatprep.subr.mxu0 0.0
    %3293 = vmatpush1.xpose.msra.mxu0 0.0
    %3294 = vmatprep.subr.mxu0 0.0
    %3295 = vmatpush1.xpose.msra.mxu0 0.0
    %3296 = vmatprep.subr.mxu0 0.0
    %3297 = vmatpush1.xpose.msra.mxu0 0.0
    %3298 = vmatprep.subr.mxu0 0.0
    %3299 = vmatpush1.xpose.msra.mxu0 0.0
    %3300 = vmatprep.subr.mxu0 0.0
    %3301 = vmatpush1.xpose.msra.mxu0 0.0
    %3302 = vmatprep.subr.mxu0 0.0
    %3303 = vmatpush1.xpose.msra.mxu0 0.0
    %3304 = vmatprep.subr.mxu0 0.0
    %3305 = vmatpush1.xpose.msra.mxu0 0.0
    %3306 = vmatprep.subr.mxu0 0.0
    %3307 = vmatpush1.xpose.msra.mxu0 0.0
    %3308 = vmatprep.mubr.f32.mxu0 0.0
    %3309 = vmatmul.mubr.f32.gmra.mrb[0].mxu0 %v3240
    %v3310 = vpop.f32.mrb[0].mxu0
    %v3311 = vadd.f32 0.0, %v3310
    %v3312 = vpop.f32.mrb[0].mxu0
    %3313 = vdwg.mxu0
    %v3314 = vmul.f32 %v3233, 0.17677669
    %v3315 = vmul.f32 %v3311, 0.17677669
    %v3316 = vsel %vm630, %v3314, -inf
    %3317 = vmax.xlane.f32.xlu0 %v3316
    %v3318 = vpop.xlane.xlu0 %3317
    %v3319 = vsel %vm630, %v3315, -inf
    %3320 = vmax.xlane.f32.xlu0 %v3319
    %v3321 = vpop.xlane.xlu0 %3320
    %v3322 = vsub.f32 %v3314, %v3318
    %v3323 = vsub.f32 %v3315, %v3321
    %v3324 = vmul.f32 %v3322, 1.442695
    %v3325 = vpow.pop %v3324
    %v3326 = vmul.f32 %v3323, 1.442695
    %v3327 = vpow.pop %v3326
    %v3328 = vsel %vm630, %v3325, 0.0
    %3329 = vadd.xlane.f32.xlu0 %v3328
    %v3330 = vpop.xlane.xlu0 %3329
    %v3331 = vsel %vm630, %v3327, 0.0
    %3332 = vadd.xlane.f32.xlu0 %v3331
    %v3333 = vpop.xlane.xlu0 %3332
    %v3334 = vrcp.pop %v3330
    %v3335 = vrcp.pop %v3333
    %v3336 = vmul.f32 %v3325, %v3334
    %v3337 = vmul.f32 %v3327, %v3335
    %3338 = vrot.lane.b32.xlu0 %v2482, 64
    %v3339 = vpop.permute.xlu0 %3338
    %v3342 = vsel %vm630, %v3336, 0
    %3344 = vmatprep.subr.mxu0 0.0
    %3345 = vmatpush1.msra.mxu0 %v3339
    %3346 = vmatprep.subr.mxu0 0.0
    %3347 = vmatpush1.msra.mxu0 0.0
    %3348 = vmatprep.subr.mxu0 0.0
    %3349 = vmatpush1.msra.mxu0 0.0
    %3350 = vmatprep.subr.mxu0 0.0
    %3351 = vmatpush1.msra.mxu0 0.0
    %3352 = vmatprep.subr.mxu0 0.0
    %3353 = vmatpush1.msra.mxu0 0.0
    %3354 = vmatprep.subr.mxu0 0.0
    %3355 = vmatpush1.msra.mxu0 0.0
    %3356 = vmatprep.subr.mxu0 0.0
    %3357 = vmatpush1.msra.mxu0 0.0
    %3358 = vmatprep.subr.mxu0 0.0
    %3359 = vmatpush1.msra.mxu0 0.0
    %3360 = vmatprep.subr.mxu0 0.0
    %3361 = vmatpush1.msra.mxu0 0.0
    %3362 = vmatprep.subr.mxu0 0.0
    %3363 = vmatpush1.msra.mxu0 0.0
    %3364 = vmatprep.subr.mxu0 0.0
    %3365 = vmatpush1.msra.mxu0 0.0
    %3366 = vmatprep.subr.mxu0 0.0
    %3367 = vmatpush1.msra.mxu0 0.0
    %3368 = vmatprep.subr.mxu0 0.0
    %3369 = vmatpush1.msra.mxu0 0.0
    %3370 = vmatprep.subr.mxu0 0.0
    %3371 = vmatpush1.msra.mxu0 0.0
    %3372 = vmatprep.subr.mxu0 0.0
    %3373 = vmatpush1.msra.mxu0 0.0
    %3374 = vmatprep.subr.mxu0 0.0
    %3375 = vmatpush1.msra.mxu0 0.0
    %3376 = vmatprep.subr.mxu0 0.0
    %3377 = vmatpush1.msra.mxu0 0.0
    %3378 = vmatprep.subr.mxu0 0.0
    %3379 = vmatpush1.msra.mxu0 0.0
    %3380 = vmatprep.subr.mxu0 0.0
    %3381 = vmatpush1.msra.mxu0 0.0
    %3382 = vmatprep.subr.mxu0 0.0
    %3383 = vmatpush1.msra.mxu0 0.0
    %3384 = vmatprep.subr.mxu0 0.0
    %3385 = vmatpush1.msra.mxu0 0.0
    %3386 = vmatprep.subr.mxu0 0.0
    %3387 = vmatpush1.msra.mxu0 0.0
    %3388 = vmatprep.subr.mxu0 0.0
    %3389 = vmatpush1.msra.mxu0 0.0
    %3390 = vmatprep.subr.mxu0 0.0
    %3391 = vmatpush1.msra.mxu0 0.0
    %3392 = vmatprep.subr.mxu0 0.0
    %3393 = vmatpush1.msra.mxu0 0.0
    %3394 = vmatprep.subr.mxu0 0.0
    %3395 = vmatpush1.msra.mxu0 0.0
    %3396 = vmatprep.subr.mxu0 0.0
    %3397 = vmatpush1.msra.mxu0 0.0
    %3398 = vmatprep.subr.mxu0 0.0
    %3399 = vmatpush1.msra.mxu0 0.0
    %3400 = vmatprep.subr.mxu0 0.0
    %3401 = vmatpush1.msra.mxu0 0.0
    %3402 = vmatprep.subr.mxu0 0.0
    %3403 = vmatpush1.msra.mxu0 0.0
    %3404 = vmatprep.subr.mxu0 0.0
    %3405 = vmatpush1.msra.mxu0 0.0
    %3406 = vmatprep.subr.mxu0 0.0
    %3407 = vmatpush1.msra.mxu0 0.0
    %3408 = vmatprep.mubr.f32.mxu0 0.0
    %3409 = vmatmul.mubr.f32.gmra.mrb[0].mxu0 %v3342
    %v3410 = vpop.f32.mrb[0].mxu0
    %v3411 = vadd.f32 0.0, %v3410
    %v3412 = vpop.f32.mrb[0].mxu0
    %3413 = vdwg.mxu0
    %3414 = vrot.lane.b32.xlu0 %v2487, 64
    %v3415 = vpop.permute.xlu0 %3414
    %v3418 = vsel %vm630, %v3337, 0
    %3420 = vmatprep.subr.mxu0 0.0
    %3421 = vmatpush1.msra.mxu0 %v3415
    %3422 = vmatprep.subr.mxu0 0.0
    %3423 = vmatpush1.msra.mxu0 0.0
    %3424 = vmatprep.subr.mxu0 0.0
    %3425 = vmatpush1.msra.mxu0 0.0
    %3426 = vmatprep.subr.mxu0 0.0
    %3427 = vmatpush1.msra.mxu0 0.0
    %3428 = vmatprep.subr.mxu0 0.0
    %3429 = vmatpush1.msra.mxu0 0.0
    %3430 = vmatprep.subr.mxu0 0.0
    %3431 = vmatpush1.msra.mxu0 0.0
    %3432 = vmatprep.subr.mxu0 0.0
    %3433 = vmatpush1.msra.mxu0 0.0
    %3434 = vmatprep.subr.mxu0 0.0
    %3435 = vmatpush1.msra.mxu0 0.0
    %3436 = vmatprep.subr.mxu0 0.0
    %3437 = vmatpush1.msra.mxu0 0.0
    %3438 = vmatprep.subr.mxu0 0.0
    %3439 = vmatpush1.msra.mxu0 0.0
    %3440 = vmatprep.subr.mxu0 0.0
    %3441 = vmatpush1.msra.mxu0 0.0
    %3442 = vmatprep.subr.mxu0 0.0
    %3443 = vmatpush1.msra.mxu0 0.0
    %3444 = vmatprep.subr.mxu0 0.0
    %3445 = vmatpush1.msra.mxu0 0.0
    %3446 = vmatprep.subr.mxu0 0.0
    %3447 = vmatpush1.msra.mxu0 0.0
    %3448 = vmatprep.subr.mxu0 0.0
    %3449 = vmatpush1.msra.mxu0 0.0
    %3450 = vmatprep.subr.mxu0 0.0
    %3451 = vmatpush1.msra.mxu0 0.0
    %3452 = vmatprep.subr.mxu0 0.0
    %3453 = vmatpush1.msra.mxu0 0.0
    %3454 = vmatprep.subr.mxu0 0.0
    %3455 = vmatpush1.msra.mxu0 0.0
    %3456 = vmatprep.subr.mxu0 0.0
    %3457 = vmatpush1.msra.mxu0 0.0
    %3458 = vmatprep.subr.mxu0 0.0
    %3459 = vmatpush1.msra.mxu0 0.0
    %3460 = vmatprep.subr.mxu0 0.0
    %3461 = vmatpush1.msra.mxu0 0.0
    %3462 = vmatprep.subr.mxu0 0.0
    %3463 = vmatpush1.msra.mxu0 0.0
    %3464 = vmatprep.subr.mxu0 0.0
    %3465 = vmatpush1.msra.mxu0 0.0
    %3466 = vmatprep.subr.mxu0 0.0
    %3467 = vmatpush1.msra.mxu0 0.0
    %3468 = vmatprep.subr.mxu0 0.0
    %3469 = vmatpush1.msra.mxu0 0.0
    %3470 = vmatprep.subr.mxu0 0.0
    %3471 = vmatpush1.msra.mxu0 0.0
    %3472 = vmatprep.subr.mxu0 0.0
    %3473 = vmatpush1.msra.mxu0 0.0
    %3474 = vmatprep.subr.mxu0 0.0
    %3475 = vmatpush1.msra.mxu0 0.0
    %3476 = vmatprep.subr.mxu0 0.0
    %3477 = vmatpush1.msra.mxu0 0.0
    %3478 = vmatprep.subr.mxu0 0.0
    %3479 = vmatpush1.msra.mxu0 0.0
    %3480 = vmatprep.subr.mxu0 0.0
    %3481 = vmatpush1.msra.mxu0 0.0
    %3482 = vmatprep.subr.mxu0 0.0
    %3483 = vmatpush1.msra.mxu0 0.0
    %3484 = vmatprep.mubr.f32.mxu0 0.0
    %3485 = vmatmul.mubr.f32.gmra.mrb[0].mxu0 %v3418
    %v3486 = vpop.f32.mrb[0].mxu0
    %v3487 = vadd.f32 0.0, %v3486
    %v3488 = vpop.f32.mrb[0].mxu0
    %3489 = vdwg.mxu0
    %3492 = vrot.lane.b32.xlu0 %v3411, 64
    %v3493 = vpop.permute.xlu0 %3492
    %3494 = vrot.lane.b32.xlu0 %v3487, 64
    %v3495 = vpop.permute.xlu0 %3494
    %3498 = vst.msk [vmem:[#allocation2] sm:$0xff] %vm1486, %v3493
    %3499 = vst.msk [vmem:[#allocation2 + $0x8] sm:$0xff] %vm1486, %v3495
    %3500 = vrot.lane.b32.xlu0 %v2405, 32
    %v3501 = vpop.permute.xlu0 %3500
    %3502 = vrot.lane.b32.xlu0 %v2407, 32
    %v3503 = vpop.permute.xlu0 %3502
    %v3504 = vsel %vm475, %v3501, 0
    %v3506 = vsel %vm475, %v3503, 0
    %3508 = vmatprep.subr.mxu0 0.0
    %3509 = vmatpush1.xpose.msra.mxu0 %v3506
    %3510 = vmatprep.subr.mxu0 0.0
    %3511 = vmatpush1.xpose.msra.mxu0 0.0
    %3512 = vmatprep.subr.mxu0 0.0
    %3513 = vmatpush1.xpose.msra.mxu0 0.0
    %3514 = vmatprep.subr.mxu0 0.0
    %3515 = vmatpush1.xpose.msra.mxu0 0.0
    %3516 = vmatprep.subr.mxu0 0.0
    %3517 = vmatpush1.xpose.msra.mxu0 0.0
    %3518 = vmatprep.subr.mxu0 0.0
    %3519 = vmatpush1.xpose.msra.mxu0 0.0
    %3520 = vmatprep.subr.mxu0 0.0
    %3521 = vmatpush1.xpose.msra.mxu0 0.0
    %3522 = vmatprep.subr.mxu0 0.0
    %3523 = vmatpush1.xpose.msra.mxu0 0.0
    %3524 = vmatprep.subr.mxu0 0.0
    %3525 = vmatpush1.xpose.msra.mxu0 0.0
    %3526 = vmatprep.subr.mxu0 0.0
    %3527 = vmatpush1.xpose.msra.mxu0 0.0
    %3528 = vmatprep.subr.mxu0 0.0
    %3529 = vmatpush1.xpose.msra.mxu0 0.0
    %3530 = vmatprep.subr.mxu0 0.0
    %3531 = vmatpush1.xpose.msra.mxu0 0.0
    %3532 = vmatprep.subr.mxu0 0.0
    %3533 = vmatpush1.xpose.msra.mxu0 0.0
    %3534 = vmatprep.subr.mxu0 0.0
    %3535 = vmatpush1.xpose.msra.mxu0 0.0
    %3536 = vmatprep.subr.mxu0 0.0
    %3537 = vmatpush1.xpose.msra.mxu0 0.0
    %3538 = vmatprep.subr.mxu0 0.0
    %3539 = vmatpush1.xpose.msra.mxu0 0.0
    %3540 = vmatprep.subr.mxu0 0.0
    %3541 = vmatpush1.xpose.msra.mxu0 0.0
    %3542 = vmatprep.subr.mxu0 0.0
    %3543 = vmatpush1.xpose.msra.mxu0 0.0
    %3544 = vmatprep.subr.mxu0 0.0
    %3545 = vmatpush1.xpose.msra.mxu0 0.0
    %3546 = vmatprep.subr.mxu0 0.0
    %3547 = vmatpush1.xpose.msra.mxu0 0.0
    %3548 = vmatprep.subr.mxu0 0.0
    %3549 = vmatpush1.xpose.msra.mxu0 0.0
    %3550 = vmatprep.subr.mxu0 0.0
    %3551 = vmatpush1.xpose.msra.mxu0 0.0
    %3552 = vmatprep.subr.mxu0 0.0
    %3553 = vmatpush1.xpose.msra.mxu0 0.0
    %3554 = vmatprep.subr.mxu0 0.0
    %3555 = vmatpush1.xpose.msra.mxu0 0.0
    %3556 = vmatprep.subr.mxu0 0.0
    %3557 = vmatpush1.xpose.msra.mxu0 0.0
    %3558 = vmatprep.subr.mxu0 0.0
    %3559 = vmatpush1.xpose.msra.mxu0 0.0
    %3560 = vmatprep.subr.mxu0 0.0
    %3561 = vmatpush1.xpose.msra.mxu0 0.0
    %3562 = vmatprep.subr.mxu0 0.0
    %3563 = vmatpush1.xpose.msra.mxu0 0.0
    %3564 = vmatprep.subr.mxu0 0.0
    %3565 = vmatpush1.xpose.msra.mxu0 0.0
    %3566 = vmatprep.subr.mxu0 0.0
    %3567 = vmatpush1.xpose.msra.mxu0 0.0
    %3568 = vmatprep.subr.mxu0 0.0
    %3569 = vmatpush1.xpose.msra.mxu0 0.0
    %3570 = vmatprep.subr.mxu0 0.0
    %3571 = vmatpush1.xpose.msra.mxu0 0.0
    %3572 = vmatprep.mubr.f32.mxu0 0.0
    %3573 = vmatmul.mubr.f32.gmra.mrb[0].mxu0 %v3504
    %v3574 = vpop.f32.mrb[0].mxu0
    %v3575 = vadd.f32 0.0, %v3574
    %v3576 = vpop.f32.mrb[0].mxu0
    %3577 = vdwg.mxu0
    %3578 = vrot.lane.b32.xlu0 %v2411, 32
    %v3579 = vpop.permute.xlu0 %3578
    %3580 = vrot.lane.b32.xlu0 %v2413, 32
    %v3581 = vpop.permute.xlu0 %3580
    %v3582 = vsel %vm475, %v3579, 0
    %v3584 = vsel %vm475, %v3581, 0
    %3586 = vmatprep.subr.mxu0 0.0
    %3587 = vmatpush1.xpose.msra.mxu0 %v3584
    %3588 = vmatprep.subr.mxu0 0.0
    %3589 = vmatpush1.xpose.msra.mxu0 0.0
    %3590 = vmatprep.subr.mxu0 0.0
    %3591 = vmatpush1.xpose.msra.mxu0 0.0
    %3592 = vmatprep.subr.mxu0 0.0
    %3593 = vmatpush1.xpose.msra.mxu0 0.0
    %3594 = vmatprep.subr.mxu0 0.0
    %3595 = vmatpush1.xpose.msra.mxu0 0.0
    %3596 = vmatprep.subr.mxu0 0.0
    %3597 = vmatpush1.xpose.msra.mxu0 0.0
    %3598 = vmatprep.subr.mxu0 0.0
    %3599 = vmatpush1.xpose.msra.mxu0 0.0
    %3600 = vmatprep.subr.mxu0 0.0
    %3601 = vmatpush1.xpose.msra.mxu0 0.0
    %3602 = vmatprep.subr.mxu0 0.0
    %3603 = vmatpush1.xpose.msra.mxu0 0.0
    %3604 = vmatprep.subr.mxu0 0.0
    %3605 = vmatpush1.xpose.msra.mxu0 0.0
    %3606 = vmatprep.subr.mxu0 0.0
    %3607 = vmatpush1.xpose.msra.mxu0 0.0
    %3608 = vmatprep.subr.mxu0 0.0
    %3609 = vmatpush1.xpose.msra.mxu0 0.0
    %3610 = vmatprep.subr.mxu0 0.0
    %3611 = vmatpush1.xpose.msra.mxu0 0.0
    %3612 = vmatprep.subr.mxu0 0.0
    %3613 = vmatpush1.xpose.msra.mxu0 0.0
    %3614 = vmatprep.subr.mxu0 0.0
    %3615 = vmatpush1.xpose.msra.mxu0 0.0
    %3616 = vmatprep.subr.mxu0 0.0
    %3617 = vmatpush1.xpose.msra.mxu0 0.0
    %3618 = vmatprep.subr.mxu0 0.0
    %3619 = vmatpush1.xpose.msra.mxu0 0.0
    %3620 = vmatprep.subr.mxu0 0.0
    %3621 = vmatpush1.xpose.msra.mxu0 0.0
    %3622 = vmatprep.subr.mxu0 0.0
    %3623 = vmatpush1.xpose.msra.mxu0 0.0
    %3624 = vmatprep.subr.mxu0 0.0
    %3625 = vmatpush1.xpose.msra.mxu0 0.0
    %3626 = vmatprep.subr.mxu0 0.0
    %3627 = vmatpush1.xpose.msra.mxu0 0.0
    %3628 = vmatprep.subr.mxu0 0.0
    %3629 = vmatpush1.xpose.msra.mxu0 0.0
    %3630 = vmatprep.subr.mxu0 0.0
    %3631 = vmatpush1.xpose.msra.mxu0 0.0
    %3632 = vmatprep.subr.mxu0 0.0
    %3633 = vmatpush1.xpose.msra.mxu0 0.0
    %3634 = vmatprep.subr.mxu0 0.0
    %3635 = vmatpush1.xpose.msra.mxu0 0.0
    %3636 = vmatprep.subr.mxu0 0.0
    %3637 = vmatpush1.xpose.msra.mxu0 0.0
    %3638 = vmatprep.subr.mxu0 0.0
    %3639 = vmatpush1.xpose.msra.mxu0 0.0
    %3640 = vmatprep.subr.mxu0 0.0
    %3641 = vmatpush1.xpose.msra.mxu0 0.0
    %3642 = vmatprep.subr.mxu0 0.0
    %3643 = vmatpush1.xpose.msra.mxu0 0.0
    %3644 = vmatprep.subr.mxu0 0.0
    %3645 = vmatpush1.xpose.msra.mxu0 0.0
    %3646 = vmatprep.subr.mxu0 0.0
    %3647 = vmatpush1.xpose.msra.mxu0 0.0
    %3648 = vmatprep.subr.mxu0 0.0
    %3649 = vmatpush1.xpose.msra.mxu0 0.0
    %3650 = vmatprep.mubr.f32.mxu0 0.0
    %3651 = vmatmul.mubr.f32.gmra.mrb[0].mxu0 %v3582
    %v3652 = vpop.f32.mrb[0].mxu0
    %v3653 = vadd.f32 0.0, %v3652
    %v3654 = vpop.f32.mrb[0].mxu0
    %3655 = vdwg.mxu0
    %v3656 = vmul.f32 %v3575, 0.17677669
    %v3657 = vmul.f32 %v3653, 0.17677669
    %v3658 = vsel %vm630, %v3656, -inf
    %3659 = vmax.xlane.f32.xlu0 %v3658
    %v3660 = vpop.xlane.xlu0 %3659
    %v3661 = vsel %vm630, %v3657, -inf
    %3662 = vmax.xlane.f32.xlu0 %v3661
    %v3663 = vpop.xlane.xlu0 %3662
    %v3664 = vsub.f32 %v3656, %v3660
    %v3665 = vsub.f32 %v3657, %v3663
    %v3666 = vmul.f32 %v3664, 1.442695
    %v3667 = vpow.pop %v3666
    %v3668 = vmul.f32 %v3665, 1.442695
    %v3669 = vpow.pop %v3668
    %v3670 = vsel %vm630, %v3667, 0.0
    %3671 = vadd.xlane.f32.xlu0 %v3670
    %v3672 = vpop.xlane.xlu0 %3671
    %v3673 = vsel %vm630, %v3669, 0.0
    %3674 = vadd.xlane.f32.xlu0 %v3673
    %v3675 = vpop.xlane.xlu0 %3674
    %v3676 = vrcp.pop %v3672
    %v3677 = vrcp.pop %v3675
    %v3678 = vmul.f32 %v3667, %v3676
    %v3679 = vmul.f32 %v3669, %v3677
    %3680 = vrot.lane.b32.xlu0 %v2482, 32
    %v3681 = vpop.permute.xlu0 %3680
    %v3684 = vsel %vm630, %v3678, 0
    %3686 = vmatprep.subr.mxu0 0.0
    %3687 = vmatpush1.msra.mxu0 %v3681
    %3688 = vmatprep.subr.mxu0 0.0
    %3689 = vmatpush1.msra.mxu0 0.0
    %3690 = vmatprep.subr.mxu0 0.0
    %3691 = vmatpush1.msra.mxu0 0.0
    %3692 = vmatprep.subr.mxu0 0.0
    %3693 = vmatpush1.msra.mxu0 0.0
    %3694 = vmatprep.subr.mxu0 0.0
    %3695 = vmatpush1.msra.mxu0 0.0
    %3696 = vmatprep.subr.mxu0 0.0
    %3697 = vmatpush1.msra.mxu0 0.0
    %3698 = vmatprep.subr.mxu0 0.0
    %3699 = vmatpush1.msra.mxu0 0.0
    %3700 = vmatprep.subr.mxu0 0.0
    %3701 = vmatpush1.msra.mxu0 0.0
    %3702 = vmatprep.subr.mxu0 0.0
    %3703 = vmatpush1.msra.mxu0 0.0
    %3704 = vmatprep.subr.mxu0 0.0
    %3705 = vmatpush1.msra.mxu0 0.0
    %3706 = vmatprep.subr.mxu0 0.0
    %3707 = vmatpush1.msra.mxu0 0.0
    %3708 = vmatprep.subr.mxu0 0.0
    %3709 = vmatpush1.msra.mxu0 0.0
    %3710 = vmatprep.subr.mxu0 0.0
    %3711 = vmatpush1.msra.mxu0 0.0
    %3712 = vmatprep.subr.mxu0 0.0
    %3713 = vmatpush1.msra.mxu0 0.0
    %3714 = vmatprep.subr.mxu0 0.0
    %3715 = vmatpush1.msra.mxu0 0.0
    %3716 = vmatprep.subr.mxu0 0.0
    %3717 = vmatpush1.msra.mxu0 0.0
    %3718 = vmatprep.subr.mxu0 0.0
    %3719 = vmatpush1.msra.mxu0 0.0
    %3720 = vmatprep.subr.mxu0 0.0
    %3721 = vmatpush1.msra.mxu0 0.0
    %3722 = vmatprep.subr.mxu0 0.0
    %3723 = vmatpush1.msra.mxu0 0.0
    %3724 = vmatprep.subr.mxu0 0.0
    %3725 = vmatpush1.msra.mxu0 0.0
    %3726 = vmatprep.subr.mxu0 0.0
    %3727 = vmatpush1.msra.mxu0 0.0
    %3728 = vmatprep.subr.mxu0 0.0
    %3729 = vmatpush1.msra.mxu0 0.0
    %3730 = vmatprep.subr.mxu0 0.0
    %3731 = vmatpush1.msra.mxu0 0.0
    %3732 = vmatprep.subr.mxu0 0.0
    %3733 = vmatpush1.msra.mxu0 0.0
    %3734 = vmatprep.subr.mxu0 0.0
    %3735 = vmatpush1.msra.mxu0 0.0
    %3736 = vmatprep.subr.mxu0 0.0
    %3737 = vmatpush1.msra.mxu0 0.0
    %3738 = vmatprep.subr.mxu0 0.0
    %3739 = vmatpush1.msra.mxu0 0.0
    %3740 = vmatprep.subr.mxu0 0.0
    %3741 = vmatpush1.msra.mxu0 0.0
    %3742 = vmatprep.subr.mxu0 0.0
    %3743 = vmatpush1.msra.mxu0 0.0
    %3744 = vmatprep.subr.mxu0 0.0
    %3745 = vmatpush1.msra.mxu0 0.0
    %3746 = vmatprep.subr.mxu0 0.0
    %3747 = vmatpush1.msra.mxu0 0.0
    %3748 = vmatprep.subr.mxu0 0.0
    %3749 = vmatpush1.msra.mxu0 0.0
    %3750 = vmatprep.mubr.f32.mxu0 0.0
    %3751 = vmatmul.mubr.f32.gmra.mrb[0].mxu0 %v3684
    %v3752 = vpop.f32.mrb[0].mxu0
    %v3753 = vadd.f32 0.0, %v3752
    %v3754 = vpop.f32.mrb[0].mxu0
    %3755 = vdwg.mxu0
    %3756 = vrot.lane.b32.xlu0 %v2487, 32
    %v3757 = vpop.permute.xlu0 %3756
    %v3760 = vsel %vm630, %v3679, 0
    %3762 = vmatprep.subr.mxu0 0.0
    %3763 = vmatpush1.msra.mxu0 %v3757
    %3764 = vmatprep.subr.mxu0 0.0
    %3765 = vmatpush1.msra.mxu0 0.0
    %3766 = vmatprep.subr.mxu0 0.0
    %3767 = vmatpush1.msra.mxu0 0.0
    %3768 = vmatprep.subr.mxu0 0.0
    %3769 = vmatpush1.msra.mxu0 0.0
    %3770 = vmatprep.subr.mxu0 0.0
    %3771 = vmatpush1.msra.mxu0 0.0
    %3772 = vmatprep.subr.mxu0 0.0
    %3773 = vmatpush1.msra.mxu0 0.0
    %3774 = vmatprep.subr.mxu0 0.0
    %3775 = vmatpush1.msra.mxu0 0.0
    %3776 = vmatprep.subr.mxu0 0.0
    %3777 = vmatpush1.msra.mxu0 0.0
    %3778 = vmatprep.subr.mxu0 0.0
    %3779 = vmatpush1.msra.mxu0 0.0
    %3780 = vmatprep.subr.mxu0 0.0
    %3781 = vmatpush1.msra.mxu0 0.0
    %3782 = vmatprep.subr.mxu0 0.0
    %3783 = vmatpush1.msra.mxu0 0.0
    %3784 = vmatprep.subr.mxu0 0.0
    %3785 = vmatpush1.msra.mxu0 0.0
    %3786 = vmatprep.subr.mxu0 0.0
    %3787 = vmatpush1.msra.mxu0 0.0
    %3788 = vmatprep.subr.mxu0 0.0
    %3789 = vmatpush1.msra.mxu0 0.0
    %3790 = vmatprep.subr.mxu0 0.0
    %3791 = vmatpush1.msra.mxu0 0.0
    %3792 = vmatprep.subr.mxu0 0.0
    %3793 = vmatpush1.msra.mxu0 0.0
    %3794 = vmatprep.subr.mxu0 0.0
    %3795 = vmatpush1.msra.mxu0 0.0
    %3796 = vmatprep.subr.mxu0 0.0
    %3797 = vmatpush1.msra.mxu0 0.0
    %3798 = vmatprep.subr.mxu0 0.0
    %3799 = vmatpush1.msra.mxu0 0.0
    %3800 = vmatprep.subr.mxu0 0.0
    %3801 = vmatpush1.msra.mxu0 0.0
    %3802 = vmatprep.subr.mxu0 0.0
    %3803 = vmatpush1.msra.mxu0 0.0
    %3804 = vmatprep.subr.mxu0 0.0
    %3805 = vmatpush1.msra.mxu0 0.0
    %3806 = vmatprep.subr.mxu0 0.0
    %3807 = vmatpush1.msra.mxu0 0.0
    %3808 = vmatprep.subr.mxu0 0.0
    %3809 = vmatpush1.msra.mxu0 0.0
    %3810 = vmatprep.subr.mxu0 0.0
    %3811 = vmatpush1.msra.mxu0 0.0
    %3812 = vmatprep.subr.mxu0 0.0
    %3813 = vmatpush1.msra.mxu0 0.0
    %3814 = vmatprep.subr.mxu0 0.0
    %3815 = vmatpush1.msra.mxu0 0.0
    %3816 = vmatprep.subr.mxu0 0.0
    %3817 = vmatpush1.msra.mxu0 0.0
    %3818 = vmatprep.subr.mxu0 0.0
    %3819 = vmatpush1.msra.mxu0 0.0
    %3820 = vmatprep.subr.mxu0 0.0
    %3821 = vmatpush1.msra.mxu0 0.0
    %3822 = vmatprep.subr.mxu0 0.0
    %3823 = vmatpush1.msra.mxu0 0.0
    %3824 = vmatprep.subr.mxu0 0.0
    %3825 = vmatpush1.msra.mxu0 0.0
    %3826 = vmatprep.mubr.f32.mxu0 0.0
    %3827 = vmatmul.mubr.f32.gmra.mrb[0].mxu0 %v3760
    %v3828 = vpop.f32.mrb[0].mxu0
    %v3829 = vadd.f32 0.0, %v3828
    %v3830 = vpop.f32.mrb[0].mxu0
    %3831 = vdwg.mxu0
    %3834 = vrot.lane.b32.xlu0 %v3753, 96
    %v3835 = vpop.permute.xlu0 %3834
    %3836 = vrot.lane.b32.xlu0 %v3829, 96
    %v3837 = vpop.permute.xlu0 %3836
    %3840 = vst.msk [vmem:[#allocation2] sm:$0xff] %vm1829, %v3835
    %3841 = vst.msk [vmem:[#allocation2 + $0x8] sm:$0xff] %vm1829, %v3837
    %v3842 = vld [vmem:[#allocation2] sm:$0xff]
    %v3843 = vld [vmem:[#allocation2 + $0x8] sm:$0xff]
    %s3844 = scalar_lea.vmem [#allocation7], 128
    %v3845 = vld [vmem:[%s3844] sm:$0xff]
    %v3846 = vld [vmem:[%s3844 + $0x8] sm:$0xff]
    %v3847 = vld [vmem:[%s3844 + $0x10] sm:$0xff]
    %v3848 = vld [vmem:[%s3844 + $0x18] sm:$0xff]
    %v3849 = vld [vmem:[%s3844 + $0x20] sm:$0xff]
    %v3850 = vld [vmem:[%s3844 + $0x28] sm:$0xff]
    %v3851 = vld [vmem:[%s3844 + $0x30] sm:$0xff]
    %v3852 = vld [vmem:[%s3844 + $0x38] sm:$0xff]
    %v3853 = vld [vmem:[%s3844 + $0x40] sm:$0xff]
    %v3854 = vld [vmem:[%s3844 + $0x48] sm:$0xff]
    %v3855 = vld [vmem:[%s3844 + $0x50] sm:$0xff]
    %v3856 = vld [vmem:[%s3844 + $0x58] sm:$0xff]
    %v3857 = vld [vmem:[%s3844 + $0x60] sm:$0xff]
    %v3858 = vld [vmem:[%s3844 + $0x68] sm:$0xff]
    %v3859 = vld [vmem:[%s3844 + $0x70] sm:$0xff]
    %v3860 = vld [vmem:[%s3844 + $0x78] sm:$0xff]
    %v3861 = vlaneseq
    %v3862 = vshrl.u32 %v3861, 7
    %v3863 = vsub.s32 0, %v3862
    %v3864 = vrot.slane %v2270, %v3863
    %3865 = vmatprep.subr.mxu0 0.0
    %3866 = vmatpush1.msra.mxu0 %v3845
    %3867 = vmatprep.subr.mxu0 0.0
    %3868 = vmatpush1.msra.mxu0 %v3846
    %3869 = vmatprep.subr.mxu0 0.0
    %3870 = vmatpush1.msra.mxu0 %v3847
    %3871 = vmatprep.subr.mxu0 0.0
    %3872 = vmatpush1.msra.mxu0 %v3848
    %3873 = vmatprep.subr.mxu0 0.0
    %3874 = vmatpush1.msra.mxu0 %v3849
    %3875 = vmatprep.subr.mxu0 0.0
    %3876 = vmatpush1.msra.mxu0 %v3850
    %3877 = vmatprep.subr.mxu0 0.0
    %3878 = vmatpush1.msra.mxu0 %v3851
    %3879 = vmatprep.subr.mxu0 0.0
    %3880 = vmatpush1.msra.mxu0 %v3852
    %3881 = vmatprep.subr.mxu0 0.0
    %3882 = vmatpush1.msra.mxu0 %v3853
    %3883 = vmatprep.subr.mxu0 0.0
    %3884 = vmatpush1.msra.mxu0 %v3854
    %3885 = vmatprep.subr.mxu0 0.0
    %3886 = vmatpush1.msra.mxu0 %v3855
    %3887 = vmatprep.subr.mxu0 0.0
    %3888 = vmatpush1.msra.mxu0 %v3856
    %3889 = vmatprep.subr.mxu0 0.0
    %3890 = vmatpush1.msra.mxu0 %v3857
    %3891 = vmatprep.subr.mxu0 0.0
    %3892 = vmatpush1.msra.mxu0 %v3858
    %3893 = vmatprep.subr.mxu0 0.0
    %3894 = vmatpush1.msra.mxu0 %v3859
    %3895 = vmatprep.subr.mxu0 0.0
    %3896 = vmatpush1.msra.mxu0 %v3860
    %3897 = vmatprep.subr.mxu0 0.0
    %3898 = vmatpush1.msra.mxu0 0.0
    %3899 = vmatprep.subr.mxu0 0.0
    %3900 = vmatpush1.msra.mxu0 0.0
    %3901 = vmatprep.subr.mxu0 0.0
    %3902 = vmatpush1.msra.mxu0 0.0
    %3903 = vmatprep.subr.mxu0 0.0
    %3904 = vmatpush1.msra.mxu0 0.0
    %3905 = vmatprep.subr.mxu0 0.0
    %3906 = vmatpush1.msra.mxu0 0.0
    %3907 = vmatprep.subr.mxu0 0.0
    %3908 = vmatpush1.msra.mxu0 0.0
    %3909 = vmatprep.subr.mxu0 0.0
    %3910 = vmatpush1.msra.mxu0 0.0
    %3911 = vmatprep.subr.mxu0 0.0
    %3912 = vmatpush1.msra.mxu0 0.0
    %3913 = vmatprep.subr.mxu0 0.0
    %3914 = vmatpush1.msra.mxu0 0.0
    %3915 = vmatprep.subr.mxu0 0.0
    %3916 = vmatpush1.msra.mxu0 0.0
    %3917 = vmatprep.subr.mxu0 0.0
    %3918 = vmatpush1.msra.mxu0 0.0
    %3919 = vmatprep.subr.mxu0 0.0
    %3920 = vmatpush1.msra.mxu0 0.0
    %3921 = vmatprep.subr.mxu0 0.0
    %3922 = vmatpush1.msra.mxu0 0.0
    %3923 = vmatprep.subr.mxu0 0.0
    %3924 = vmatpush1.msra.mxu0 0.0
    %3925 = vmatprep.subr.mxu0 0.0
    %3926 = vmatpush1.msra.mxu0 0.0
    %3927 = vmatprep.subr.mxu0 0.0
    %3928 = vmatpush1.msra.mxu0 0.0
    %3929 = vmatprep.mubr.f32.mxu0 0.0
    %3930 = vmatmul.mubr.f32.gmra.mrb[0].mxu0 %v3842
    %v3931 = vpop.f32.mrb[0].mxu0
    %v3932 = vadd.f32 %v3864, %v3931
    %v3933 = vpop.f32.mrb[0].mxu0
    %3934 = vmatprep.mubr.f32.mxu0 0.0
    %3935 = vmatmul.mubr.f32.gmra.mrb[0].mxu0 %v3843
    %v3936 = vpop.f32.mrb[0].mxu0
    %v3937 = vadd.f32 %v3864, %v3936
    %v3938 = vpop.f32.mrb[0].mxu0
    %3939 = vdwg.mxu0
    %v3940 = vadd.f32 %v2267, %v3932
    %v3941 = vadd.f32 %v2268, %v3937
    %3942 = vadd.xlane.f32.xlu0 %v3940
    %v3943 = vpop.xlane.xlu0 %3942
    %3944 = vadd.xlane.f32.xlu0 %v3941
    %v3945 = vpop.xlane.xlu0 %3944
    %v3946 = vmul.f32 %v3943, %v226
    %v3947 = vmul.f32 %v3945, %v226
    %v3948 = vsub.f32 %v3940, %v3946
    %v3949 = vsub.f32 %v3941, %v3947
    %v3950 = vmul.f32 %v3948, %v3948
    %v3951 = vmul.f32 %v3949, %v3949
    %3952 = vadd.xlane.f32.xlu0 %v3950
    %v3953 = vpop.xlane.xlu0 %3952
    %3954 = vadd.xlane.f32.xlu0 %v3951
    %v3955 = vpop.xlane.xlu0 %3954
    %v3956 = vmul.f32 %v3953, %v226
    %v3957 = vmul.f32 %v3955, %v226
    %v3958 = vadd.f32 %v3956, 1e-12
    %v3959 = vadd.f32 %v3957, 1e-12
    %v3960 = vrsqrt.pop %v3958
    %v3961 = vrsqrt.pop %v3959
    %v3962 = vmul.f32 %v3948, %v3960
    %v3963 = vmul.f32 %v3949, %v3961
    %v3964 = vlaneseq
    %v3965 = vshrl.u32 %v3964, 7
    %v3966 = vsub.s32 2, %v3965
    %v3967 = vrot.slane %v2270, %v3966
    %v3968 = vmul.f32 %v3962, %v3967
    %v3969 = vmul.f32 %v3963, %v3967
    %v3970 = vlaneseq
    %v3971 = vshrl.u32 %v3970, 7
    %v3972 = vsub.s32 3, %v3971
    %v3973 = vrot.slane %v2270, %v3972
    %v3974 = vadd.f32 %v3968, %v3973
    %v3975 = vadd.f32 %v3969, %v3973
    %s3976 = scalar_lea.vmem [#allocation8], 256
    %v3977 = vld [vmem:[%s3976] sm:$0xff]
    %v3978 = vld [vmem:[%s3976 + $0x8] sm:$0xff]
    %v3979 = vld [vmem:[%s3976 + $0x10] sm:$0xff]
    %v3980 = vld [vmem:[%s3976 + $0x18] sm:$0xff]
    %v3981 = vld [vmem:[%s3976 + $0x20] sm:$0xff]
    %v3982 = vld [vmem:[%s3976 + $0x28] sm:$0xff]
    %v3983 = vld [vmem:[%s3976 + $0x30] sm:$0xff]
    %v3984 = vld [vmem:[%s3976 + $0x38] sm:$0xff]
    %v3985 = vld [vmem:[%s3976 + $0x40] sm:$0xff]
    %v3986 = vld [vmem:[%s3976 + $0x48] sm:$0xff]
    %v3987 = vld [vmem:[%s3976 + $0x50] sm:$0xff]
    %v3988 = vld [vmem:[%s3976 + $0x58] sm:$0xff]
    %v3989 = vld [vmem:[%s3976 + $0x60] sm:$0xff]
    %v3990 = vld [vmem:[%s3976 + $0x68] sm:$0xff]
    %v3991 = vld [vmem:[%s3976 + $0x70] sm:$0xff]
    %v3992 = vld [vmem:[%s3976 + $0x78] sm:$0xff]
    %v3993 = vld [vmem:[%s3976 + $0x80] sm:$0xff]
    %v3994 = vld [vmem:[%s3976 + $0x88] sm:$0xff]
    %v3995 = vld [vmem:[%s3976 + $0x90] sm:$0xff]
    %v3996 = vld [vmem:[%s3976 + $0x98] sm:$0xff]
    %v3997 = vld [vmem:[%s3976 + $0xa0] sm:$0xff]
    %v3998 = vld [vmem:[%s3976 + $0xa8] sm:$0xff]
    %v3999 = vld [vmem:[%s3976 + $0xb0] sm:$0xff]
    %v4000 = vld [vmem:[%s3976 + $0xb8] sm:$0xff]
    %v4001 = vld [vmem:[%s3976 + $0xc0] sm:$0xff]
    %v4002 = vld [vmem:[%s3976 + $0xc8] sm:$0xff]
    %v4003 = vld [vmem:[%s3976 + $0xd0] sm:$0xff]
    %v4004 = vld [vmem:[%s3976 + $0xd8] sm:$0xff]
    %v4005 = vld [vmem:[%s3976 + $0xe0] sm:$0xff]
    %v4006 = vld [vmem:[%s3976 + $0xe8] sm:$0xff]
    %v4007 = vld [vmem:[%s3976 + $0xf0] sm:$0xff]
    %v4008 = vld [vmem:[%s3976 + $0xf8] sm:$0xff]
    %s4009 = scalar_lea.vmem %s9, 2
    %v4010 = vld [vmem:[%s4009] sm:$0x3]
    %v4012 = vlaneseq
    %v4013 = vshrl.u32 %v4012, 7
    %v4014 = vsub.s32 0, %v4013
    %v4015 = vrot.slane %v4010, %v4014
    %v4016 = vlaneseq
    %v4017 = vshrl.u32 %v4016, 7
    %v4018 = vsub.s32 1, %v4017
    %v4019 = vrot.slane %v4010, %v4018
    %4022 = vmatprep.subr.mxu0 %v3978
    %4023 = vmatpush1.msra.mxu0 %v3977
    %4024 = vmatprep.subr.mxu0 %v3980
    %4025 = vmatpush1.msra.mxu0 %v3979
    %4026 = vmatprep.subr.mxu0 %v3982
    %4027 = vmatpush1.msra.mxu0 %v3981
    %4028 = vmatprep.subr.mxu0 %v3984
    %4029 = vmatpush1.msra.mxu0 %v3983
    %4030 = vmatprep.subr.mxu0 %v3986
    %4031 = vmatpush1.msra.mxu0 %v3985
    %4032 = vmatprep.subr.mxu0 %v3988
    %4033 = vmatpush1.msra.mxu0 %v3987
    %4034 = vmatprep.subr.mxu0 %v3990
    %4035 = vmatpush1.msra.mxu0 %v3989
    %4036 = vmatprep.subr.mxu0 %v3992
    %4037 = vmatpush1.msra.mxu0 %v3991
    %4038 = vmatprep.subr.mxu0 %v3994
    %4039 = vmatpush1.msra.mxu0 %v3993
    %4040 = vmatprep.subr.mxu0 %v3996
    %4041 = vmatpush1.msra.mxu0 %v3995
    %4042 = vmatprep.subr.mxu0 %v3998
    %4043 = vmatpush1.msra.mxu0 %v3997
    %4044 = vmatprep.subr.mxu0 %v4000
    %4045 = vmatpush1.msra.mxu0 %v3999
    %4046 = vmatprep.subr.mxu0 %v4002
    %4047 = vmatpush1.msra.mxu0 %v4001
    %4048 = vmatprep.subr.mxu0 %v4004
    %4049 = vmatpush1.msra.mxu0 %v4003
    %4050 = vmatprep.subr.mxu0 %v4006
    %4051 = vmatpush1.msra.mxu0 %v4005
    %4052 = vmatprep.subr.mxu0 %v4008
    %4053 = vmatpush1.msra.mxu0 %v4007
    %4054 = vmatprep.subr.mxu0 0.0
    %4055 = vmatpush1.msra.mxu0 0.0
    %4056 = vmatprep.subr.mxu0 0.0
    %4057 = vmatpush1.msra.mxu0 0.0
    %4058 = vmatprep.subr.mxu0 0.0
    %4059 = vmatpush1.msra.mxu0 0.0
    %4060 = vmatprep.subr.mxu0 0.0
    %4061 = vmatpush1.msra.mxu0 0.0
    %4062 = vmatprep.subr.mxu0 0.0
    %4063 = vmatpush1.msra.mxu0 0.0
    %4064 = vmatprep.subr.mxu0 0.0
    %4065 = vmatpush1.msra.mxu0 0.0
    %4066 = vmatprep.subr.mxu0 0.0
    %4067 = vmatpush1.msra.mxu0 0.0
    %4068 = vmatprep.subr.mxu0 0.0
    %4069 = vmatpush1.msra.mxu0 0.0
    %4070 = vmatprep.subr.mxu0 0.0
    %4071 = vmatpush1.msra.mxu0 0.0
    %4072 = vmatprep.subr.mxu0 0.0
    %4073 = vmatpush1.msra.mxu0 0.0
    %4074 = vmatprep.subr.mxu0 0.0
    %4075 = vmatpush1.msra.mxu0 0.0
    %4076 = vmatprep.subr.mxu0 0.0
    %4077 = vmatpush1.msra.mxu0 0.0
    %4078 = vmatprep.subr.mxu0 0.0
    %4079 = vmatpush1.msra.mxu0 0.0
    %4080 = vmatprep.subr.mxu0 0.0
    %4081 = vmatpush1.msra.mxu0 0.0
    %4082 = vmatprep.subr.mxu0 0.0
    %4083 = vmatpush1.msra.mxu0 0.0
    %4084 = vmatprep.subr.mxu0 0.0
    %4085 = vmatpush1.msra.mxu0 0.0
    %4086 = vmatprep.mubr.f32.mxu0 0.0
    %4087 = vmatmul.mubr.f32.gmra.mrb[0].mxu0 %v3974
    %v4088 = vpop.f32.mrb[0].mxu0
    %v4089 = vadd.f32 %v4015, %v4088
    %v4090 = vpop.f32.mrb[0].mxu0
    %v4091 = vadd.f32 %v4019, %v4090
    %4092 = vmatprep.mubr.f32.mxu0 0.0
    %4093 = vmatmul.mubr.f32.gmra.mrb[0].mxu0 %v3975
    %v4094 = vpop.f32.mrb[0].mxu0
    %v4095 = vadd.f32 %v4015, %v4094
    %v4096 = vpop.f32.mrb[0].mxu0
    %v4097 = vadd.f32 %v4019, %v4096
    %4098 = vdwg.mxu0
    %v4099 = vmul.f32 %v4089, 0.5
    %v4100 = vmul.f32 %v4091, 0.5
    %v4101 = vmul.f32 %v4095, 0.5
    %v4102 = vmul.f32 %v4097, 0.5
    %v4103 = vmul.f32 %v4089, 0.044715
    %v4104 = vmul.f32 %v4091, 0.044715
    %v4105 = vmul.f32 %v4095, 0.044715
    %v4106 = vmul.f32 %v4097, 0.044715
    %v4107 = vmul.f32 %v4103, %v4089
    %v4108 = vmul.f32 %v4104, %v4091
    %v4109 = vmul.f32 %v4105, %v4095
    %v4110 = vmul.f32 %v4106, %v4097
    %v4111 = vmul.f32 %v4107, %v4089
    %v4112 = vmul.f32 %v4108, %v4091
    %v4113 = vmul.f32 %v4109, %v4095
    %v4114 = vmul.f32 %v4110, %v4097
    %v4115 = vadd.f32 %v4089, %v4111
    %v4116 = vadd.f32 %v4091, %v4112
    %v4117 = vadd.f32 %v4095, %v4113
    %v4118 = vadd.f32 %v4097, %v4114
    %v4119 = vmul.f32 %v4115, 0.7978846
    %v4120 = vmul.f32 %v4116, 0.7978846
    %v4121 = vmul.f32 %v4117, 0.7978846
    %v4122 = vmul.f32 %v4118, 0.7978846
    %v4123 = vtanh.pop %v4119
    %v4124 = vtanh.pop %v4120
    %v4125 = vtanh.pop %v4121
    %v4126 = vtanh.pop %v4122
    %v4127 = vadd.f32 %v4123, 1.0
    %v4128 = vadd.f32 %v4124, 1.0
    %v4129 = vadd.f32 %v4125, 1.0
    %v4130 = vadd.f32 %v4126, 1.0
    %v4131 = vmul.f32 %v4099, %v4127
    %v4132 = vmul.f32 %v4100, %v4128
    %v4133 = vmul.f32 %v4101, %v4129
    %v4134 = vmul.f32 %v4102, %v4130
    %s4135 = scalar_lea.vmem [#allocation10], 256
    %v4136 = vld [vmem:[%s4135] sm:$0xff]
    %v4137 = vld [vmem:[%s4135 + $0x8] sm:$0xff]
    %v4138 = vld [vmem:[%s4135 + $0x10] sm:$0xff]
    %v4139 = vld [vmem:[%s4135 + $0x18] sm:$0xff]
    %v4140 = vld [vmem:[%s4135 + $0x20] sm:$0xff]
    %v4141 = vld [vmem:[%s4135 + $0x28] sm:$0xff]
    %v4142 = vld [vmem:[%s4135 + $0x30] sm:$0xff]
    %v4143 = vld [vmem:[%s4135 + $0x38] sm:$0xff]
    %v4144 = vld [vmem:[%s4135 + $0x40] sm:$0xff]
    %v4145 = vld [vmem:[%s4135 + $0x48] sm:$0xff]
    %v4146 = vld [vmem:[%s4135 + $0x50] sm:$0xff]
    %v4147 = vld [vmem:[%s4135 + $0x58] sm:$0xff]
    %v4148 = vld [vmem:[%s4135 + $0x60] sm:$0xff]
    %v4149 = vld [vmem:[%s4135 + $0x68] sm:$0xff]
    %v4150 = vld [vmem:[%s4135 + $0x70] sm:$0xff]
    %v4151 = vld [vmem:[%s4135 + $0x78] sm:$0xff]
    %v4152 = vld [vmem:[%s4135 + $0x80] sm:$0xff]
    %v4153 = vld [vmem:[%s4135 + $0x88] sm:$0xff]
    %v4154 = vld [vmem:[%s4135 + $0x90] sm:$0xff]
    %v4155 = vld [vmem:[%s4135 + $0x98] sm:$0xff]
    %v4156 = vld [vmem:[%s4135 + $0xa0] sm:$0xff]
    %v4157 = vld [vmem:[%s4135 + $0xa8] sm:$0xff]
    %v4158 = vld [vmem:[%s4135 + $0xb0] sm:$0xff]
    %v4159 = vld [vmem:[%s4135 + $0xb8] sm:$0xff]
    %v4160 = vld [vmem:[%s4135 + $0xc0] sm:$0xff]
    %v4161 = vld [vmem:[%s4135 + $0xc8] sm:$0xff]
    %v4162 = vld [vmem:[%s4135 + $0xd0] sm:$0xff]
    %v4163 = vld [vmem:[%s4135 + $0xd8] sm:$0xff]
    %v4164 = vld [vmem:[%s4135 + $0xe0] sm:$0xff]
    %v4165 = vld [vmem:[%s4135 + $0xe8] sm:$0xff]
    %v4166 = vld [vmem:[%s4135 + $0xf0] sm:$0xff]
    %v4167 = vld [vmem:[%s4135 + $0xf8] sm:$0xff]
    %v4168 = vlaneseq
    %v4169 = vshrl.u32 %v4168, 7
    %v4170 = vsub.s32 1, %v4169
    %v4171 = vrot.slane %v2270, %v4170
    %4172 = vmatprep.subr.mxu0 0.0
    %4173 = vmatpush1.msra.mxu0 %v4136
    %4174 = vmatprep.subr.mxu0 0.0
    %4175 = vmatpush1.msra.mxu0 %v4137
    %4176 = vmatprep.subr.mxu0 0.0
    %4177 = vmatpush1.msra.mxu0 %v4138
    %4178 = vmatprep.subr.mxu0 0.0
    %4179 = vmatpush1.msra.mxu0 %v4139
    %4180 = vmatprep.subr.mxu0 0.0
    %4181 = vmatpush1.msra.mxu0 %v4140
    %4182 = vmatprep.subr.mxu0 0.0
    %4183 = vmatpush1.msra.mxu0 %v4141
    %4184 = vmatprep.subr.mxu0 0.0
    %4185 = vmatpush1.msra.mxu0 %v4142
    %4186 = vmatprep.subr.mxu0 0.0
    %4187 = vmatpush1.msra.mxu0 %v4143
    %4188 = vmatprep.subr.mxu0 0.0
    %4189 = vmatpush1.msra.mxu0 %v4144
    %4190 = vmatprep.subr.mxu0 0.0
    %4191 = vmatpush1.msra.mxu0 %v4145
    %4192 = vmatprep.subr.mxu0 0.0
    %4193 = vmatpush1.msra.mxu0 %v4146
    %4194 = vmatprep.subr.mxu0 0.0
    %4195 = vmatpush1.msra.mxu0 %v4147
    %4196 = vmatprep.subr.mxu0 0.0
    %4197 = vmatpush1.msra.mxu0 %v4148
    %4198 = vmatprep.subr.mxu0 0.0
    %4199 = vmatpush1.msra.mxu0 %v4149
    %4200 = vmatprep.subr.mxu0 0.0
    %4201 = vmatpush1.msra.mxu0 %v4150
    %4202 = vmatprep.subr.mxu0 0.0
    %4203 = vmatpush1.msra.mxu0 %v4151
    %4204 = vmatprep.subr.mxu0 0.0
    %4205 = vmatpush1.msra.mxu0 %v4152
    %4206 = vmatprep.subr.mxu0 0.0
    %4207 = vmatpush1.msra.mxu0 %v4153
    %4208 = vmatprep.subr.mxu0 0.0
    %4209 = vmatpush1.msra.mxu0 %v4154
    %4210 = vmatprep.subr.mxu0 0.0
    %4211 = vmatpush1.msra.mxu0 %v4155
    %4212 = vmatprep.subr.mxu0 0.0
    %4213 = vmatpush1.msra.mxu0 %v4156
    %4214 = vmatprep.subr.mxu0 0.0
    %4215 = vmatpush1.msra.mxu0 %v4157
    %4216 = vmatprep.subr.mxu0 0.0
    %4217 = vmatpush1.msra.mxu0 %v4158
    %4218 = vmatprep.subr.mxu0 0.0
    %4219 = vmatpush1.msra.mxu0 %v4159
    %4220 = vmatprep.subr.mxu0 0.0
    %4221 = vmatpush1.msra.mxu0 %v4160
    %4222 = vmatprep.subr.mxu0 0.0
    %4223 = vmatpush1.msra.mxu0 %v4161
    %4224 = vmatprep.subr.mxu0 0.0
    %4225 = vmatpush1.msra.mxu0 %v4162
    %4226 = vmatprep.subr.mxu0 0.0
    %4227 = vmatpush1.msra.mxu0 %v4163
    %4228 = vmatprep.subr.mxu0 0.0
    %4229 = vmatpush1.msra.mxu0 %v4164
    %4230 = vmatprep.subr.mxu0 0.0
    %4231 = vmatpush1.msra.mxu0 %v4165
    %4232 = vmatprep.subr.mxu0 0.0
    %4233 = vmatpush1.msra.mxu0 %v4166
    %4234 = vmatprep.subr.mxu0 0.0
    %4235 = vmatpush1.msra.mxu0 %v4167
    %4236 = vmatprep.mubr.f32.mxu0 %v4132
    %4237 = vmatmul.mubr.f32.gmra.mrb[0].mxu0 %v4131
    %v4238 = vpop.f32.mrb[0].mxu0
    %v4239 = vadd.f32 %v4171, %v4238
    %v4240 = vpop.f32.mrb[0].mxu0
    %4241 = vmatprep.mubr.f32.mxu0 %v4134
    %4242 = vmatmul.mubr.f32.gmra.mrb[0].mxu0 %v4133
    %v4243 = vpop.f32.mrb[0].mxu0
    %v4244 = vadd.f32 %v4171, %v4243
    %v4245 = vpop.f32.mrb[0].mxu0
    %4246 = vdwg.mxu0
    %v4247 = vadd.f32 %v3974, %v4239
    %v4248 = vadd.f32 %v3975, %v4244
    %4249 = vadd.xlane.f32.xlu0 %v4247
    %v4250 = vpop.xlane.xlu0 %4249
    %4251 = vadd.xlane.f32.xlu0 %v4248
    %v4252 = vpop.xlane.xlu0 %4251
    %v4253 = vmul.f32 %v4250, %v226
    %v4254 = vmul.f32 %v4252, %v226
    %v4255 = vsub.f32 %v4247, %v4253
    %v4256 = vsub.f32 %v4248, %v4254
    %v4257 = vmul.f32 %v4255, %v4255
    %v4258 = vmul.f32 %v4256, %v4256
    %4259 = vadd.xlane.f32.xlu0 %v4257
    %v4260 = vpop.xlane.xlu0 %4259
    %4261 = vadd.xlane.f32.xlu0 %v4258
    %v4262 = vpop.xlane.xlu0 %4261
    %v4263 = vmul.f32 %v4260, %v226
    %v4264 = vmul.f32 %v4262, %v226
    %v4265 = vadd.f32 %v4263, 1e-12
    %v4266 = vadd.f32 %v4264, 1e-12
    %v4267 = vrsqrt.pop %v4265
    %v4268 = vrsqrt.pop %v4266
    %v4269 = vmul.f32 %v4255, %v4267
    %v4270 = vmul.f32 %v4256, %v4268
    %v4271 = vlaneseq
    %v4272 = vshrl.u32 %v4271, 7
    %v4273 = vsub.s32 4, %v4272
    %v4274 = vrot.slane %v2270, %v4273
    %v4275 = vmul.f32 %v4269, %v4274
    %v4276 = vmul.f32 %v4270, %v4274
    %v4277 = vlaneseq
    %v4278 = vshrl.u32 %v4277, 7
    %v4279 = vsub.s32 5, %v4278
    %v4280 = vrot.slane %v2270, %v4279
    %v4281 = vadd.f32 %v4275, %v4280
    %v4282 = vadd.f32 %v4276, %v4280
    %4283 = vst [vmem:[%s12] sm:$0xff] %v4281
    %4284 = vst [vmem:[%s12 + $0x8] sm:$0xff] %v4282
    // Predicated region
    $region70: #{causal_prompt_encoder_forward.1} parent=1 // pred_check
      _
    $region71: #{causal_prompt_encoder_forward.1} parent=1 // pred_check_branch
      %4286 = sbr.rel (0) target = $region73
    $region72: #{causal_prompt_encoder_forward.1} parent=1 // pred_region
      _
    $region73: #{causal_prompt_encoder_forward.1} parent=1 // pred_fallthru
      _
    // Predicated region
    $region74: #{causal_prompt_encoder_forward.1} parent=1 // pred_check
      _
    $region75: #{causal_prompt_encoder_forward.1} parent=1 // pred_check_branch
      %4288 = sbr.rel (0) target = $region77
    $region76: #{causal_prompt_encoder_forward.1} parent=1 // pred_region
      _
    $region77: #{causal_prompt_encoder_forward.1} parent=1 // pred_fallthru
      _
    %4289 = vsyncpa [#allocation4], 1
    %4290 = vsyncpa [#allocation6], 1
    %4291 = vsyncpa [#allocation9], 1

</llo_original>
